<compile_context>
chip_gen: v7x
topology: tpu7x:2x2x1
jax: 0.10.0
libtpu: 0.0.40
codegen_flags: <defaults>
</compile_context>

<pallas_src>
import math

import jax
import jax.numpy as jnp
from jax import lax
from jax.experimental import pallas as pl

# ------------------------- small synthetic config ----------------------------
VOCAB = 100
MAX_POS = 16
BATCH = 2
SEQ = 8
HIDDEN = 32
NUM_HEADS = 4
HEAD_DIM = HIDDEN // NUM_HEADS
INTER = 64
NUM_LAYERS = 2
NUM_LABELS = 2
LANE_PAD = 128                    # lane-dense logits store; sliced to NUM_LABELS outside

_3H = 3 * HIDDEN                  # packed slab width (q|k|v)
_W_ROWS = 3 * HIDDEN + INTER      # rows of the per-layer weight slab
_NEG_INF = -1e9

# weight-slab row offsets
_R_QKV = 0
_R_WO = HIDDEN
_R_W1 = 2 * HIDDEN
_R_W2 = 3 * HIDDEN


# --------------------------- shared math --------------------------------------
def _layer_norm(x, g, b, eps=1e-12):
    mu = jnp.mean(x, axis=-1, keepdims=True)
    var = jnp.mean(jnp.square(x - mu), axis=-1, keepdims=True)
    return (x - mu) * lax.rsqrt(var + eps) * g + b


# ------------------------------ kernel-side math ------------------------------
def _split_heads(t):
    # (B*S, H) -> (NUM_HEADS, B*S, HEAD_DIM): leading-dim stack (cheap) instead of
    # keeping a lane-sliced per-head loop downstream.
    return jnp.stack([t[:, h * HEAD_DIM:(h + 1) * HEAD_DIM] for h in range(NUM_HEADS)],
                     axis=0)


def _encoder_layer_from_slabs(x, attn_bias, wslab, vslab):
    """x: (B*S, H) f32; attn_bias: (B*S, B*S) additive (0 / -1e9); slabs: packed weights."""
    H, I = HIDDEN, INTER
    wqkv = wslab[_R_QKV:_R_QKV + H, :]           # (H, 3H)  packed q|k|v
    wo = wslab[_R_WO:_R_WO + H, 0:H]             # (H, H)
    w1 = wslab[_R_W1:_R_W1 + H, 0:I]             # (H, I)
    w2 = wslab[_R_W2:_R_W2 + I, 0:H]             # (I, H)
    bqkv = vslab[0:1, :]                         # (1, 3H)
    bo = vslab[1:2, 0:H]
    ln1_g = vslab[1:2, H:2 * H]
    ln1_b = vslab[1:2, 2 * H:3 * H]
    b1 = vslab[2:3, 0:I]
    b2 = vslab[3:4, 0:H]
    ln2_g = vslab[3:4, H:2 * H]
    ln2_b = vslab[3:4, 2 * H:3 * H]

    # --- single packed QKV matmul ---
    qkv = jnp.dot(x, wqkv, preferred_element_type=jnp.float32) + bqkv     # (BS, 3H)
    qh = _split_heads(qkv[:, 0:H])                                        # (NH, BS, HD)
    kh = _split_heads(qkv[:, H:2 * H])
    vh = _split_heads(qkv[:, 2 * H:3 * H])

    # --- head-batched attention over the flattened token axis ---
    s = jnp.einsum('hqd,hkd->hqk', qh, kh, preferred_element_type=jnp.float32)
    s = s * (1.0 / math.sqrt(HEAD_DIM)) + attn_bias[None, :, :]
    s = s - jnp.max(s, axis=-1, keepdims=True)
    e = jnp.exp(s)
    p = e / jnp.sum(e, axis=-1, keepdims=True)
    ctx = jnp.einsum('hqk,hkd->hqd', p, vh, preferred_element_type=jnp.float32)  # (NH, BS, HD)

    # output projection: accumulate per-head ctx @ Wo_h — avoids lane-dim concat
    attn = bo
    for h in range(NUM_HEADS):
        attn = attn + jnp.dot(ctx[h], wo[h * HEAD_DIM:(h + 1) * HEAD_DIM, :],
                              preferred_element_type=jnp.float32)

    h1 = _layer_norm(x + attn, ln1_g, ln1_b)
    ff = jnp.dot(h1, w1, preferred_element_type=jnp.float32) + b1
    ff = jax.nn.gelu(ff, approximate=True)   # TODO(synk): HF ELECTRA default is exact (erf) GELU
    ff = jnp.dot(ff, w2, preferred_element_type=jnp.float32) + b2
    return _layer_norm(h1 + ff, ln2_g, ln2_b)


# --------------------------------- fused kernel --------------------------------
def _fused_forward_kernel(x_ref, bias_ref, mask3_ref, wslab_ref, vslab_ref,
                          wcls_ref, bcls_ref, out_ref):
    # Flatten batch: (B, S, H) -> (B*S, H); SEQ == 8 keeps the split tile-aligned.
    x = x_ref[...].reshape(BATCH * SEQ, HIDDEN)
    attn_bias = bias_ref[...]                                    # (B*S, B*S)

    # Static unroll over layers: hidden state stays resident in VMEM/vregs.
    for l in range(NUM_LAYERS):
        x = _encoder_layer_from_slabs(x, attn_bias, wslab_ref[l], vslab_ref[l])

    hidden = x.reshape(BATCH, SEQ, HIDDEN)

    # --- masked mean pooling + classifier (exactly the torch forward) ---
    mask3 = mask3_ref[...]                                       # (B, S, 1)
    masked = hidden * mask3                                      # last_hidden * mask
    summed = jnp.sum(masked, axis=1)                             # torch.sum(masked, 1)
    denom = jnp.maximum(jnp.sum(mask3, axis=1), 1e-9)            # clamp(mask.sum(1), 1e-9)
    mean_pooled = summed / denom
    # Lane-dense (B, 128) padded logits; sliced to NUM_LABELS outside the kernel.
    out_ref[...] = jnp.dot(mean_pooled, wcls_ref[...],
                           preferred_element_type=jnp.float32) + bcls_ref[...]


def fused_forward(x_emb, attn_bias, mask3, wslab, vslab, wcls_pad, bcls_pad):
    # Tiny problem: no grid, every operand fully VMEM-resident, single dispatch.
    return pl.pallas_call(
        _fused_forward_kernel,
        out_shape=jax.ShapeDtypeStruct((BATCH, LANE_PAD), jnp.float32),
    )(x_emb, attn_bias, mask3, wslab, vslab, wcls_pad, bcls_pad)


# ------------------------------- glue helpers ----------------------------------
def _build_attn_bias(mask_f):
    """(B, S) float mask -> (B*S, B*S) additive bias: block-diagonal over batch + key mask."""
    B, S = mask_f.shape
    key_keep = mask_f.reshape(-1) > 0.5
    batch_id = jnp.repeat(jnp.arange(B), S)
    allowed = (batch_id[:, None] == batch_id[None, :]) & key_keep[None, :]
    return jnp.where(allowed, 0.0, _NEG_INF).astype(jnp.float32)


def _pack_layer_slabs(layers):
    """Pack 16 per-layer tensors into one weight slab + one bias/LN slab, stacked over layers."""
    H, I = HIDDEN, INTER
    wslabs, vslabs = [], []
    for lp in layers:
        w = jnp.zeros((_W_ROWS, _3H), jnp.float32)
        w = w.at[_R_QKV:_R_QKV + H, :].set(jnp.concatenate([lp["wq"], lp["wk"], lp["wv"]], axis=1))
        w = w.at[_R_WO:_R_WO + H, 0:H].set(lp["wo"])
        w = w.at[_R_W1:_R_W1 + H, 0:I].set(lp["w1"])
        w = w.at[_R_W2:_R_W2 + I, 0:H].set(lp["w2"])

        v = jnp.zeros((4, _3H), jnp.float32)
        v = v.at[0, :].set(jnp.concatenate([lp["bq"], lp["bk"], lp["bv"]], axis=1)[0])
        v = v.at[1, 0:H].set(lp["bo"][0])
        v = v.at[1, H:2 * H].set(lp["ln1_g"][0])
        v = v.at[1, 2 * H:3 * H].set(lp["ln1_b"][0])
        v = v.at[2, 0:I].set(lp["b1"][0])
        v = v.at[3, 0:H].set(lp["b2"][0])
        v = v.at[3, H:2 * H].set(lp["ln2_g"][0])
        v = v.at[3, 2 * H:3 * H].set(lp["ln2_b"][0])

        wslabs.append(w)
        vslabs.append(v)
    return jnp.stack(wslabs, axis=0), jnp.stack(vslabs, axis=0)


# ------------------------------- parameters ------------------------------------
def init_params(key):
    keys = iter(jax.random.split(key, 64))

    def dense_p(fan_in, fan_out):
        w = jax.random.normal(next(keys), (fan_in, fan_out), jnp.float32) / math.sqrt(fan_in)
        b = jax.random.normal(next(keys), (1, fan_out), jnp.float32) * 0.02
        return w, b

    params = {
        "word_emb": jax.random.normal(next(keys), (VOCAB, HIDDEN), jnp.float32) * 0.02,
        "pos_emb": jax.random.normal(next(keys), (MAX_POS, HIDDEN), jnp.float32) * 0.02,
        "emb_ln_g": jnp.ones((1, HIDDEN), jnp.float32),
        "emb_ln_b": jnp.zeros((1, HIDDEN), jnp.float32),
        "layers": [],
    }
    for _ in range(NUM_LAYERS):
        lp = {}
        lp["wq"], lp["bq"] = dense_p(HIDDEN, HIDDEN)
        lp["wk"], lp["bk"] = dense_p(HIDDEN, HIDDEN)
        lp["wv"], lp["bv"] = dense_p(HIDDEN, HIDDEN)
        lp["wo"], lp["bo"] = dense_p(HIDDEN, HIDDEN)
        lp["ln1_g"], lp["ln1_b"] = jnp.ones((1, HIDDEN), jnp.float32), jnp.zeros((1, HIDDEN), jnp.float32)
        lp["w1"], lp["b1"] = dense_p(HIDDEN, INTER)
        lp["w2"], lp["b2"] = dense_p(INTER, HIDDEN)
        lp["ln2_g"], lp["ln2_b"] = jnp.ones((1, HIDDEN), jnp.float32), jnp.zeros((1, HIDDEN), jnp.float32)
        params["layers"].append(lp)
    params["w_cls"], params["b_cls"] = dense_p(HIDDEN, NUM_LABELS)

    # Kernel-side packed layouts.
    params["wslab"], params["vslab"] = _pack_layer_slabs(params["layers"])
    params["w_cls_pad"] = jnp.zeros((HIDDEN, LANE_PAD), jnp.float32).at[:, :NUM_LABELS].set(params["w_cls"])
    params["b_cls_pad"] = jnp.zeros((1, LANE_PAD), jnp.float32).at[:, :NUM_LABELS].set(params["b_cls"])
    return params


# ------------------------------- forward passes --------------------------------
def forward(params, input_ids, attention_mask):
    mask_f = attention_mask.astype(jnp.float32)
    S = input_ids.shape[1]
    # glue: embedding gather + embedding layernorm + additive attention-bias build
    x = params["word_emb"][input_ids] + params["pos_emb"][None, :S, :]
    x = _layer_norm(x, params["emb_ln_g"], params["emb_ln_b"])
    attn_bias = _build_attn_bias(mask_f)                  # (B*S, B*S)
    mask3 = mask_f[:, :, None]                            # (B, S, 1)
    logits_pad = fused_forward(x, attn_bias, mask3,
                               params["wslab"], params["vslab"],
                               params["w_cls_pad"], params["b_cls_pad"])
    return logits_pad[:, :NUM_LABELS]


def _reference_encoder_layer(x, bias, lp):
    B, S, H = x.shape

    def dense(t, w, b):
        return jnp.dot(t, w) + b

    q = dense(x, lp["wq"], lp["bq"]).reshape(B, S, NUM_HEADS, HEAD_DIM)
    k = dense(x, lp["wk"], lp["bk"]).reshape(B, S, NUM_HEADS, HEAD_DIM)
    v = dense(x, lp["wv"], lp["bv"]).reshape(B, S, NUM_HEADS, HEAD_DIM)
    s = jnp.einsum('bqhd,bkhd->bhqk', q, k) / math.sqrt(HEAD_DIM) + bias
    p = jax.nn.softmax(s, axis=-1)
    ctx = jnp.einsum('bhqk,bkhd->bqhd', p, v).reshape(B, S, H)
    h1 = _layer_norm(x + dense(ctx, lp["wo"], lp["bo"]), lp["ln1_g"], lp["ln1_b"])
    ff = jax.nn.gelu(dense(h1, lp["w1"], lp["b1"]), approximate=True)
    ff = dense(ff, lp["w2"], lp["b2"])
    return _layer_norm(h1 + ff, lp["ln2_g"], lp["ln2_b"])


def forward_reference(params, input_ids, attention_mask):
    mask_f = attention_mask.astype(jnp.float32)
    S = input_ids.shape[1]
    x = params["word_emb"][input_ids] + params["pos_emb"][None, :S, :]
    x = _layer_norm(x, params["emb_ln_g"], params["emb_ln_b"])
    bias = (1.0 - mask_f)[:, None, None, :] * _NEG_INF
    for lp in params["layers"]:
        x = _reference_encoder_layer(x, bias, lp)
    mask3 = mask_f[:, :, None]
    masked = x * mask3
    summed = jnp.sum(masked, axis=1)
    denom = jnp.maximum(jnp.sum(mask3, axis=1), 1e-9)
    mean_pooled = summed / denom
    return jnp.dot(mean_pooled, params["w_cls"]) + params["b_cls"]


# ----------------------------------- main ---------------------------------------
if __name__ == "__main__":
    key = jax.random.PRNGKey(0)
    pkey, ikey = jax.random.split(key)
    params = init_params(pkey)

    input_ids = jax.random.randint(ikey, (BATCH, SEQ), 0, VOCAB, dtype=jnp.int32)
    attention_mask = jnp.array([[1, 1, 1, 1, 1, 1, 1, 1],
                                [1, 1, 1, 1, 1, 0, 0, 0]], dtype=jnp.int32)

    logits = forward(params, input_ids, attention_mask)
    jax.block_until_ready(logits)

    assert logits.shape == (BATCH, NUM_LABELS)
    logits_ref = forward_reference(params, input_ids, attention_mask)
    assert jnp.allclose(logits, logits_ref, atol=5e-2, rtol=5e-2)

    print("KERNEL_OK")
</pallas_src>

<mosaic_0001>
module attributes {stable_mosaic.version = 11 : i64} {
  func.func @_fused_forward_kernel(%arg0: memref<2x8x32xf32, #tpu.memory_space<vmem>>, %arg1: memref<16x16xf32, #tpu.memory_space<vmem>>, %arg2: memref<2x8x1xf32, #tpu.memory_space<vmem>>, %arg3: memref<2x160x96xf32, #tpu.memory_space<vmem>>, %arg4: memref<2x4x96xf32, #tpu.memory_space<vmem>>, %arg5: memref<32x128xf32, #tpu.memory_space<vmem>>, %arg6: memref<1x128xf32, #tpu.memory_space<vmem>>, %arg7: memref<2x128xf32, #tpu.memory_space<vmem>>) attributes {dimension_semantics = [], scalar_prefetch = 0 : i64, scratch_operands = 0 : i64, tpu.core_type = #tpu.core_type<tc>} {
    %c0 = arith.constant 0 : index
    %c0_0 = arith.constant 0 : index
    %c0_1 = arith.constant 0 : index
    %0 = vector.load %arg0[%c0, %c0_0, %c0_1] : memref<2x8x32xf32, #tpu.memory_space<vmem>>, vector<2x8x32xf32>
    %1 = vector.shape_cast %0 : vector<2x8x32xf32> to vector<16x32xf32>
    %c0_2 = arith.constant 0 : index
    %c0_3 = arith.constant 0 : index
    %2 = vector.load %arg1[%c0_2, %c0_3] : memref<16x16xf32, #tpu.memory_space<vmem>>, vector<16x16xf32>
    %c0_4 = arith.constant 0 : index
    %c0_5 = arith.constant 0 : index
    %c0_6 = arith.constant 0 : index
    %3 = vector.load %arg3[%c0_4, %c0_5, %c0_6] : memref<2x160x96xf32, #tpu.memory_space<vmem>>, vector<1x160x96xf32>
    %4 = vector.shape_cast %3 : vector<1x160x96xf32> to vector<160x96xf32>
    %c0_7 = arith.constant 0 : index
    %c0_8 = arith.constant 0 : index
    %c0_9 = arith.constant 0 : index
    %5 = vector.load %arg4[%c0_7, %c0_8, %c0_9] : memref<2x4x96xf32, #tpu.memory_space<vmem>>, vector<1x4x96xf32>
    %6 = vector.shape_cast %5 : vector<1x4x96xf32> to vector<4x96xf32>
    %7 = vector.extract_strided_slice %4 {offsets = [0, 0], sizes = [32, 96], strides = [1, 1]} : vector<160x96xf32> to vector<32x96xf32>
    %8 = vector.extract_strided_slice %4 {offsets = [32, 0], sizes = [32, 32], strides = [1, 1]} : vector<160x96xf32> to vector<32x32xf32>
    %9 = vector.extract_strided_slice %4 {offsets = [64, 0], sizes = [32, 64], strides = [1, 1]} : vector<160x96xf32> to vector<32x64xf32>
    %10 = vector.extract_strided_slice %4 {offsets = [96, 0], sizes = [64, 32], strides = [1, 1]} : vector<160x96xf32> to vector<64x32xf32>
    %11 = vector.extract_strided_slice %6 {offsets = [0, 0], sizes = [1, 96], strides = [1, 1]} : vector<4x96xf32> to vector<1x96xf32>
    %12 = vector.extract_strided_slice %6 {offsets = [1, 0], sizes = [1, 32], strides = [1, 1]} : vector<4x96xf32> to vector<1x32xf32>
    %13 = vector.extract_strided_slice %6 {offsets = [1, 32], sizes = [1, 32], strides = [1, 1]} : vector<4x96xf32> to vector<1x32xf32>
    %14 = vector.extract_strided_slice %6 {offsets = [1, 64], sizes = [1, 32], strides = [1, 1]} : vector<4x96xf32> to vector<1x32xf32>
    %15 = vector.extract_strided_slice %6 {offsets = [2, 0], sizes = [1, 64], strides = [1, 1]} : vector<4x96xf32> to vector<1x64xf32>
    %16 = vector.extract_strided_slice %6 {offsets = [3, 0], sizes = [1, 32], strides = [1, 1]} : vector<4x96xf32> to vector<1x32xf32>
    %17 = vector.extract_strided_slice %6 {offsets = [3, 32], sizes = [1, 32], strides = [1, 1]} : vector<4x96xf32> to vector<1x32xf32>
    %18 = vector.extract_strided_slice %6 {offsets = [3, 64], sizes = [1, 32], strides = [1, 1]} : vector<4x96xf32> to vector<1x32xf32>
    %cst = arith.constant dense<0.000000e+00> : vector<16x96xf32>
    %19 = tpu.matmul %1, %7, %cst {dimension_numbers = #tpu.dot_dimension_numbers<[1], [0], [0], [1], [0, 0, 1, 1], [], []>} : vector<16x32xf32>, vector<32x96xf32>, vector<16x96xf32> -> vector<16x96xf32>
    %20 = vector.broadcast %11 : vector<1x96xf32> to vector<16x96xf32>
    %21 = arith.addf %19, %20 : vector<16x96xf32>
    %22 = vector.extract_strided_slice %21 {offsets = [0, 0], sizes = [16, 32], strides = [1, 1]} : vector<16x96xf32> to vector<16x32xf32>
    %23 = vector.extract_strided_slice %22 {offsets = [0, 0], sizes = [16, 8], strides = [1, 1]} : vector<16x32xf32> to vector<16x8xf32>
    %24 = vector.extract_strided_slice %22 {offsets = [0, 8], sizes = [16, 8], strides = [1, 1]} : vector<16x32xf32> to vector<16x8xf32>
    %25 = vector.extract_strided_slice %22 {offsets = [0, 16], sizes = [16, 8], strides = [1, 1]} : vector<16x32xf32> to vector<16x8xf32>
    %26 = vector.extract_strided_slice %22 {offsets = [0, 24], sizes = [16, 8], strides = [1, 1]} : vector<16x32xf32> to vector<16x8xf32>
    %27 = vector.shape_cast %23 : vector<16x8xf32> to vector<1x16x8xf32>
    %28 = vector.shape_cast %24 : vector<16x8xf32> to vector<1x16x8xf32>
    %29 = vector.shape_cast %25 : vector<16x8xf32> to vector<1x16x8xf32>
    %30 = vector.shape_cast %26 : vector<16x8xf32> to vector<1x16x8xf32>
    %31 = tpu.concatenate %27, %28, %29, %30 in 0 : vector<1x16x8xf32>, vector<1x16x8xf32>, vector<1x16x8xf32>, vector<1x16x8xf32> -> vector<4x16x8xf32>
    %32 = vector.extract_strided_slice %21 {offsets = [0, 32], sizes = [16, 32], strides = [1, 1]} : vector<16x96xf32> to vector<16x32xf32>
    %33 = vector.extract_strided_slice %32 {offsets = [0, 0], sizes = [16, 8], strides = [1, 1]} : vector<16x32xf32> to vector<16x8xf32>
    %34 = vector.extract_strided_slice %32 {offsets = [0, 8], sizes = [16, 8], strides = [1, 1]} : vector<16x32xf32> to vector<16x8xf32>
    %35 = vector.extract_strided_slice %32 {offsets = [0, 16], sizes = [16, 8], strides = [1, 1]} : vector<16x32xf32> to vector<16x8xf32>
    %36 = vector.extract_strided_slice %32 {offsets = [0, 24], sizes = [16, 8], strides = [1, 1]} : vector<16x32xf32> to vector<16x8xf32>
    %37 = vector.shape_cast %33 : vector<16x8xf32> to vector<1x16x8xf32>
    %38 = vector.shape_cast %34 : vector<16x8xf32> to vector<1x16x8xf32>
    %39 = vector.shape_cast %35 : vector<16x8xf32> to vector<1x16x8xf32>
    %40 = vector.shape_cast %36 : vector<16x8xf32> to vector<1x16x8xf32>
    %41 = tpu.concatenate %37, %38, %39, %40 in 0 : vector<1x16x8xf32>, vector<1x16x8xf32>, vector<1x16x8xf32>, vector<1x16x8xf32> -> vector<4x16x8xf32>
    %42 = vector.extract_strided_slice %21 {offsets = [0, 64], sizes = [16, 32], strides = [1, 1]} : vector<16x96xf32> to vector<16x32xf32>
    %43 = vector.extract_strided_slice %42 {offsets = [0, 0], sizes = [16, 8], strides = [1, 1]} : vector<16x32xf32> to vector<16x8xf32>
    %44 = vector.extract_strided_slice %42 {offsets = [0, 8], sizes = [16, 8], strides = [1, 1]} : vector<16x32xf32> to vector<16x8xf32>
    %45 = vector.extract_strided_slice %42 {offsets = [0, 16], sizes = [16, 8], strides = [1, 1]} : vector<16x32xf32> to vector<16x8xf32>
    %46 = vector.extract_strided_slice %42 {offsets = [0, 24], sizes = [16, 8], strides = [1, 1]} : vector<16x32xf32> to vector<16x8xf32>
    %47 = vector.shape_cast %43 : vector<16x8xf32> to vector<1x16x8xf32>
    %48 = vector.shape_cast %44 : vector<16x8xf32> to vector<1x16x8xf32>
    %49 = vector.shape_cast %45 : vector<16x8xf32> to vector<1x16x8xf32>
    %50 = vector.shape_cast %46 : vector<16x8xf32> to vector<1x16x8xf32>
    %51 = tpu.concatenate %47, %48, %49, %50 in 0 : vector<1x16x8xf32>, vector<1x16x8xf32>, vector<1x16x8xf32>, vector<1x16x8xf32> -> vector<4x16x8xf32>
    "tpu.trace_start"() <{level = 10 : i32, message = "hqd,hkd->hqk"}> : () -> ()
    %cst_10 = arith.constant dense<0.000000e+00> : vector<4x16x16xf32>
    %52 = tpu.matmul %31, %41, %cst_10 {dimension_numbers = #tpu.dot_dimension_numbers<[2], [2], [1], [1], [0, 0, 0, 1, 1, 1], [0], [0]>} : vector<4x16x8xf32>, vector<4x16x8xf32>, vector<4x16x16xf32> -> vector<4x16x16xf32>
    "tpu.trace_stop"() : () -> ()
    %cst_11 = arith.constant 0.353553385 : f32
    %53 = vector.broadcast %cst_11 : f32 to vector<4x16x16xf32>
    %54 = arith.mulf %52, %53 : vector<4x16x16xf32>
    %55 = vector.shape_cast %2 : vector<16x16xf32> to vector<1x16x16xf32>
    %56 = vector.broadcast %55 : vector<1x16x16xf32> to vector<4x16x16xf32>
    %57 = arith.addf %54, %56 : vector<4x16x16xf32>
    %cst_12 = arith.constant dense<0xFF800000> : vector<4x16xf32>
    %58 = vector.multi_reduction <maximumf>, %57, %cst_12 [2] : vector<4x16x16xf32> to vector<4x16xf32>
    %59 = vector.shape_cast %58 : vector<4x16xf32> to vector<4x16x1xf32>
    %60 = vector.broadcast %59 : vector<4x16x1xf32> to vector<4x16x16xf32>
    %61 = arith.subf %57, %60 : vector<4x16x16xf32>
    %62 = math.exp %61 : vector<4x16x16xf32>
    %cst_13 = arith.constant dense<0.000000e+00> : vector<4x16xf32>
    %63 = vector.multi_reduction <add>, %62, %cst_13 [2] : vector<4x16x16xf32> to vector<4x16xf32>
    %64 = vector.shape_cast %63 : vector<4x16xf32> to vector<4x16x1xf32>
    %65 = vector.broadcast %64 : vector<4x16x1xf32> to vector<4x16x16xf32>
    %66 = arith.divf %62, %65 : vector<4x16x16xf32>
    "tpu.trace_start"() <{level = 10 : i32, message = "hqk,hkd->hqd"}> : () -> ()
    %cst_14 = arith.constant dense<0.000000e+00> : vector<4x16x8xf32>
    %67 = tpu.matmul %66, %51, %cst_14 {dimension_numbers = #tpu.dot_dimension_numbers<[2], [1], [1], [2], [0, 0, 0, 1, 1, 2], [0], [0]>} : vector<4x16x16xf32>, vector<4x16x8xf32>, vector<4x16x8xf32> -> vector<4x16x8xf32>
    "tpu.trace_stop"() : () -> ()
    %68 = vector.extract_strided_slice %67 {offsets = [0, 0, 0], sizes = [1, 16, 8], strides = [1, 1, 1]} : vector<4x16x8xf32> to vector<1x16x8xf32>
    %69 = vector.shape_cast %68 : vector<1x16x8xf32> to vector<16x8xf32>
    %70 = vector.extract_strided_slice %8 {offsets = [0, 0], sizes = [8, 32], strides = [1, 1]} : vector<32x32xf32> to vector<8x32xf32>
    %cst_15 = arith.constant dense<0.000000e+00> : vector<16x32xf32>
    %71 = tpu.matmul %69, %70, %cst_15 {dimension_numbers = #tpu.dot_dimension_numbers<[1], [0], [0], [1], [0, 0, 1, 1], [], []>} : vector<16x8xf32>, vector<8x32xf32>, vector<16x32xf32> -> vector<16x32xf32>
    %72 = vector.broadcast %12 : vector<1x32xf32> to vector<16x32xf32>
    %73 = arith.addf %72, %71 : vector<16x32xf32>
    %74 = vector.extract_strided_slice %67 {offsets = [1, 0, 0], sizes = [1, 16, 8], strides = [1, 1, 1]} : vector<4x16x8xf32> to vector<1x16x8xf32>
    %75 = vector.shape_cast %74 : vector<1x16x8xf32> to vector<16x8xf32>
    %76 = vector.extract_strided_slice %8 {offsets = [8, 0], sizes = [8, 32], strides = [1, 1]} : vector<32x32xf32> to vector<8x32xf32>
    %cst_16 = arith.constant dense<0.000000e+00> : vector<16x32xf32>
    %77 = tpu.matmul %75, %76, %cst_16 {dimension_numbers = #tpu.dot_dimension_numbers<[1], [0], [0], [1], [0, 0, 1, 1], [], []>} : vector<16x8xf32>, vector<8x32xf32>, vector<16x32xf32> -> vector<16x32xf32>
    %78 = arith.addf %73, %77 : vector<16x32xf32>
    %79 = vector.extract_strided_slice %67 {offsets = [2, 0, 0], sizes = [1, 16, 8], strides = [1, 1, 1]} : vector<4x16x8xf32> to vector<1x16x8xf32>
    %80 = vector.shape_cast %79 : vector<1x16x8xf32> to vector<16x8xf32>
    %81 = vector.extract_strided_slice %8 {offsets = [16, 0], sizes = [8, 32], strides = [1, 1]} : vector<32x32xf32> to vector<8x32xf32>
    %cst_17 = arith.constant dense<0.000000e+00> : vector<16x32xf32>
    %82 = tpu.matmul %80, %81, %cst_17 {dimension_numbers = #tpu.dot_dimension_numbers<[1], [0], [0], [1], [0, 0, 1, 1], [], []>} : vector<16x8xf32>, vector<8x32xf32>, vector<16x32xf32> -> vector<16x32xf32>
    %83 = arith.addf %78, %82 : vector<16x32xf32>
    %84 = vector.extract_strided_slice %67 {offsets = [3, 0, 0], sizes = [1, 16, 8], strides = [1, 1, 1]} : vector<4x16x8xf32> to vector<1x16x8xf32>
    %85 = vector.shape_cast %84 : vector<1x16x8xf32> to vector<16x8xf32>
    %86 = vector.extract_strided_slice %8 {offsets = [24, 0], sizes = [8, 32], strides = [1, 1]} : vector<32x32xf32> to vector<8x32xf32>
    %cst_18 = arith.constant dense<0.000000e+00> : vector<16x32xf32>
    %87 = tpu.matmul %85, %86, %cst_18 {dimension_numbers = #tpu.dot_dimension_numbers<[1], [0], [0], [1], [0, 0, 1, 1], [], []>} : vector<16x8xf32>, vector<8x32xf32>, vector<16x32xf32> -> vector<16x32xf32>
    %88 = arith.addf %83, %87 : vector<16x32xf32>
    %89 = arith.addf %1, %88 : vector<16x32xf32>
    %cst_19 = arith.constant dense<0.000000e+00> : vector<16xf32>
    %90 = vector.multi_reduction <add>, %89, %cst_19 [1] : vector<16x32xf32> to vector<16xf32>
    %91 = vector.shape_cast %90 : vector<16xf32> to vector<16x1xf32>
    %cst_20 = arith.constant 3.200000e+01 : f32
    %92 = vector.broadcast %cst_20 : f32 to vector<16x1xf32>
    %93 = arith.divf %91, %92 : vector<16x1xf32>
    %94 = vector.broadcast %93 : vector<16x1xf32> to vector<16x32xf32>
    %95 = arith.subf %89, %94 : vector<16x32xf32>
    %96 = arith.mulf %95, %95 : vector<16x32xf32>
    %cst_21 = arith.constant dense<0.000000e+00> : vector<16xf32>
    %97 = vector.multi_reduction <add>, %96, %cst_21 [1] : vector<16x32xf32> to vector<16xf32>
    %98 = vector.shape_cast %97 : vector<16xf32> to vector<16x1xf32>
    %cst_22 = arith.constant 3.200000e+01 : f32
    %99 = vector.broadcast %cst_22 : f32 to vector<16x1xf32>
    %100 = arith.divf %98, %99 : vector<16x1xf32>
    %101 = vector.broadcast %93 : vector<16x1xf32> to vector<16x32xf32>
    %102 = arith.subf %89, %101 : vector<16x32xf32>
    %cst_23 = arith.constant 9.99999996E-13 : f32
    %103 = vector.broadcast %cst_23 : f32 to vector<16x1xf32>
    %104 = arith.addf %100, %103 : vector<16x1xf32>
    %105 = math.rsqrt %104 : vector<16x1xf32>
    %106 = vector.broadcast %105 : vector<16x1xf32> to vector<16x32xf32>
    %107 = arith.mulf %102, %106 : vector<16x32xf32>
    %108 = vector.broadcast %13 : vector<1x32xf32> to vector<16x32xf32>
    %109 = arith.mulf %107, %108 : vector<16x32xf32>
    %110 = vector.broadcast %14 : vector<1x32xf32> to vector<16x32xf32>
    %111 = arith.addf %109, %110 : vector<16x32xf32>
    %cst_24 = arith.constant dense<0.000000e+00> : vector<16x64xf32>
    %112 = tpu.matmul %111, %9, %cst_24 {dimension_numbers = #tpu.dot_dimension_numbers<[1], [0], [0], [1], [0, 0, 1, 1], [], []>} : vector<16x32xf32>, vector<32x64xf32>, vector<16x64xf32> -> vector<16x64xf32>
    %113 = vector.broadcast %15 : vector<1x64xf32> to vector<16x64xf32>
    %114 = arith.addf %112, %113 : vector<16x64xf32>
    %115 = arith.mulf %114, %114 : vector<16x64xf32>
    %116 = arith.mulf %114, %115 : vector<16x64xf32>
    %cst_25 = arith.constant 4.471500e-02 : f32
    %117 = vector.broadcast %cst_25 : f32 to vector<16x64xf32>
    %118 = arith.mulf %117, %116 : vector<16x64xf32>
    %119 = arith.addf %114, %118 : vector<16x64xf32>
    %cst_26 = arith.constant 0.797884583 : f32
    %120 = vector.broadcast %cst_26 : f32 to vector<16x64xf32>
    %121 = arith.mulf %120, %119 : vector<16x64xf32>
    %122 = math.tanh %121 : vector<16x64xf32>
    %cst_27 = arith.constant 1.000000e+00 : f32
    %123 = vector.broadcast %cst_27 : f32 to vector<16x64xf32>
    %124 = arith.addf %123, %122 : vector<16x64xf32>
    %cst_28 = arith.constant 5.000000e-01 : f32
    %125 = vector.broadcast %cst_28 : f32 to vector<16x64xf32>
    %126 = arith.mulf %125, %124 : vector<16x64xf32>
    %127 = arith.mulf %114, %126 : vector<16x64xf32>
    %cst_29 = arith.constant dense<0.000000e+00> : vector<16x32xf32>
    %128 = tpu.matmul %127, %10, %cst_29 {dimension_numbers = #tpu.dot_dimension_numbers<[1], [0], [0], [1], [0, 0, 1, 1], [], []>} : vector<16x64xf32>, vector<64x32xf32>, vector<16x32xf32> -> vector<16x32xf32>
    %129 = vector.broadcast %16 : vector<1x32xf32> to vector<16x32xf32>
    %130 = arith.addf %128, %129 : vector<16x32xf32>
    %131 = arith.addf %111, %130 : vector<16x32xf32>
    %cst_30 = arith.constant dense<0.000000e+00> : vector<16xf32>
    %132 = vector.multi_reduction <add>, %131, %cst_30 [1] : vector<16x32xf32> to vector<16xf32>
    %133 = vector.shape_cast %132 : vector<16xf32> to vector<16x1xf32>
    %cst_31 = arith.constant 3.200000e+01 : f32
    %134 = vector.broadcast %cst_31 : f32 to vector<16x1xf32>
    %135 = arith.divf %133, %134 : vector<16x1xf32>
    %136 = vector.broadcast %135 : vector<16x1xf32> to vector<16x32xf32>
    %137 = arith.subf %131, %136 : vector<16x32xf32>
    %138 = arith.mulf %137, %137 : vector<16x32xf32>
    %cst_32 = arith.constant dense<0.000000e+00> : vector<16xf32>
    %139 = vector.multi_reduction <add>, %138, %cst_32 [1] : vector<16x32xf32> to vector<16xf32>
    %140 = vector.shape_cast %139 : vector<16xf32> to vector<16x1xf32>
    %cst_33 = arith.constant 3.200000e+01 : f32
    %141 = vector.broadcast %cst_33 : f32 to vector<16x1xf32>
    %142 = arith.divf %140, %141 : vector<16x1xf32>
    %143 = vector.broadcast %135 : vector<16x1xf32> to vector<16x32xf32>
    %144 = arith.subf %131, %143 : vector<16x32xf32>
    %cst_34 = arith.constant 9.99999996E-13 : f32
    %145 = vector.broadcast %cst_34 : f32 to vector<16x1xf32>
    %146 = arith.addf %142, %145 : vector<16x1xf32>
    %147 = math.rsqrt %146 : vector<16x1xf32>
    %148 = vector.broadcast %147 : vector<16x1xf32> to vector<16x32xf32>
    %149 = arith.mulf %144, %148 : vector<16x32xf32>
    %150 = vector.broadcast %17 : vector<1x32xf32> to vector<16x32xf32>
    %151 = arith.mulf %149, %150 : vector<16x32xf32>
    %152 = vector.broadcast %18 : vector<1x32xf32> to vector<16x32xf32>
    %153 = arith.addf %151, %152 : vector<16x32xf32>
    %c1 = arith.constant 1 : index
    %c0_35 = arith.constant 0 : index
    %c0_36 = arith.constant 0 : index
    %154 = vector.load %arg3[%c1, %c0_35, %c0_36] : memref<2x160x96xf32, #tpu.memory_space<vmem>>, vector<1x160x96xf32>
    %155 = vector.shape_cast %154 : vector<1x160x96xf32> to vector<160x96xf32>
    %c1_37 = arith.constant 1 : index
    %c0_38 = arith.constant 0 : index
    %c0_39 = arith.constant 0 : index
    %156 = vector.load %arg4[%c1_37, %c0_38, %c0_39] : memref<2x4x96xf32, #tpu.memory_space<vmem>>, vector<1x4x96xf32>
    %157 = vector.shape_cast %156 : vector<1x4x96xf32> to vector<4x96xf32>
    %158 = vector.extract_strided_slice %155 {offsets = [0, 0], sizes = [32, 96], strides = [1, 1]} : vector<160x96xf32> to vector<32x96xf32>
    %159 = vector.extract_strided_slice %155 {offsets = [32, 0], sizes = [32, 32], strides = [1, 1]} : vector<160x96xf32> to vector<32x32xf32>
    %160 = vector.extract_strided_slice %155 {offsets = [64, 0], sizes = [32, 64], strides = [1, 1]} : vector<160x96xf32> to vector<32x64xf32>
    %161 = vector.extract_strided_slice %155 {offsets = [96, 0], sizes = [64, 32], strides = [1, 1]} : vector<160x96xf32> to vector<64x32xf32>
    %162 = vector.extract_strided_slice %157 {offsets = [0, 0], sizes = [1, 96], strides = [1, 1]} : vector<4x96xf32> to vector<1x96xf32>
    %163 = vector.extract_strided_slice %157 {offsets = [1, 0], sizes = [1, 32], strides = [1, 1]} : vector<4x96xf32> to vector<1x32xf32>
    %164 = vector.extract_strided_slice %157 {offsets = [1, 32], sizes = [1, 32], strides = [1, 1]} : vector<4x96xf32> to vector<1x32xf32>
    %165 = vector.extract_strided_slice %157 {offsets = [1, 64], sizes = [1, 32], strides = [1, 1]} : vector<4x96xf32> to vector<1x32xf32>
    %166 = vector.extract_strided_slice %157 {offsets = [2, 0], sizes = [1, 64], strides = [1, 1]} : vector<4x96xf32> to vector<1x64xf32>
    %167 = vector.extract_strided_slice %157 {offsets = [3, 0], sizes = [1, 32], strides = [1, 1]} : vector<4x96xf32> to vector<1x32xf32>
    %168 = vector.extract_strided_slice %157 {offsets = [3, 32], sizes = [1, 32], strides = [1, 1]} : vector<4x96xf32> to vector<1x32xf32>
    %169 = vector.extract_strided_slice %157 {offsets = [3, 64], sizes = [1, 32], strides = [1, 1]} : vector<4x96xf32> to vector<1x32xf32>
    %cst_40 = arith.constant dense<0.000000e+00> : vector<16x96xf32>
    %170 = tpu.matmul %153, %158, %cst_40 {dimension_numbers = #tpu.dot_dimension_numbers<[1], [0], [0], [1], [0, 0, 1, 1], [], []>} : vector<16x32xf32>, vector<32x96xf32>, vector<16x96xf32> -> vector<16x96xf32>
    %171 = vector.broadcast %162 : vector<1x96xf32> to vector<16x96xf32>
    %172 = arith.addf %170, %171 : vector<16x96xf32>
    %173 = vector.extract_strided_slice %172 {offsets = [0, 0], sizes = [16, 32], strides = [1, 1]} : vector<16x96xf32> to vector<16x32xf32>
    %174 = vector.extract_strided_slice %173 {offsets = [0, 0], sizes = [16, 8], strides = [1, 1]} : vector<16x32xf32> to vector<16x8xf32>
    %175 = vector.extract_strided_slice %173 {offsets = [0, 8], sizes = [16, 8], strides = [1, 1]} : vector<16x32xf32> to vector<16x8xf32>
    %176 = vector.extract_strided_slice %173 {offsets = [0, 16], sizes = [16, 8], strides = [1, 1]} : vector<16x32xf32> to vector<16x8xf32>
    %177 = vector.extract_strided_slice %173 {offsets = [0, 24], sizes = [16, 8], strides = [1, 1]} : vector<16x32xf32> to vector<16x8xf32>
    %178 = vector.shape_cast %174 : vector<16x8xf32> to vector<1x16x8xf32>
    %179 = vector.shape_cast %175 : vector<16x8xf32> to vector<1x16x8xf32>
    %180 = vector.shape_cast %176 : vector<16x8xf32> to vector<1x16x8xf32>
    %181 = vector.shape_cast %177 : vector<16x8xf32> to vector<1x16x8xf32>
    %182 = tpu.concatenate %178, %179, %180, %181 in 0 : vector<1x16x8xf32>, vector<1x16x8xf32>, vector<1x16x8xf32>, vector<1x16x8xf32> -> vector<4x16x8xf32>
    %183 = vector.extract_strided_slice %172 {offsets = [0, 32], sizes = [16, 32], strides = [1, 1]} : vector<16x96xf32> to vector<16x32xf32>
    %184 = vector.extract_strided_slice %183 {offsets = [0, 0], sizes = [16, 8], strides = [1, 1]} : vector<16x32xf32> to vector<16x8xf32>
    %185 = vector.extract_strided_slice %183 {offsets = [0, 8], sizes = [16, 8], strides = [1, 1]} : vector<16x32xf32> to vector<16x8xf32>
    %186 = vector.extract_strided_slice %183 {offsets = [0, 16], sizes = [16, 8], strides = [1, 1]} : vector<16x32xf32> to vector<16x8xf32>
    %187 = vector.extract_strided_slice %183 {offsets = [0, 24], sizes = [16, 8], strides = [1, 1]} : vector<16x32xf32> to vector<16x8xf32>
    %188 = vector.shape_cast %184 : vector<16x8xf32> to vector<1x16x8xf32>
    %189 = vector.shape_cast %185 : vector<16x8xf32> to vector<1x16x8xf32>
    %190 = vector.shape_cast %186 : vector<16x8xf32> to vector<1x16x8xf32>
    %191 = vector.shape_cast %187 : vector<16x8xf32> to vector<1x16x8xf32>
    %192 = tpu.concatenate %188, %189, %190, %191 in 0 : vector<1x16x8xf32>, vector<1x16x8xf32>, vector<1x16x8xf32>, vector<1x16x8xf32> -> vector<4x16x8xf32>
    %193 = vector.extract_strided_slice %172 {offsets = [0, 64], sizes = [16, 32], strides = [1, 1]} : vector<16x96xf32> to vector<16x32xf32>
    %194 = vector.extract_strided_slice %193 {offsets = [0, 0], sizes = [16, 8], strides = [1, 1]} : vector<16x32xf32> to vector<16x8xf32>
    %195 = vector.extract_strided_slice %193 {offsets = [0, 8], sizes = [16, 8], strides = [1, 1]} : vector<16x32xf32> to vector<16x8xf32>
    %196 = vector.extract_strided_slice %193 {offsets = [0, 16], sizes = [16, 8], strides = [1, 1]} : vector<16x32xf32> to vector<16x8xf32>
    %197 = vector.extract_strided_slice %193 {offsets = [0, 24], sizes = [16, 8], strides = [1, 1]} : vector<16x32xf32> to vector<16x8xf32>
    %198 = vector.shape_cast %194 : vector<16x8xf32> to vector<1x16x8xf32>
    %199 = vector.shape_cast %195 : vector<16x8xf32> to vector<1x16x8xf32>
    %200 = vector.shape_cast %196 : vector<16x8xf32> to vector<1x16x8xf32>
    %201 = vector.shape_cast %197 : vector<16x8xf32> to vector<1x16x8xf32>
    %202 = tpu.concatenate %198, %199, %200, %201 in 0 : vector<1x16x8xf32>, vector<1x16x8xf32>, vector<1x16x8xf32>, vector<1x16x8xf32> -> vector<4x16x8xf32>
    "tpu.trace_start"() <{level = 10 : i32, message = "hqd,hkd->hqk"}> : () -> ()
    %cst_41 = arith.constant dense<0.000000e+00> : vector<4x16x16xf32>
    %203 = tpu.matmul %182, %192, %cst_41 {dimension_numbers = #tpu.dot_dimension_numbers<[2], [2], [1], [1], [0, 0, 0, 1, 1, 1], [0], [0]>} : vector<4x16x8xf32>, vector<4x16x8xf32>, vector<4x16x16xf32> -> vector<4x16x16xf32>
    "tpu.trace_stop"() : () -> ()
    %cst_42 = arith.constant 0.353553385 : f32
    %204 = vector.broadcast %cst_42 : f32 to vector<4x16x16xf32>
    %205 = arith.mulf %203, %204 : vector<4x16x16xf32>
    %206 = vector.shape_cast %2 : vector<16x16xf32> to vector<1x16x16xf32>
    %207 = vector.broadcast %206 : vector<1x16x16xf32> to vector<4x16x16xf32>
    %208 = arith.addf %205, %207 : vector<4x16x16xf32>
    %cst_43 = arith.constant dense<0xFF800000> : vector<4x16xf32>
    %209 = vector.multi_reduction <maximumf>, %208, %cst_43 [2] : vector<4x16x16xf32> to vector<4x16xf32>
    %210 = vector.shape_cast %209 : vector<4x16xf32> to vector<4x16x1xf32>
    %211 = vector.broadcast %210 : vector<4x16x1xf32> to vector<4x16x16xf32>
    %212 = arith.subf %208, %211 : vector<4x16x16xf32>
    %213 = math.exp %212 : vector<4x16x16xf32>
    %cst_44 = arith.constant dense<0.000000e+00> : vector<4x16xf32>
    %214 = vector.multi_reduction <add>, %213, %cst_44 [2] : vector<4x16x16xf32> to vector<4x16xf32>
    %215 = vector.shape_cast %214 : vector<4x16xf32> to vector<4x16x1xf32>
    %216 = vector.broadcast %215 : vector<4x16x1xf32> to vector<4x16x16xf32>
    %217 = arith.divf %213, %216 : vector<4x16x16xf32>
    "tpu.trace_start"() <{level = 10 : i32, message = "hqk,hkd->hqd"}> : () -> ()
    %cst_45 = arith.constant dense<0.000000e+00> : vector<4x16x8xf32>
    %218 = tpu.matmul %217, %202, %cst_45 {dimension_numbers = #tpu.dot_dimension_numbers<[2], [1], [1], [2], [0, 0, 0, 1, 1, 2], [0], [0]>} : vector<4x16x16xf32>, vector<4x16x8xf32>, vector<4x16x8xf32> -> vector<4x16x8xf32>
    "tpu.trace_stop"() : () -> ()
    %219 = vector.extract_strided_slice %218 {offsets = [0, 0, 0], sizes = [1, 16, 8], strides = [1, 1, 1]} : vector<4x16x8xf32> to vector<1x16x8xf32>
    %220 = vector.shape_cast %219 : vector<1x16x8xf32> to vector<16x8xf32>
    %221 = vector.extract_strided_slice %159 {offsets = [0, 0], sizes = [8, 32], strides = [1, 1]} : vector<32x32xf32> to vector<8x32xf32>
    %cst_46 = arith.constant dense<0.000000e+00> : vector<16x32xf32>
    %222 = tpu.matmul %220, %221, %cst_46 {dimension_numbers = #tpu.dot_dimension_numbers<[1], [0], [0], [1], [0, 0, 1, 1], [], []>} : vector<16x8xf32>, vector<8x32xf32>, vector<16x32xf32> -> vector<16x32xf32>
    %223 = vector.broadcast %163 : vector<1x32xf32> to vector<16x32xf32>
    %224 = arith.addf %223, %222 : vector<16x32xf32>
    %225 = vector.extract_strided_slice %218 {offsets = [1, 0, 0], sizes = [1, 16, 8], strides = [1, 1, 1]} : vector<4x16x8xf32> to vector<1x16x8xf32>
    %226 = vector.shape_cast %225 : vector<1x16x8xf32> to vector<16x8xf32>
    %227 = vector.extract_strided_slice %159 {offsets = [8, 0], sizes = [8, 32], strides = [1, 1]} : vector<32x32xf32> to vector<8x32xf32>
    %cst_47 = arith.constant dense<0.000000e+00> : vector<16x32xf32>
    %228 = tpu.matmul %226, %227, %cst_47 {dimension_numbers = #tpu.dot_dimension_numbers<[1], [0], [0], [1], [0, 0, 1, 1], [], []>} : vector<16x8xf32>, vector<8x32xf32>, vector<16x32xf32> -> vector<16x32xf32>
    %229 = arith.addf %224, %228 : vector<16x32xf32>
    %230 = vector.extract_strided_slice %218 {offsets = [2, 0, 0], sizes = [1, 16, 8], strides = [1, 1, 1]} : vector<4x16x8xf32> to vector<1x16x8xf32>
    %231 = vector.shape_cast %230 : vector<1x16x8xf32> to vector<16x8xf32>
    %232 = vector.extract_strided_slice %159 {offsets = [16, 0], sizes = [8, 32], strides = [1, 1]} : vector<32x32xf32> to vector<8x32xf32>
    %cst_48 = arith.constant dense<0.000000e+00> : vector<16x32xf32>
    %233 = tpu.matmul %231, %232, %cst_48 {dimension_numbers = #tpu.dot_dimension_numbers<[1], [0], [0], [1], [0, 0, 1, 1], [], []>} : vector<16x8xf32>, vector<8x32xf32>, vector<16x32xf32> -> vector<16x32xf32>
    %234 = arith.addf %229, %233 : vector<16x32xf32>
    %235 = vector.extract_strided_slice %218 {offsets = [3, 0, 0], sizes = [1, 16, 8], strides = [1, 1, 1]} : vector<4x16x8xf32> to vector<1x16x8xf32>
    %236 = vector.shape_cast %235 : vector<1x16x8xf32> to vector<16x8xf32>
    %237 = vector.extract_strided_slice %159 {offsets = [24, 0], sizes = [8, 32], strides = [1, 1]} : vector<32x32xf32> to vector<8x32xf32>
    %cst_49 = arith.constant dense<0.000000e+00> : vector<16x32xf32>
    %238 = tpu.matmul %236, %237, %cst_49 {dimension_numbers = #tpu.dot_dimension_numbers<[1], [0], [0], [1], [0, 0, 1, 1], [], []>} : vector<16x8xf32>, vector<8x32xf32>, vector<16x32xf32> -> vector<16x32xf32>
    %239 = arith.addf %234, %238 : vector<16x32xf32>
    %240 = arith.addf %153, %239 : vector<16x32xf32>
    %cst_50 = arith.constant dense<0.000000e+00> : vector<16xf32>
    %241 = vector.multi_reduction <add>, %240, %cst_50 [1] : vector<16x32xf32> to vector<16xf32>
    %242 = vector.shape_cast %241 : vector<16xf32> to vector<16x1xf32>
    %cst_51 = arith.constant 3.200000e+01 : f32
    %243 = vector.broadcast %cst_51 : f32 to vector<16x1xf32>
    %244 = arith.divf %242, %243 : vector<16x1xf32>
    %245 = vector.broadcast %244 : vector<16x1xf32> to vector<16x32xf32>
    %246 = arith.subf %240, %245 : vector<16x32xf32>
    %247 = arith.mulf %246, %246 : vector<16x32xf32>
    %cst_52 = arith.constant dense<0.000000e+00> : vector<16xf32>
    %248 = vector.multi_reduction <add>, %247, %cst_52 [1] : vector<16x32xf32> to vector<16xf32>
    %249 = vector.shape_cast %248 : vector<16xf32> to vector<16x1xf32>
    %cst_53 = arith.constant 3.200000e+01 : f32
    %250 = vector.broadcast %cst_53 : f32 to vector<16x1xf32>
    %251 = arith.divf %249, %250 : vector<16x1xf32>
    %252 = vector.broadcast %244 : vector<16x1xf32> to vector<16x32xf32>
    %253 = arith.subf %240, %252 : vector<16x32xf32>
    %cst_54 = arith.constant 9.99999996E-13 : f32
    %254 = vector.broadcast %cst_54 : f32 to vector<16x1xf32>
    %255 = arith.addf %251, %254 : vector<16x1xf32>
    %256 = math.rsqrt %255 : vector<16x1xf32>
    %257 = vector.broadcast %256 : vector<16x1xf32> to vector<16x32xf32>
    %258 = arith.mulf %253, %257 : vector<16x32xf32>
    %259 = vector.broadcast %164 : vector<1x32xf32> to vector<16x32xf32>
    %260 = arith.mulf %258, %259 : vector<16x32xf32>
    %261 = vector.broadcast %165 : vector<1x32xf32> to vector<16x32xf32>
    %262 = arith.addf %260, %261 : vector<16x32xf32>
    %cst_55 = arith.constant dense<0.000000e+00> : vector<16x64xf32>
    %263 = tpu.matmul %262, %160, %cst_55 {dimension_numbers = #tpu.dot_dimension_numbers<[1], [0], [0], [1], [0, 0, 1, 1], [], []>} : vector<16x32xf32>, vector<32x64xf32>, vector<16x64xf32> -> vector<16x64xf32>
    %264 = vector.broadcast %166 : vector<1x64xf32> to vector<16x64xf32>
    %265 = arith.addf %263, %264 : vector<16x64xf32>
    %266 = arith.mulf %265, %265 : vector<16x64xf32>
    %267 = arith.mulf %265, %266 : vector<16x64xf32>
    %cst_56 = arith.constant 4.471500e-02 : f32
    %268 = vector.broadcast %cst_56 : f32 to vector<16x64xf32>
    %269 = arith.mulf %268, %267 : vector<16x64xf32>
    %270 = arith.addf %265, %269 : vector<16x64xf32>
    %cst_57 = arith.constant 0.797884583 : f32
    %271 = vector.broadcast %cst_57 : f32 to vector<16x64xf32>
    %272 = arith.mulf %271, %270 : vector<16x64xf32>
    %273 = math.tanh %272 : vector<16x64xf32>
    %cst_58 = arith.constant 1.000000e+00 : f32
    %274 = vector.broadcast %cst_58 : f32 to vector<16x64xf32>
    %275 = arith.addf %274, %273 : vector<16x64xf32>
    %cst_59 = arith.constant 5.000000e-01 : f32
    %276 = vector.broadcast %cst_59 : f32 to vector<16x64xf32>
    %277 = arith.mulf %276, %275 : vector<16x64xf32>
    %278 = arith.mulf %265, %277 : vector<16x64xf32>
    %cst_60 = arith.constant dense<0.000000e+00> : vector<16x32xf32>
    %279 = tpu.matmul %278, %161, %cst_60 {dimension_numbers = #tpu.dot_dimension_numbers<[1], [0], [0], [1], [0, 0, 1, 1], [], []>} : vector<16x64xf32>, vector<64x32xf32>, vector<16x32xf32> -> vector<16x32xf32>
    %280 = vector.broadcast %167 : vector<1x32xf32> to vector<16x32xf32>
    %281 = arith.addf %279, %280 : vector<16x32xf32>
    %282 = arith.addf %262, %281 : vector<16x32xf32>
    %cst_61 = arith.constant dense<0.000000e+00> : vector<16xf32>
    %283 = vector.multi_reduction <add>, %282, %cst_61 [1] : vector<16x32xf32> to vector<16xf32>
    %284 = vector.shape_cast %283 : vector<16xf32> to vector<16x1xf32>
    %cst_62 = arith.constant 3.200000e+01 : f32
    %285 = vector.broadcast %cst_62 : f32 to vector<16x1xf32>
    %286 = arith.divf %284, %285 : vector<16x1xf32>
    %287 = vector.broadcast %286 : vector<16x1xf32> to vector<16x32xf32>
    %288 = arith.subf %282, %287 : vector<16x32xf32>
    %289 = arith.mulf %288, %288 : vector<16x32xf32>
    %cst_63 = arith.constant dense<0.000000e+00> : vector<16xf32>
    %290 = vector.multi_reduction <add>, %289, %cst_63 [1] : vector<16x32xf32> to vector<16xf32>
    %291 = vector.shape_cast %290 : vector<16xf32> to vector<16x1xf32>
    %cst_64 = arith.constant 3.200000e+01 : f32
    %292 = vector.broadcast %cst_64 : f32 to vector<16x1xf32>
    %293 = arith.divf %291, %292 : vector<16x1xf32>
    %294 = vector.broadcast %286 : vector<16x1xf32> to vector<16x32xf32>
    %295 = arith.subf %282, %294 : vector<16x32xf32>
    %cst_65 = arith.constant 9.99999996E-13 : f32
    %296 = vector.broadcast %cst_65 : f32 to vector<16x1xf32>
    %297 = arith.addf %293, %296 : vector<16x1xf32>
    %298 = math.rsqrt %297 : vector<16x1xf32>
    %299 = vector.broadcast %298 : vector<16x1xf32> to vector<16x32xf32>
    %300 = arith.mulf %295, %299 : vector<16x32xf32>
    %301 = vector.broadcast %168 : vector<1x32xf32> to vector<16x32xf32>
    %302 = arith.mulf %300, %301 : vector<16x32xf32>
    %303 = vector.broadcast %169 : vector<1x32xf32> to vector<16x32xf32>
    %304 = arith.addf %302, %303 : vector<16x32xf32>
    %305 = vector.shape_cast %304 : vector<16x32xf32> to vector<2x8x32xf32>
    %c0_66 = arith.constant 0 : index
    %c0_67 = arith.constant 0 : index
    %c0_68 = arith.constant 0 : index
    %306 = vector.load %arg2[%c0_66, %c0_67, %c0_68] : memref<2x8x1xf32, #tpu.memory_space<vmem>>, vector<2x8x1xf32>
    %307 = vector.broadcast %306 : vector<2x8x1xf32> to vector<2x8x32xf32>
    %308 = arith.mulf %305, %307 : vector<2x8x32xf32>
    %cst_69 = arith.constant dense<0.000000e+00> : vector<2x32xf32>
    %309 = vector.multi_reduction <add>, %308, %cst_69 [1] : vector<2x8x32xf32> to vector<2x32xf32>
    %cst_70 = arith.constant dense<0.000000e+00> : vector<2x1xf32>
    %310 = vector.multi_reduction <add>, %306, %cst_70 [1] : vector<2x8x1xf32> to vector<2x1xf32>
    %cst_71 = arith.constant 9.99999971E-10 : f32
    %311 = vector.broadcast %cst_71 : f32 to vector<2x1xf32>
    %312 = arith.maximumf %310, %311 : vector<2x1xf32>
    %313 = vector.broadcast %312 : vector<2x1xf32> to vector<2x32xf32>
    %314 = arith.divf %309, %313 : vector<2x32xf32>
    %c0_72 = arith.constant 0 : index
    %c0_73 = arith.constant 0 : index
    %315 = vector.load %arg5[%c0_72, %c0_73] : memref<32x128xf32, #tpu.memory_space<vmem>>, vector<32x128xf32>
    %cst_74 = arith.constant dense<0.000000e+00> : vector<2x128xf32>
    %316 = tpu.matmul %314, %315, %cst_74 {dimension_numbers = #tpu.dot_dimension_numbers<[1], [0], [0], [1], [0, 0, 1, 1], [], []>} : vector<2x32xf32>, vector<32x128xf32>, vector<2x128xf32> -> vector<2x128xf32>
    %c0_75 = arith.constant 0 : index
    %c0_76 = arith.constant 0 : index
    %317 = vector.load %arg6[%c0_75, %c0_76] : memref<1x128xf32, #tpu.memory_space<vmem>>, vector<1x128xf32>
    %318 = vector.broadcast %317 : vector<1x128xf32> to vector<2x128xf32>
    %319 = arith.addf %316, %318 : vector<2x128xf32>
    %c0_77 = arith.constant 0 : index
    %c0_78 = arith.constant 0 : index
    %320 = vector.load %arg7[%c0_77, %c0_78] : memref<2x128xf32, #tpu.memory_space<vmem>>, vector<2x128xf32>
    tpu.vector_store %arg7[%c0_77, %c0_78], %319 {strides = array<i32>} : memref<2x128xf32, #tpu.memory_space<vmem>>, vector<2x128xf32>,
    return
  }
}

</mosaic_0001>

<llo_original>
// kernel: tpu_custom_call.1
$region0: #{tpu_custom_call.1}
  #allocation0 [shape = 'u32[]', space=smem, size = 0x4, offset = 0x4, fixed_abs, tag = 'smem constant byte address 0x4 - core index']
  #allocation1 [shape = 'u32[144,128]{1,0:T(1,128)}', space=vmem, size = 0x12000, scoped, tag = 'internal scratch']
  %s0 = inlined_call_operand.hbm [shape: f32[2,8,32], index: 0, kind: input, shape index: {}]
  %s1 = inlined_call_operand.hbm [shape: f32[16,16], index: 1, kind: input, shape index: {}]
  %s2 = inlined_call_operand.vmem [shape: f32[2,8,1], index: 2, kind: input, shape index: {}]
  %s3 = inlined_call_operand.hbm [shape: f32[2,160,96], index: 3, kind: input, shape index: {}]
  %s4 = inlined_call_operand.hbm [shape: f32[2,4,96], index: 4, kind: input, shape index: {}]
  %s5 = inlined_call_operand.vmem [shape: f32[32,128], index: 5, kind: input, shape index: {}]
  %s6 = inlined_call_operand.vmem [shape: f32[1,128], index: 6, kind: input, shape index: {}]
  %s7 = inlined_call_operand.hbm [shape: f32[2,128], index: 7, kind: output, shape index: {}]
  %s8 = sld [smem:[#allocation0]]
  $region54: #{tpu_custom_call.1} parent=0
    _
  %s10 = ssub.s32 1, %s8
  %s11 = scalar_select 0, %s10, %s8
  $region1: #{tpu_custom_call.1} parent=0
    #allocation2 [shape = 'u8[8192]{0}', space=vmem, size = 0x2000, scoped, tag = 'input window, operand 0, single buffered']
    #allocation3 [shape = 's32[1]{0}', space=sflag, size = 0x4, scoped, tag = 'scoped memory for tpu_custom_call.1']
    #allocation4 [shape = 's32[1]{0}', space=sflag, size = 0x4, scoped, tag = 'scoped memory for tpu_custom_call.1']
    #allocation5 [shape = 'u8[8192]{0}', space=vmem, size = 0x2000, scoped, tag = 'input window, operand 1, single buffered']
    #allocation6 [shape = 's32[1]{0}', space=sflag, size = 0x4, scoped, tag = 'scoped memory for tpu_custom_call.1']
    #allocation7 [shape = 'u8[163840]{0}', space=vmem, size = 0x28000, scoped, tag = 'input window, operand 3, single buffered']
    #allocation8 [shape = 'u8[4096]{0}', space=vmem, size = 0x1000, scoped, tag = 'input window, operand 4, single buffered']
    #allocation9 [shape = 's32[1]{0}', space=sflag, size = 0x4, scoped, tag = 'scoped memory for tpu_custom_call.1']
    #allocation10 [shape = 'u8[1024]{0}', space=vmem, size = 0x400, scoped, tag = 'output window, operand 0, single buffered']
    %12 = vsyncpa [#allocation3], 0
    %13 = vsyncpa [#allocation6], 0
    %14 = vsyncpa [#allocation9], 0
    %15 = vsyncpa [#allocation4], 0
    // Predicated region
    $region2: #{tpu_custom_call.1} parent=1 // pred_check
      _
    $region3: #{tpu_custom_call.1} parent=1 // pred_check_branch
      %17 = sbr.rel (0) target = $region5
    $region4: #{tpu_custom_call.1} parent=1 // pred_region
      %s19 = ssub.s32 256, 256
      %20 = vsyncadd [#allocation3], %s19
      %s21 = sshll.u32 [#allocation2], 4
      %s22 = int_to_ptr.vmem [resolvable:$true] %s21
      %27 = dma.hbm_to_vmem [thread:$0]  %s0, 256, %s22, [#allocation3], 128, 128, 8
    $region5: #{tpu_custom_call.1} parent=1 // pred_fallthru
      _
    // Predicated region
    $region6: #{tpu_custom_call.1} parent=1 // pred_check
      _
    $region7: #{tpu_custom_call.1} parent=1 // pred_check_branch
      %29 = sbr.rel (0) target = $region9
    $region8: #{tpu_custom_call.1} parent=1 // pred_region
      %s31 = ssub.s32 256, 256
      %32 = vsyncadd [#allocation6], %s31
      %s33 = sshll.u32 [#allocation5], 4
      %s34 = int_to_ptr.vmem [resolvable:$true] %s33
      %39 = dma.hbm_to_vmem [thread:$0]  %s1, 256, %s34, [#allocation6], 128, 128, 8
    $region9: #{tpu_custom_call.1} parent=1 // pred_fallthru
      _
    // Predicated region
    $region10: #{tpu_custom_call.1} parent=1 // pred_check
      _
    $region11: #{tpu_custom_call.1} parent=1 // pred_check_branch
      %41 = sbr.rel (0) target = $region13
    $region12: #{tpu_custom_call.1} parent=1 // pred_region
      _
    $region13: #{tpu_custom_call.1} parent=1 // pred_fallthru
      _
    // Predicated region
    $region14: #{tpu_custom_call.1} parent=1 // pred_check
      _
    $region15: #{tpu_custom_call.1} parent=1 // pred_check_branch
      %43 = sbr.rel (0) target = $region17
    $region16: #{tpu_custom_call.1} parent=1 // pred_region
      %s45 = ssub.s32 5120, 5120
      %46 = vsyncadd [#allocation6], %s45
      %s47 = sshll.u32 [#allocation7], 4
      %s48 = int_to_ptr.vmem [resolvable:$true] %s47
      %53 = dma.hbm_to_vmem [thread:$0]  %s3, 5120, %s48, [#allocation6], 128, 128, 8
    $region17: #{tpu_custom_call.1} parent=1 // pred_fallthru
      _
    // Predicated region
    $region18: #{tpu_custom_call.1} parent=1 // pred_check
      _
    $region19: #{tpu_custom_call.1} parent=1 // pred_check_branch
      %55 = sbr.rel (0) target = $region21
    $region20: #{tpu_custom_call.1} parent=1 // pred_region
      %s57 = ssub.s32 128, 128
      %58 = vsyncadd [#allocation9], %s57
      %s59 = sshll.u32 [#allocation8], 4
      %s60 = int_to_ptr.vmem [resolvable:$true] %s59
      %65 = dma.hbm_to_vmem [thread:$0]  %s4, 128, %s60, [#allocation9], 64, 64, 4
    $region21: #{tpu_custom_call.1} parent=1 // pred_fallthru
      _
    // Predicated region
    $region22: #{tpu_custom_call.1} parent=1 // pred_check
      _
    $region23: #{tpu_custom_call.1} parent=1 // pred_check_branch
      %67 = sbr.rel (0) target = $region25
    $region24: #{tpu_custom_call.1} parent=1 // pred_region
      _
    $region25: #{tpu_custom_call.1} parent=1 // pred_fallthru
      _
    // Predicated region
    $region26: #{tpu_custom_call.1} parent=1 // pred_check
      _
    $region27: #{tpu_custom_call.1} parent=1 // pred_check_branch
      %69 = sbr.rel (0) target = $region29
    $region28: #{tpu_custom_call.1} parent=1 // pred_region
      _
    $region29: #{tpu_custom_call.1} parent=1 // pred_fallthru
      _
    // Predicated region
    $region30: #{tpu_custom_call.1} parent=1 // pred_check
      _
    $region31: #{tpu_custom_call.1} parent=1 // pred_check_branch
      %71 = sbr.rel (0) target = $region33
    $region32: #{tpu_custom_call.1} parent=1 // pred_region
      %72 = dma.done [#allocation3], 256
    $region33: #{tpu_custom_call.1} parent=1 // pred_fallthru
      _
    // Predicated region
    $region34: #{tpu_custom_call.1} parent=1 // pred_check
      _
    $region35: #{tpu_custom_call.1} parent=1 // pred_check_branch
      %74 = sbr.rel (0) target = $region37
    $region36: #{tpu_custom_call.1} parent=1 // pred_region
      %75 = dma.done [#allocation6], 256
    $region37: #{tpu_custom_call.1} parent=1 // pred_fallthru
      _
    // Predicated region
    $region38: #{tpu_custom_call.1} parent=1 // pred_check
      _
    $region39: #{tpu_custom_call.1} parent=1 // pred_check_branch
      %77 = sbr.rel (0) target = $region41
    $region40: #{tpu_custom_call.1} parent=1 // pred_region
      %78 = dma.done [#allocation6], 5120
    $region41: #{tpu_custom_call.1} parent=1 // pred_fallthru
      _
    // Predicated region
    $region42: #{tpu_custom_call.1} parent=1 // pred_check
      _
    $region43: #{tpu_custom_call.1} parent=1 // pred_check_branch
      %80 = sbr.rel (0) target = $region45
    $region44: #{tpu_custom_call.1} parent=1 // pred_region
      %81 = dma.done [#allocation9], 128
    $region45: #{tpu_custom_call.1} parent=1 // pred_fallthru
      _
    %v82 = vld [vmem:[#allocation2] sm:$0xff]
    %v83 = vld [vmem:[#allocation2 + $0x8] sm:$0xff]
    %v84 = vld [vmem:[#allocation5] sm:$0xff]
    %v85 = vld [vmem:[#allocation5 + $0x8] sm:$0xff]
    %v86 = vld [vmem:[#allocation7] sm:$0xff]
    %v87 = vld [vmem:[#allocation7 + $0x8] sm:$0xff]
    %v88 = vld [vmem:[#allocation7 + $0x10] sm:$0xff]
    %v89 = vld [vmem:[#allocation7 + $0x18] sm:$0xff]
    %v90 = vld [vmem:[#allocation7 + $0x20] sm:$0xff]
    %v91 = vld [vmem:[#allocation7 + $0x28] sm:$0xff]
    %v92 = vld [vmem:[#allocation7 + $0x30] sm:$0xff]
    %v93 = vld [vmem:[#allocation7 + $0x38] sm:$0xff]
    %v94 = vld [vmem:[#allocation7 + $0x40] sm:$0xff]
    %v95 = vld [vmem:[#allocation7 + $0x48] sm:$0xff]
    %v96 = vld [vmem:[#allocation7 + $0x50] sm:$0xff]
    %v97 = vld [vmem:[#allocation7 + $0x58] sm:$0xff]
    %v98 = vld [vmem:[#allocation7 + $0x60] sm:$0xff]
    %v99 = vld [vmem:[#allocation7 + $0x68] sm:$0xff]
    %v100 = vld [vmem:[#allocation7 + $0x70] sm:$0xff]
    %v101 = vld [vmem:[#allocation7 + $0x78] sm:$0xff]
    %v102 = vld [vmem:[#allocation7 + $0x80] sm:$0xff]
    %v103 = vld [vmem:[#allocation7 + $0x88] sm:$0xff]
    %v104 = vld [vmem:[#allocation7 + $0x90] sm:$0xff]
    %v105 = vld [vmem:[#allocation7 + $0x98] sm:$0xff]
    %v106 = vld [vmem:[#allocation8] sm:$0xf]
    %v107 = vlaneseq
    %v108 = vshrl.u32 %v107, 7
    %v109 = vsub.s32 0, %v108
    %v110 = vrot.slane %v106, %v109
    %vm111 = vcmask 261120
    %v113 = vsel %vm111, %v82, 0
    %v116 = vsel %vm111, %v83, 0
    %118 = vmatprep.subr.mxu0 0.0
    %119 = vmatpush1.msra.mxu0 %v86
    %120 = vmatprep.subr.mxu0 0.0
    %121 = vmatpush1.msra.mxu0 %v87
    %122 = vmatprep.subr.mxu0 0.0
    %123 = vmatpush1.msra.mxu0 %v88
    %124 = vmatprep.subr.mxu0 0.0
    %125 = vmatpush1.msra.mxu0 %v89
    %126 = vmatprep.subr.mxu0 0.0
    %127 = vmatpush1.msra.mxu0 0.0
    %128 = vmatprep.subr.mxu0 0.0
    %129 = vmatpush1.msra.mxu0 0.0
    %130 = vmatprep.subr.mxu0 0.0
    %131 = vmatpush1.msra.mxu0 0.0
    %132 = vmatprep.subr.mxu0 0.0
    %133 = vmatpush1.msra.mxu0 0.0
    %134 = vmatprep.subr.mxu0 0.0
    %135 = vmatpush1.msra.mxu0 0.0
    %136 = vmatprep.subr.mxu0 0.0
    %137 = vmatpush1.msra.mxu0 0.0
    %138 = vmatprep.subr.mxu0 0.0
    %139 = vmatpush1.msra.mxu0 0.0
    %140 = vmatprep.subr.mxu0 0.0
    %141 = vmatpush1.msra.mxu0 0.0
    %142 = vmatprep.subr.mxu0 0.0
    %143 = vmatpush1.msra.mxu0 0.0
    %144 = vmatprep.subr.mxu0 0.0
    %145 = vmatpush1.msra.mxu0 0.0
    %146 = vmatprep.subr.mxu0 0.0
    %147 = vmatpush1.msra.mxu0 0.0
    %148 = vmatprep.subr.mxu0 0.0
    %149 = vmatpush1.msra.mxu0 0.0
    %150 = vmatprep.subr.mxu0 0.0
    %151 = vmatpush1.msra.mxu0 0.0
    %152 = vmatprep.subr.mxu0 0.0
    %153 = vmatpush1.msra.mxu0 0.0
    %154 = vmatprep.subr.mxu0 0.0
    %155 = vmatpush1.msra.mxu0 0.0
    %156 = vmatprep.subr.mxu0 0.0
    %157 = vmatpush1.msra.mxu0 0.0
    %158 = vmatprep.subr.mxu0 0.0
    %159 = vmatpush1.msra.mxu0 0.0
    %160 = vmatprep.subr.mxu0 0.0
    %161 = vmatpush1.msra.mxu0 0.0
    %162 = vmatprep.subr.mxu0 0.0
    %163 = vmatpush1.msra.mxu0 0.0
    %164 = vmatprep.subr.mxu0 0.0
    %165 = vmatpush1.msra.mxu0 0.0
    %166 = vmatprep.subr.mxu0 0.0
    %167 = vmatpush1.msra.mxu0 0.0
    %168 = vmatprep.subr.mxu0 0.0
    %169 = vmatpush1.msra.mxu0 0.0
    %170 = vmatprep.subr.mxu0 0.0
    %171 = vmatpush1.msra.mxu0 0.0
    %172 = vmatprep.subr.mxu0 0.0
    %173 = vmatpush1.msra.mxu0 0.0
    %174 = vmatprep.subr.mxu0 0.0
    %175 = vmatpush1.msra.mxu0 0.0
    %176 = vmatprep.subr.mxu0 0.0
    %177 = vmatpush1.msra.mxu0 0.0
    %178 = vmatprep.subr.mxu0 0.0
    %179 = vmatpush1.msra.mxu0 0.0
    %180 = vmatprep.subr.mxu0 0.0
    %181 = vmatpush1.msra.mxu0 0.0
    %182 = vmatprep.mubr.f32.mxu0 0.0
    %183 = vmatmul.mubr.f32.gmra.mrb[0].mxu0 %v113
    %v184 = vpop.f32.mrb[0].mxu0
    %v185 = vadd.f32 %v110, %v184
    %v186 = vpop.f32.mrb[0].mxu0
    %187 = vmatprep.mubr.f32.mxu0 0.0
    %188 = vmatmul.mubr.f32.gmra.mrb[0].mxu0 %v116
    %v189 = vpop.f32.mrb[0].mxu0
    %v190 = vadd.f32 %v110, %v189
    %v191 = vpop.f32.mrb[0].mxu0
    %192 = vdwg.mxu0
    %195 = vrot.lane.b32.xlu0 %v185, 120
    %v196 = vpop.permute.xlu0 %195
    %197 = vrot.lane.b32.xlu0 %v190, 120
    %v198 = vpop.permute.xlu0 %197
    %199 = vrot.lane.b32.xlu0 %v185, 112
    %v200 = vpop.permute.xlu0 %199
    %201 = vrot.lane.b32.xlu0 %v190, 112
    %v202 = vpop.permute.xlu0 %201
    %203 = vrot.lane.b32.xlu0 %v185, 104
    %v204 = vpop.permute.xlu0 %203
    %205 = vrot.lane.b32.xlu0 %v190, 104
    %v206 = vpop.permute.xlu0 %205
    %207 = vrot.lane.b32.xlu0 %v185, 96
    %v208 = vpop.permute.xlu0 %207
    %209 = vrot.lane.b32.xlu0 %v190, 96
    %v210 = vpop.permute.xlu0 %209
    %vm211 = vcmask 64512
    %v212 = vsel %vm211, %v185, 0
    %v214 = vsel %vm211, %v190, 0
    %v216 = vsel %vm211, %v208, 0
    %v218 = vsel %vm211, %v210, 0
    %220 = vmatprep.subr.mxu0 0.0
    %221 = vmatpush1.xpose.msra.mxu0 %v216
    %222 = vmatprep.subr.mxu0 0.0
    %223 = vmatpush1.xpose.msra.mxu0 %v218
    %224 = vmatprep.subr.mxu0 0.0
    %225 = vmatpush1.xpose.msra.mxu0 0.0
    %226 = vmatprep.subr.mxu0 0.0
    %227 = vmatpush1.xpose.msra.mxu0 0.0
    %228 = vmatprep.subr.mxu0 0.0
    %229 = vmatpush1.xpose.msra.mxu0 0.0
    %230 = vmatprep.subr.mxu0 0.0
    %231 = vmatpush1.xpose.msra.mxu0 0.0
    %232 = vmatprep.subr.mxu0 0.0
    %233 = vmatpush1.xpose.msra.mxu0 0.0
    %234 = vmatprep.subr.mxu0 0.0
    %235 = vmatpush1.xpose.msra.mxu0 0.0
    %236 = vmatprep.subr.mxu0 0.0
    %237 = vmatpush1.xpose.msra.mxu0 0.0
    %238 = vmatprep.subr.mxu0 0.0
    %239 = vmatpush1.xpose.msra.mxu0 0.0
    %240 = vmatprep.subr.mxu0 0.0
    %241 = vmatpush1.xpose.msra.mxu0 0.0
    %242 = vmatprep.subr.mxu0 0.0
    %243 = vmatpush1.xpose.msra.mxu0 0.0
    %244 = vmatprep.subr.mxu0 0.0
    %245 = vmatpush1.xpose.msra.mxu0 0.0
    %246 = vmatprep.subr.mxu0 0.0
    %247 = vmatpush1.xpose.msra.mxu0 0.0
    %248 = vmatprep.subr.mxu0 0.0
    %249 = vmatpush1.xpose.msra.mxu0 0.0
    %250 = vmatprep.subr.mxu0 0.0
    %251 = vmatpush1.xpose.msra.mxu0 0.0
    %252 = vmatprep.subr.mxu0 0.0
    %253 = vmatpush1.xpose.msra.mxu0 0.0
    %254 = vmatprep.subr.mxu0 0.0
    %255 = vmatpush1.xpose.msra.mxu0 0.0
    %256 = vmatprep.subr.mxu0 0.0
    %257 = vmatpush1.xpose.msra.mxu0 0.0
    %258 = vmatprep.subr.mxu0 0.0
    %259 = vmatpush1.xpose.msra.mxu0 0.0
    %260 = vmatprep.subr.mxu0 0.0
    %261 = vmatpush1.xpose.msra.mxu0 0.0
    %262 = vmatprep.subr.mxu0 0.0
    %263 = vmatpush1.xpose.msra.mxu0 0.0
    %264 = vmatprep.subr.mxu0 0.0
    %265 = vmatpush1.xpose.msra.mxu0 0.0
    %266 = vmatprep.subr.mxu0 0.0
    %267 = vmatpush1.xpose.msra.mxu0 0.0
    %268 = vmatprep.subr.mxu0 0.0
    %269 = vmatpush1.xpose.msra.mxu0 0.0
    %270 = vmatprep.subr.mxu0 0.0
    %271 = vmatpush1.xpose.msra.mxu0 0.0
    %272 = vmatprep.subr.mxu0 0.0
    %273 = vmatpush1.xpose.msra.mxu0 0.0
    %274 = vmatprep.subr.mxu0 0.0
    %275 = vmatpush1.xpose.msra.mxu0 0.0
    %276 = vmatprep.subr.mxu0 0.0
    %277 = vmatpush1.xpose.msra.mxu0 0.0
    %278 = vmatprep.subr.mxu0 0.0
    %279 = vmatpush1.xpose.msra.mxu0 0.0
    %280 = vmatprep.subr.mxu0 0.0
    %281 = vmatpush1.xpose.msra.mxu0 0.0
    %282 = vmatprep.subr.mxu0 0.0
    %283 = vmatpush1.xpose.msra.mxu0 0.0
    %284 = vmatprep.mubr.f32.mxu0 0.0
    %285 = vmatmul.mubr.f32.gmra.mrb[0].mxu0 %v212
    %v286 = vpop.f32.mrb[0].mxu0
    %v287 = vadd.f32 0.0, %v286
    %v288 = vpop.f32.mrb[0].mxu0
    %289 = vmatprep.mubr.f32.mxu0 0.0
    %290 = vmatmul.mubr.f32.gmra.mrb[0].mxu0 %v214
    %v291 = vpop.f32.mrb[0].mxu0
    %v292 = vadd.f32 0.0, %v291
    %v293 = vpop.f32.mrb[0].mxu0
    %294 = vdwg.mxu0
    %295 = vrot.lane.b32.xlu0 %v196, 96
    %v296 = vpop.permute.xlu0 %295
    %297 = vrot.lane.b32.xlu0 %v198, 96
    %v298 = vpop.permute.xlu0 %297
    %v299 = vsel %vm211, %v196, 0
    %v301 = vsel %vm211, %v198, 0
    %v303 = vsel %vm211, %v296, 0
    %v305 = vsel %vm211, %v298, 0
    %307 = vmatprep.subr.mxu0 0.0
    %308 = vmatpush1.xpose.msra.mxu0 %v303
    %309 = vmatprep.subr.mxu0 0.0
    %310 = vmatpush1.xpose.msra.mxu0 %v305
    %311 = vmatprep.subr.mxu0 0.0
    %312 = vmatpush1.xpose.msra.mxu0 0.0
    %313 = vmatprep.subr.mxu0 0.0
    %314 = vmatpush1.xpose.msra.mxu0 0.0
    %315 = vmatprep.subr.mxu0 0.0
    %316 = vmatpush1.xpose.msra.mxu0 0.0
    %317 = vmatprep.subr.mxu0 0.0
    %318 = vmatpush1.xpose.msra.mxu0 0.0
    %319 = vmatprep.subr.mxu0 0.0
    %320 = vmatpush1.xpose.msra.mxu0 0.0
    %321 = vmatprep.subr.mxu0 0.0
    %322 = vmatpush1.xpose.msra.mxu0 0.0
    %323 = vmatprep.subr.mxu0 0.0
    %324 = vmatpush1.xpose.msra.mxu0 0.0
    %325 = vmatprep.subr.mxu0 0.0
    %326 = vmatpush1.xpose.msra.mxu0 0.0
    %327 = vmatprep.subr.mxu0 0.0
    %328 = vmatpush1.xpose.msra.mxu0 0.0
    %329 = vmatprep.subr.mxu0 0.0
    %330 = vmatpush1.xpose.msra.mxu0 0.0
    %331 = vmatprep.subr.mxu0 0.0
    %332 = vmatpush1.xpose.msra.mxu0 0.0
    %333 = vmatprep.subr.mxu0 0.0
    %334 = vmatpush1.xpose.msra.mxu0 0.0
    %335 = vmatprep.subr.mxu0 0.0
    %336 = vmatpush1.xpose.msra.mxu0 0.0
    %337 = vmatprep.subr.mxu0 0.0
    %338 = vmatpush1.xpose.msra.mxu0 0.0
    %339 = vmatprep.subr.mxu0 0.0
    %340 = vmatpush1.xpose.msra.mxu0 0.0
    %341 = vmatprep.subr.mxu0 0.0
    %342 = vmatpush1.xpose.msra.mxu0 0.0
    %343 = vmatprep.subr.mxu0 0.0
    %344 = vmatpush1.xpose.msra.mxu0 0.0
    %345 = vmatprep.subr.mxu0 0.0
    %346 = vmatpush1.xpose.msra.mxu0 0.0
    %347 = vmatprep.subr.mxu0 0.0
    %348 = vmatpush1.xpose.msra.mxu0 0.0
    %349 = vmatprep.subr.mxu0 0.0
    %350 = vmatpush1.xpose.msra.mxu0 0.0
    %351 = vmatprep.subr.mxu0 0.0
    %352 = vmatpush1.xpose.msra.mxu0 0.0
    %353 = vmatprep.subr.mxu0 0.0
    %354 = vmatpush1.xpose.msra.mxu0 0.0
    %355 = vmatprep.subr.mxu0 0.0
    %356 = vmatpush1.xpose.msra.mxu0 0.0
    %357 = vmatprep.subr.mxu0 0.0
    %358 = vmatpush1.xpose.msra.mxu0 0.0
    %359 = vmatprep.subr.mxu0 0.0
    %360 = vmatpush1.xpose.msra.mxu0 0.0
    %361 = vmatprep.subr.mxu0 0.0
    %362 = vmatpush1.xpose.msra.mxu0 0.0
    %363 = vmatprep.subr.mxu0 0.0
    %364 = vmatpush1.xpose.msra.mxu0 0.0
    %365 = vmatprep.subr.mxu0 0.0
    %366 = vmatpush1.xpose.msra.mxu0 0.0
    %367 = vmatprep.subr.mxu0 0.0
    %368 = vmatpush1.xpose.msra.mxu0 0.0
    %369 = vmatprep.subr.mxu0 0.0
    %370 = vmatpush1.xpose.msra.mxu0 0.0
    %371 = vmatprep.mubr.f32.mxu0 0.0
    %372 = vmatmul.mubr.f32.gmra.mrb[0].mxu0 %v299
    %v373 = vpop.f32.mrb[0].mxu0
    %v374 = vadd.f32 0.0, %v373
    %v375 = vpop.f32.mrb[0].mxu0
    %376 = vmatprep.mubr.f32.mxu0 0.0
    %377 = vmatmul.mubr.f32.gmra.mrb[0].mxu0 %v301
    %v378 = vpop.f32.mrb[0].mxu0
    %v379 = vadd.f32 0.0, %v378
    %v380 = vpop.f32.mrb[0].mxu0
    %381 = vdwg.mxu0
    %382 = vrot.lane.b32.xlu0 %v200, 96
    %v383 = vpop.permute.xlu0 %382
    %384 = vrot.lane.b32.xlu0 %v202, 96
    %v385 = vpop.permute.xlu0 %384
    %v386 = vsel %vm211, %v200, 0
    %v388 = vsel %vm211, %v202, 0
    %v390 = vsel %vm211, %v383, 0
    %v392 = vsel %vm211, %v385, 0
    %394 = vmatprep.subr.mxu0 0.0
    %395 = vmatpush1.xpose.msra.mxu0 %v390
    %396 = vmatprep.subr.mxu0 0.0
    %397 = vmatpush1.xpose.msra.mxu0 %v392
    %398 = vmatprep.subr.mxu0 0.0
    %399 = vmatpush1.xpose.msra.mxu0 0.0
    %400 = vmatprep.subr.mxu0 0.0
    %401 = vmatpush1.xpose.msra.mxu0 0.0
    %402 = vmatprep.subr.mxu0 0.0
    %403 = vmatpush1.xpose.msra.mxu0 0.0
    %404 = vmatprep.subr.mxu0 0.0
    %405 = vmatpush1.xpose.msra.mxu0 0.0
    %406 = vmatprep.subr.mxu0 0.0
    %407 = vmatpush1.xpose.msra.mxu0 0.0
    %408 = vmatprep.subr.mxu0 0.0
    %409 = vmatpush1.xpose.msra.mxu0 0.0
    %410 = vmatprep.subr.mxu0 0.0
    %411 = vmatpush1.xpose.msra.mxu0 0.0
    %412 = vmatprep.subr.mxu0 0.0
    %413 = vmatpush1.xpose.msra.mxu0 0.0
    %414 = vmatprep.subr.mxu0 0.0
    %415 = vmatpush1.xpose.msra.mxu0 0.0
    %416 = vmatprep.subr.mxu0 0.0
    %417 = vmatpush1.xpose.msra.mxu0 0.0
    %418 = vmatprep.subr.mxu0 0.0
    %419 = vmatpush1.xpose.msra.mxu0 0.0
    %420 = vmatprep.subr.mxu0 0.0
    %421 = vmatpush1.xpose.msra.mxu0 0.0
    %422 = vmatprep.subr.mxu0 0.0
    %423 = vmatpush1.xpose.msra.mxu0 0.0
    %424 = vmatprep.subr.mxu0 0.0
    %425 = vmatpush1.xpose.msra.mxu0 0.0
    %426 = vmatprep.subr.mxu0 0.0
    %427 = vmatpush1.xpose.msra.mxu0 0.0
    %428 = vmatprep.subr.mxu0 0.0
    %429 = vmatpush1.xpose.msra.mxu0 0.0
    %430 = vmatprep.subr.mxu0 0.0
    %431 = vmatpush1.xpose.msra.mxu0 0.0
    %432 = vmatprep.subr.mxu0 0.0
    %433 = vmatpush1.xpose.msra.mxu0 0.0
    %434 = vmatprep.subr.mxu0 0.0
    %435 = vmatpush1.xpose.msra.mxu0 0.0
    %436 = vmatprep.subr.mxu0 0.0
    %437 = vmatpush1.xpose.msra.mxu0 0.0
    %438 = vmatprep.subr.mxu0 0.0
    %439 = vmatpush1.xpose.msra.mxu0 0.0
    %440 = vmatprep.subr.mxu0 0.0
    %441 = vmatpush1.xpose.msra.mxu0 0.0
    %442 = vmatprep.subr.mxu0 0.0
    %443 = vmatpush1.xpose.msra.mxu0 0.0
    %444 = vmatprep.subr.mxu0 0.0
    %445 = vmatpush1.xpose.msra.mxu0 0.0
    %446 = vmatprep.subr.mxu0 0.0
    %447 = vmatpush1.xpose.msra.mxu0 0.0
    %448 = vmatprep.subr.mxu0 0.0
    %449 = vmatpush1.xpose.msra.mxu0 0.0
    %450 = vmatprep.subr.mxu0 0.0
    %451 = vmatpush1.xpose.msra.mxu0 0.0
    %452 = vmatprep.subr.mxu0 0.0
    %453 = vmatpush1.xpose.msra.mxu0 0.0
    %454 = vmatprep.subr.mxu0 0.0
    %455 = vmatpush1.xpose.msra.mxu0 0.0
    %456 = vmatprep.subr.mxu0 0.0
    %457 = vmatpush1.xpose.msra.mxu0 0.0
    %458 = vmatprep.mubr.f32.mxu0 0.0
    %459 = vmatmul.mubr.f32.gmra.mrb[0].mxu0 %v386
    %v460 = vpop.f32.mrb[0].mxu0
    %v461 = vadd.f32 0.0, %v460
    %v462 = vpop.f32.mrb[0].mxu0
    %463 = vmatprep.mubr.f32.mxu0 0.0
    %464 = vmatmul.mubr.f32.gmra.mrb[0].mxu0 %v388
    %v465 = vpop.f32.mrb[0].mxu0
    %v466 = vadd.f32 0.0, %v465
    %v467 = vpop.f32.mrb[0].mxu0
    %468 = vdwg.mxu0
    %469 = vrot.lane.b32.xlu0 %v204, 96
    %v470 = vpop.permute.xlu0 %469
    %471 = vrot.lane.b32.xlu0 %v206, 96
    %v472 = vpop.permute.xlu0 %471
    %v473 = vsel %vm211, %v204, 0
    %v475 = vsel %vm211, %v206, 0
    %v477 = vsel %vm211, %v470, 0
    %v479 = vsel %vm211, %v472, 0
    %481 = vmatprep.subr.mxu0 0.0
    %482 = vmatpush1.xpose.msra.mxu0 %v477
    %483 = vmatprep.subr.mxu0 0.0
    %484 = vmatpush1.xpose.msra.mxu0 %v479
    %485 = vmatprep.subr.mxu0 0.0
    %486 = vmatpush1.xpose.msra.mxu0 0.0
    %487 = vmatprep.subr.mxu0 0.0
    %488 = vmatpush1.xpose.msra.mxu0 0.0
    %489 = vmatprep.subr.mxu0 0.0
    %490 = vmatpush1.xpose.msra.mxu0 0.0
    %491 = vmatprep.subr.mxu0 0.0
    %492 = vmatpush1.xpose.msra.mxu0 0.0
    %493 = vmatprep.subr.mxu0 0.0
    %494 = vmatpush1.xpose.msra.mxu0 0.0
    %495 = vmatprep.subr.mxu0 0.0
    %496 = vmatpush1.xpose.msra.mxu0 0.0
    %497 = vmatprep.subr.mxu0 0.0
    %498 = vmatpush1.xpose.msra.mxu0 0.0
    %499 = vmatprep.subr.mxu0 0.0
    %500 = vmatpush1.xpose.msra.mxu0 0.0
    %501 = vmatprep.subr.mxu0 0.0
    %502 = vmatpush1.xpose.msra.mxu0 0.0
    %503 = vmatprep.subr.mxu0 0.0
    %504 = vmatpush1.xpose.msra.mxu0 0.0
    %505 = vmatprep.subr.mxu0 0.0
    %506 = vmatpush1.xpose.msra.mxu0 0.0
    %507 = vmatprep.subr.mxu0 0.0
    %508 = vmatpush1.xpose.msra.mxu0 0.0
    %509 = vmatprep.subr.mxu0 0.0
    %510 = vmatpush1.xpose.msra.mxu0 0.0
    %511 = vmatprep.subr.mxu0 0.0
    %512 = vmatpush1.xpose.msra.mxu0 0.0
    %513 = vmatprep.subr.mxu0 0.0
    %514 = vmatpush1.xpose.msra.mxu0 0.0
    %515 = vmatprep.subr.mxu0 0.0
    %516 = vmatpush1.xpose.msra.mxu0 0.0
    %517 = vmatprep.subr.mxu0 0.0
    %518 = vmatpush1.xpose.msra.mxu0 0.0
    %519 = vmatprep.subr.mxu0 0.0
    %520 = vmatpush1.xpose.msra.mxu0 0.0
    %521 = vmatprep.subr.mxu0 0.0
    %522 = vmatpush1.xpose.msra.mxu0 0.0
    %523 = vmatprep.subr.mxu0 0.0
    %524 = vmatpush1.xpose.msra.mxu0 0.0
    %525 = vmatprep.subr.mxu0 0.0
    %526 = vmatpush1.xpose.msra.mxu0 0.0
    %527 = vmatprep.subr.mxu0 0.0
    %528 = vmatpush1.xpose.msra.mxu0 0.0
    %529 = vmatprep.subr.mxu0 0.0
    %530 = vmatpush1.xpose.msra.mxu0 0.0
    %531 = vmatprep.subr.mxu0 0.0
    %532 = vmatpush1.xpose.msra.mxu0 0.0
    %533 = vmatprep.subr.mxu0 0.0
    %534 = vmatpush1.xpose.msra.mxu0 0.0
    %535 = vmatprep.subr.mxu0 0.0
    %536 = vmatpush1.xpose.msra.mxu0 0.0
    %537 = vmatprep.subr.mxu0 0.0
    %538 = vmatpush1.xpose.msra.mxu0 0.0
    %539 = vmatprep.subr.mxu0 0.0
    %540 = vmatpush1.xpose.msra.mxu0 0.0
    %541 = vmatprep.subr.mxu0 0.0
    %542 = vmatpush1.xpose.msra.mxu0 0.0
    %543 = vmatprep.subr.mxu0 0.0
    %544 = vmatpush1.xpose.msra.mxu0 0.0
    %545 = vmatprep.mubr.f32.mxu0 0.0
    %546 = vmatmul.mubr.f32.gmra.mrb[0].mxu0 %v473
    %v547 = vpop.f32.mrb[0].mxu0
    %v548 = vadd.f32 0.0, %v547
    %v549 = vpop.f32.mrb[0].mxu0
    %550 = vmatprep.mubr.f32.mxu0 0.0
    %551 = vmatmul.mubr.f32.gmra.mrb[0].mxu0 %v475
    %v552 = vpop.f32.mrb[0].mxu0
    %v553 = vadd.f32 0.0, %v552
    %v554 = vpop.f32.mrb[0].mxu0
    %555 = vdwg.mxu0
    %v556 = vmul.f32 %v287, 0.35355338
    %v557 = vmul.f32 %v292, 0.35355338
    %v558 = vmul.f32 %v374, 0.35355338
    %v559 = vmul.f32 %v379, 0.35355338
    %v560 = vmul.f32 %v461, 0.35355338
    %v561 = vmul.f32 %v466, 0.35355338
    %v562 = vmul.f32 %v548, 0.35355338
    %v563 = vmul.f32 %v553, 0.35355338
    %v564 = vadd.f32 %v556, %v84
    %v565 = vadd.f32 %v557, %v85
    %v566 = vadd.f32 %v558, %v84
    %v567 = vadd.f32 %v559, %v85
    %v568 = vadd.f32 %v560, %v84
    %v569 = vadd.f32 %v561, %v85
    %v570 = vadd.f32 %v562, %v84
    %v571 = vadd.f32 %v563, %v85
    %vm572 = vcmask 130048
    %v573 = vsel %vm572, %v564, -inf
    %574 = vmax.xlane.f32.xlu0 %v573
    %v575 = vpop.xlane.xlu0 %574
    %v576 = vsel %vm572, %v565, -inf
    %577 = vmax.xlane.f32.xlu0 %v576
    %v578 = vpop.xlane.xlu0 %577
    %v579 = vsel %vm572, %v566, -inf
    %580 = vmax.xlane.f32.xlu0 %v579
    %v581 = vpop.xlane.xlu0 %580
    %v582 = vsel %vm572, %v567, -inf
    %583 = vmax.xlane.f32.xlu0 %v582
    %v584 = vpop.xlane.xlu0 %583
    %v585 = vsel %vm572, %v568, -inf
    %586 = vmax.xlane.f32.xlu0 %v585
    %v587 = vpop.xlane.xlu0 %586
    %v588 = vsel %vm572, %v569, -inf
    %589 = vmax.xlane.f32.xlu0 %v588
    %v590 = vpop.xlane.xlu0 %589
    %v591 = vsel %vm572, %v570, -inf
    %592 = vmax.xlane.f32.xlu0 %v591
    %v593 = vpop.xlane.xlu0 %592
    %v594 = vsel %vm572, %v571, -inf
    %595 = vmax.xlane.f32.xlu0 %v594
    %v596 = vpop.xlane.xlu0 %595
    %v597 = vsub.f32 %v564, %v575
    %v598 = vsub.f32 %v565, %v578
    %v599 = vsub.f32 %v566, %v581
    %v600 = vsub.f32 %v567, %v584
    %v601 = vsub.f32 %v568, %v587
    %v602 = vsub.f32 %v569, %v590
    %v603 = vsub.f32 %v570, %v593
    %v604 = vsub.f32 %v571, %v596
    %v605 = vmul.f32 %v597, 1.442695
    %v606 = vpow.pop %v605
    %v607 = vmul.f32 %v598, 1.442695
    %v608 = vpow.pop %v607
    %v609 = vmul.f32 %v599, 1.442695
    %v610 = vpow.pop %v609
    %v611 = vmul.f32 %v600, 1.442695
    %v612 = vpow.pop %v611
    %v613 = vmul.f32 %v601, 1.442695
    %v614 = vpow.pop %v613
    %v615 = vmul.f32 %v602, 1.442695
    %v616 = vpow.pop %v615
    %v617 = vmul.f32 %v603, 1.442695
    %v618 = vpow.pop %v617
    %v619 = vmul.f32 %v604, 1.442695
    %v620 = vpow.pop %v619
    %v621 = vsel %vm572, %v606, 0.0
    %622 = vadd.xlane.f32.xlu0 %v621
    %v623 = vpop.xlane.xlu0 %622
    %v624 = vsel %vm572, %v608, 0.0
    %625 = vadd.xlane.f32.xlu0 %v624
    %v626 = vpop.xlane.xlu0 %625
    %v627 = vsel %vm572, %v610, 0.0
    %628 = vadd.xlane.f32.xlu0 %v627
    %v629 = vpop.xlane.xlu0 %628
    %v630 = vsel %vm572, %v612, 0.0
    %631 = vadd.xlane.f32.xlu0 %v630
    %v632 = vpop.xlane.xlu0 %631
    %v633 = vsel %vm572, %v614, 0.0
    %634 = vadd.xlane.f32.xlu0 %v633
    %v635 = vpop.xlane.xlu0 %634
    %v636 = vsel %vm572, %v616, 0.0
    %637 = vadd.xlane.f32.xlu0 %v636
    %v638 = vpop.xlane.xlu0 %637
    %v639 = vsel %vm572, %v618, 0.0
    %640 = vadd.xlane.f32.xlu0 %v639
    %v641 = vpop.xlane.xlu0 %640
    %v642 = vsel %vm572, %v620, 0.0
    %643 = vadd.xlane.f32.xlu0 %v642
    %v644 = vpop.xlane.xlu0 %643
    %v645 = vrcp.pop %v623
    %v646 = vmul.f32 %v606, %v645
    %v647 = vrcp.pop %v626
    %v648 = vmul.f32 %v608, %v647
    %v649 = vrcp.pop %v629
    %v650 = vmul.f32 %v610, %v649
    %v651 = vrcp.pop %v632
    %v652 = vmul.f32 %v612, %v651
    %v653 = vrcp.pop %v635
    %v654 = vmul.f32 %v614, %v653
    %v655 = vrcp.pop %v638
    %v656 = vmul.f32 %v616, %v655
    %v657 = vrcp.pop %v641
    %v658 = vmul.f32 %v618, %v657
    %v659 = vrcp.pop %v644
    %v660 = vmul.f32 %v620, %v659
    %661 = vrot.lane.b32.xlu0 %v185, 64
    %v662 = vpop.permute.xlu0 %661
    %663 = vrot.lane.b32.xlu0 %v190, 64
    %v664 = vpop.permute.xlu0 %663
    %v668 = vsel %vm572, %v646, 0
    %v671 = vsel %vm572, %v648, 0
    %673 = vmatprep.subr.mxu0 0.0
    %674 = vmatpush1.msra.mxu0 %v662
    %675 = vmatprep.subr.mxu0 0.0
    %676 = vmatpush1.msra.mxu0 %v664
    %677 = vmatprep.subr.mxu0 0.0
    %678 = vmatpush1.msra.mxu0 0.0
    %679 = vmatprep.subr.mxu0 0.0
    %680 = vmatpush1.msra.mxu0 0.0
    %681 = vmatprep.subr.mxu0 0.0
    %682 = vmatpush1.msra.mxu0 0.0
    %683 = vmatprep.subr.mxu0 0.0
    %684 = vmatpush1.msra.mxu0 0.0
    %685 = vmatprep.subr.mxu0 0.0
    %686 = vmatpush1.msra.mxu0 0.0
    %687 = vmatprep.subr.mxu0 0.0
    %688 = vmatpush1.msra.mxu0 0.0
    %689 = vmatprep.subr.mxu0 0.0
    %690 = vmatpush1.msra.mxu0 0.0
    %691 = vmatprep.subr.mxu0 0.0
    %692 = vmatpush1.msra.mxu0 0.0
    %693 = vmatprep.subr.mxu0 0.0
    %694 = vmatpush1.msra.mxu0 0.0
    %695 = vmatprep.subr.mxu0 0.0
    %696 = vmatpush1.msra.mxu0 0.0
    %697 = vmatprep.subr.mxu0 0.0
    %698 = vmatpush1.msra.mxu0 0.0
    %699 = vmatprep.subr.mxu0 0.0
    %700 = vmatpush1.msra.mxu0 0.0
    %701 = vmatprep.subr.mxu0 0.0
    %702 = vmatpush1.msra.mxu0 0.0
    %703 = vmatprep.subr.mxu0 0.0
    %704 = vmatpush1.msra.mxu0 0.0
    %705 = vmatprep.subr.mxu0 0.0
    %706 = vmatpush1.msra.mxu0 0.0
    %707 = vmatprep.subr.mxu0 0.0
    %708 = vmatpush1.msra.mxu0 0.0
    %709 = vmatprep.subr.mxu0 0.0
    %710 = vmatpush1.msra.mxu0 0.0
    %711 = vmatprep.subr.mxu0 0.0
    %712 = vmatpush1.msra.mxu0 0.0
    %713 = vmatprep.subr.mxu0 0.0
    %714 = vmatpush1.msra.mxu0 0.0
    %715 = vmatprep.subr.mxu0 0.0
    %716 = vmatpush1.msra.mxu0 0.0
    %717 = vmatprep.subr.mxu0 0.0
    %718 = vmatpush1.msra.mxu0 0.0
    %719 = vmatprep.subr.mxu0 0.0
    %720 = vmatpush1.msra.mxu0 0.0
    %721 = vmatprep.subr.mxu0 0.0
    %722 = vmatpush1.msra.mxu0 0.0
    %723 = vmatprep.subr.mxu0 0.0
    %724 = vmatpush1.msra.mxu0 0.0
    %725 = vmatprep.subr.mxu0 0.0
    %726 = vmatpush1.msra.mxu0 0.0
    %727 = vmatprep.subr.mxu0 0.0
    %728 = vmatpush1.msra.mxu0 0.0
    %729 = vmatprep.subr.mxu0 0.0
    %730 = vmatpush1.msra.mxu0 0.0
    %731 = vmatprep.subr.mxu0 0.0
    %732 = vmatpush1.msra.mxu0 0.0
    %733 = vmatprep.subr.mxu0 0.0
    %734 = vmatpush1.msra.mxu0 0.0
    %735 = vmatprep.subr.mxu0 0.0
    %736 = vmatpush1.msra.mxu0 0.0
    %737 = vmatprep.mubr.f32.mxu0 0.0
    %738 = vmatmul.mubr.f32.gmra.mrb[0].mxu0 %v668
    %v739 = vpop.f32.mrb[0].mxu0
    %v740 = vadd.f32 0.0, %v739
    %v741 = vpop.f32.mrb[0].mxu0
    %742 = vmatprep.mubr.f32.mxu0 0.0
    %743 = vmatmul.mubr.f32.gmra.mrb[0].mxu0 %v671
    %v744 = vpop.f32.mrb[0].mxu0
    %v745 = vadd.f32 0.0, %v744
    %v746 = vpop.f32.mrb[0].mxu0
    %747 = vdwg.mxu0
    %748 = vrot.lane.b32.xlu0 %v196, 64
    %v749 = vpop.permute.xlu0 %748
    %750 = vrot.lane.b32.xlu0 %v198, 64
    %v751 = vpop.permute.xlu0 %750
    %v755 = vsel %vm572, %v650, 0
    %v758 = vsel %vm572, %v652, 0
    %760 = vmatprep.subr.mxu0 0.0
    %761 = vmatpush1.msra.mxu0 %v749
    %762 = vmatprep.subr.mxu0 0.0
    %763 = vmatpush1.msra.mxu0 %v751
    %764 = vmatprep.subr.mxu0 0.0
    %765 = vmatpush1.msra.mxu0 0.0
    %766 = vmatprep.subr.mxu0 0.0
    %767 = vmatpush1.msra.mxu0 0.0
    %768 = vmatprep.subr.mxu0 0.0
    %769 = vmatpush1.msra.mxu0 0.0
    %770 = vmatprep.subr.mxu0 0.0
    %771 = vmatpush1.msra.mxu0 0.0
    %772 = vmatprep.subr.mxu0 0.0
    %773 = vmatpush1.msra.mxu0 0.0
    %774 = vmatprep.subr.mxu0 0.0
    %775 = vmatpush1.msra.mxu0 0.0
    %776 = vmatprep.subr.mxu0 0.0
    %777 = vmatpush1.msra.mxu0 0.0
    %778 = vmatprep.subr.mxu0 0.0
    %779 = vmatpush1.msra.mxu0 0.0
    %780 = vmatprep.subr.mxu0 0.0
    %781 = vmatpush1.msra.mxu0 0.0
    %782 = vmatprep.subr.mxu0 0.0
    %783 = vmatpush1.msra.mxu0 0.0
    %784 = vmatprep.subr.mxu0 0.0
    %785 = vmatpush1.msra.mxu0 0.0
    %786 = vmatprep.subr.mxu0 0.0
    %787 = vmatpush1.msra.mxu0 0.0
    %788 = vmatprep.subr.mxu0 0.0
    %789 = vmatpush1.msra.mxu0 0.0
    %790 = vmatprep.subr.mxu0 0.0
    %791 = vmatpush1.msra.mxu0 0.0
    %792 = vmatprep.subr.mxu0 0.0
    %793 = vmatpush1.msra.mxu0 0.0
    %794 = vmatprep.subr.mxu0 0.0
    %795 = vmatpush1.msra.mxu0 0.0
    %796 = vmatprep.subr.mxu0 0.0
    %797 = vmatpush1.msra.mxu0 0.0
    %798 = vmatprep.subr.mxu0 0.0
    %799 = vmatpush1.msra.mxu0 0.0
    %800 = vmatprep.subr.mxu0 0.0
    %801 = vmatpush1.msra.mxu0 0.0
    %802 = vmatprep.subr.mxu0 0.0
    %803 = vmatpush1.msra.mxu0 0.0
    %804 = vmatprep.subr.mxu0 0.0
    %805 = vmatpush1.msra.mxu0 0.0
    %806 = vmatprep.subr.mxu0 0.0
    %807 = vmatpush1.msra.mxu0 0.0
    %808 = vmatprep.subr.mxu0 0.0
    %809 = vmatpush1.msra.mxu0 0.0
    %810 = vmatprep.subr.mxu0 0.0
    %811 = vmatpush1.msra.mxu0 0.0
    %812 = vmatprep.subr.mxu0 0.0
    %813 = vmatpush1.msra.mxu0 0.0
    %814 = vmatprep.subr.mxu0 0.0
    %815 = vmatpush1.msra.mxu0 0.0
    %816 = vmatprep.subr.mxu0 0.0
    %817 = vmatpush1.msra.mxu0 0.0
    %818 = vmatprep.subr.mxu0 0.0
    %819 = vmatpush1.msra.mxu0 0.0
    %820 = vmatprep.subr.mxu0 0.0
    %821 = vmatpush1.msra.mxu0 0.0
    %822 = vmatprep.subr.mxu0 0.0
    %823 = vmatpush1.msra.mxu0 0.0
    %824 = vmatprep.mubr.f32.mxu0 0.0
    %825 = vmatmul.mubr.f32.gmra.mrb[0].mxu0 %v755
    %v826 = vpop.f32.mrb[0].mxu0
    %v827 = vadd.f32 0.0, %v826
    %v828 = vpop.f32.mrb[0].mxu0
    %829 = vmatprep.mubr.f32.mxu0 0.0
    %830 = vmatmul.mubr.f32.gmra.mrb[0].mxu0 %v758
    %v831 = vpop.f32.mrb[0].mxu0
    %v832 = vadd.f32 0.0, %v831
    %v833 = vpop.f32.mrb[0].mxu0
    %834 = vdwg.mxu0
    %835 = vrot.lane.b32.xlu0 %v200, 64
    %v836 = vpop.permute.xlu0 %835
    %837 = vrot.lane.b32.xlu0 %v202, 64
    %v838 = vpop.permute.xlu0 %837
    %v842 = vsel %vm572, %v654, 0
    %v845 = vsel %vm572, %v656, 0
    %847 = vmatprep.subr.mxu0 0.0
    %848 = vmatpush1.msra.mxu0 %v836
    %849 = vmatprep.subr.mxu0 0.0
    %850 = vmatpush1.msra.mxu0 %v838
    %851 = vmatprep.subr.mxu0 0.0
    %852 = vmatpush1.msra.mxu0 0.0
    %853 = vmatprep.subr.mxu0 0.0
    %854 = vmatpush1.msra.mxu0 0.0
    %855 = vmatprep.subr.mxu0 0.0
    %856 = vmatpush1.msra.mxu0 0.0
    %857 = vmatprep.subr.mxu0 0.0
    %858 = vmatpush1.msra.mxu0 0.0
    %859 = vmatprep.subr.mxu0 0.0
    %860 = vmatpush1.msra.mxu0 0.0
    %861 = vmatprep.subr.mxu0 0.0
    %862 = vmatpush1.msra.mxu0 0.0
    %863 = vmatprep.subr.mxu0 0.0
    %864 = vmatpush1.msra.mxu0 0.0
    %865 = vmatprep.subr.mxu0 0.0
    %866 = vmatpush1.msra.mxu0 0.0
    %867 = vmatprep.subr.mxu0 0.0
    %868 = vmatpush1.msra.mxu0 0.0
    %869 = vmatprep.subr.mxu0 0.0
    %870 = vmatpush1.msra.mxu0 0.0
    %871 = vmatprep.subr.mxu0 0.0
    %872 = vmatpush1.msra.mxu0 0.0
    %873 = vmatprep.subr.mxu0 0.0
    %874 = vmatpush1.msra.mxu0 0.0
    %875 = vmatprep.subr.mxu0 0.0
    %876 = vmatpush1.msra.mxu0 0.0
    %877 = vmatprep.subr.mxu0 0.0
    %878 = vmatpush1.msra.mxu0 0.0
    %879 = vmatprep.subr.mxu0 0.0
    %880 = vmatpush1.msra.mxu0 0.0
    %881 = vmatprep.subr.mxu0 0.0
    %882 = vmatpush1.msra.mxu0 0.0
    %883 = vmatprep.subr.mxu0 0.0
    %884 = vmatpush1.msra.mxu0 0.0
    %885 = vmatprep.subr.mxu0 0.0
    %886 = vmatpush1.msra.mxu0 0.0
    %887 = vmatprep.subr.mxu0 0.0
    %888 = vmatpush1.msra.mxu0 0.0
    %889 = vmatprep.subr.mxu0 0.0
    %890 = vmatpush1.msra.mxu0 0.0
    %891 = vmatprep.subr.mxu0 0.0
    %892 = vmatpush1.msra.mxu0 0.0
    %893 = vmatprep.subr.mxu0 0.0
    %894 = vmatpush1.msra.mxu0 0.0
    %895 = vmatprep.subr.mxu0 0.0
    %896 = vmatpush1.msra.mxu0 0.0
    %897 = vmatprep.subr.mxu0 0.0
    %898 = vmatpush1.msra.mxu0 0.0
    %899 = vmatprep.subr.mxu0 0.0
    %900 = vmatpush1.msra.mxu0 0.0
    %901 = vmatprep.subr.mxu0 0.0
    %902 = vmatpush1.msra.mxu0 0.0
    %903 = vmatprep.subr.mxu0 0.0
    %904 = vmatpush1.msra.mxu0 0.0
    %905 = vmatprep.subr.mxu0 0.0
    %906 = vmatpush1.msra.mxu0 0.0
    %907 = vmatprep.subr.mxu0 0.0
    %908 = vmatpush1.msra.mxu0 0.0
    %909 = vmatprep.subr.mxu0 0.0
    %910 = vmatpush1.msra.mxu0 0.0
    %911 = vmatprep.mubr.f32.mxu0 0.0
    %912 = vmatmul.mubr.f32.gmra.mrb[0].mxu0 %v842
    %v913 = vpop.f32.mrb[0].mxu0
    %v914 = vadd.f32 0.0, %v913
    %v915 = vpop.f32.mrb[0].mxu0
    %916 = vmatprep.mubr.f32.mxu0 0.0
    %917 = vmatmul.mubr.f32.gmra.mrb[0].mxu0 %v845
    %v918 = vpop.f32.mrb[0].mxu0
    %v919 = vadd.f32 0.0, %v918
    %v920 = vpop.f32.mrb[0].mxu0
    %921 = vdwg.mxu0
    %922 = vrot.lane.b32.xlu0 %v204, 64
    %v923 = vpop.permute.xlu0 %922
    %924 = vrot.lane.b32.xlu0 %v206, 64
    %v925 = vpop.permute.xlu0 %924
    %v929 = vsel %vm572, %v658, 0
    %v932 = vsel %vm572, %v660, 0
    %934 = vmatprep.subr.mxu0 0.0
    %935 = vmatpush1.msra.mxu0 %v923
    %936 = vmatprep.subr.mxu0 0.0
    %937 = vmatpush1.msra.mxu0 %v925
    %938 = vmatprep.subr.mxu0 0.0
    %939 = vmatpush1.msra.mxu0 0.0
    %940 = vmatprep.subr.mxu0 0.0
    %941 = vmatpush1.msra.mxu0 0.0
    %942 = vmatprep.subr.mxu0 0.0
    %943 = vmatpush1.msra.mxu0 0.0
    %944 = vmatprep.subr.mxu0 0.0
    %945 = vmatpush1.msra.mxu0 0.0
    %946 = vmatprep.subr.mxu0 0.0
    %947 = vmatpush1.msra.mxu0 0.0
    %948 = vmatprep.subr.mxu0 0.0
    %949 = vmatpush1.msra.mxu0 0.0
    %950 = vmatprep.subr.mxu0 0.0
    %951 = vmatpush1.msra.mxu0 0.0
    %952 = vmatprep.subr.mxu0 0.0
    %953 = vmatpush1.msra.mxu0 0.0
    %954 = vmatprep.subr.mxu0 0.0
    %955 = vmatpush1.msra.mxu0 0.0
    %956 = vmatprep.subr.mxu0 0.0
    %957 = vmatpush1.msra.mxu0 0.0
    %958 = vmatprep.subr.mxu0 0.0
    %959 = vmatpush1.msra.mxu0 0.0
    %960 = vmatprep.subr.mxu0 0.0
    %961 = vmatpush1.msra.mxu0 0.0
    %962 = vmatprep.subr.mxu0 0.0
    %963 = vmatpush1.msra.mxu0 0.0
    %964 = vmatprep.subr.mxu0 0.0
    %965 = vmatpush1.msra.mxu0 0.0
    %966 = vmatprep.subr.mxu0 0.0
    %967 = vmatpush1.msra.mxu0 0.0
    %968 = vmatprep.subr.mxu0 0.0
    %969 = vmatpush1.msra.mxu0 0.0
    %970 = vmatprep.subr.mxu0 0.0
    %971 = vmatpush1.msra.mxu0 0.0
    %972 = vmatprep.subr.mxu0 0.0
    %973 = vmatpush1.msra.mxu0 0.0
    %974 = vmatprep.subr.mxu0 0.0
    %975 = vmatpush1.msra.mxu0 0.0
    %976 = vmatprep.subr.mxu0 0.0
    %977 = vmatpush1.msra.mxu0 0.0
    %978 = vmatprep.subr.mxu0 0.0
    %979 = vmatpush1.msra.mxu0 0.0
    %980 = vmatprep.subr.mxu0 0.0
    %981 = vmatpush1.msra.mxu0 0.0
    %982 = vmatprep.subr.mxu0 0.0
    %983 = vmatpush1.msra.mxu0 0.0
    %984 = vmatprep.subr.mxu0 0.0
    %985 = vmatpush1.msra.mxu0 0.0
    %986 = vmatprep.subr.mxu0 0.0
    %987 = vmatpush1.msra.mxu0 0.0
    %988 = vmatprep.subr.mxu0 0.0
    %989 = vmatpush1.msra.mxu0 0.0
    %990 = vmatprep.subr.mxu0 0.0
    %991 = vmatpush1.msra.mxu0 0.0
    %992 = vmatprep.subr.mxu0 0.0
    %993 = vmatpush1.msra.mxu0 0.0
    %994 = vmatprep.subr.mxu0 0.0
    %995 = vmatpush1.msra.mxu0 0.0
    %996 = vmatprep.subr.mxu0 0.0
    %997 = vmatpush1.msra.mxu0 0.0
    %998 = vmatprep.mubr.f32.mxu0 0.0
    %999 = vmatmul.mubr.f32.gmra.mrb[0].mxu0 %v929
    %v1000 = vpop.f32.mrb[0].mxu0
    %v1001 = vadd.f32 0.0, %v1000
    %v1002 = vpop.f32.mrb[0].mxu0
    %1003 = vmatprep.mubr.f32.mxu0 0.0
    %1004 = vmatmul.mubr.f32.gmra.mrb[0].mxu0 %v932
    %v1005 = vpop.f32.mrb[0].mxu0
    %v1006 = vadd.f32 0.0, %v1005
    %v1007 = vpop.f32.mrb[0].mxu0
    %1008 = vdwg.mxu0
    %v1010 = vsel %vm211, %v740, 0
    %v1013 = vsel %vm211, %v745, 0
    %1015 = vmatprep.subr.mxu0 0.0
    %1016 = vmatpush1.msra.mxu0 %v90
    %1017 = vmatprep.subr.mxu0 0.0
    %1018 = vmatpush1.msra.mxu0 0.0
    %1019 = vmatprep.subr.mxu0 0.0
    %1020 = vmatpush1.msra.mxu0 0.0
    %1021 = vmatprep.subr.mxu0 0.0
    %1022 = vmatpush1.msra.mxu0 0.0
    %1023 = vmatprep.subr.mxu0 0.0
    %1024 = vmatpush1.msra.mxu0 0.0
    %1025 = vmatprep.subr.mxu0 0.0
    %1026 = vmatpush1.msra.mxu0 0.0
    %1027 = vmatprep.subr.mxu0 0.0
    %1028 = vmatpush1.msra.mxu0 0.0
    %1029 = vmatprep.subr.mxu0 0.0
    %1030 = vmatpush1.msra.mxu0 0.0
    %1031 = vmatprep.subr.mxu0 0.0
    %1032 = vmatpush1.msra.mxu0 0.0
    %1033 = vmatprep.subr.mxu0 0.0
    %1034 = vmatpush1.msra.mxu0 0.0
    %1035 = vmatprep.subr.mxu0 0.0
    %1036 = vmatpush1.msra.mxu0 0.0
    %1037 = vmatprep.subr.mxu0 0.0
    %1038 = vmatpush1.msra.mxu0 0.0
    %1039 = vmatprep.subr.mxu0 0.0
    %1040 = vmatpush1.msra.mxu0 0.0
    %1041 = vmatprep.subr.mxu0 0.0
    %1042 = vmatpush1.msra.mxu0 0.0
    %1043 = vmatprep.subr.mxu0 0.0
    %1044 = vmatpush1.msra.mxu0 0.0
    %1045 = vmatprep.subr.mxu0 0.0
    %1046 = vmatpush1.msra.mxu0 0.0
    %1047 = vmatprep.subr.mxu0 0.0
    %1048 = vmatpush1.msra.mxu0 0.0
    %1049 = vmatprep.subr.mxu0 0.0
    %1050 = vmatpush1.msra.mxu0 0.0
    %1051 = vmatprep.subr.mxu0 0.0
    %1052 = vmatpush1.msra.mxu0 0.0
    %1053 = vmatprep.subr.mxu0 0.0
    %1054 = vmatpush1.msra.mxu0 0.0
    %1055 = vmatprep.subr.mxu0 0.0
    %1056 = vmatpush1.msra.mxu0 0.0
    %1057 = vmatprep.subr.mxu0 0.0
    %1058 = vmatpush1.msra.mxu0 0.0
    %1059 = vmatprep.subr.mxu0 0.0
    %1060 = vmatpush1.msra.mxu0 0.0
    %1061 = vmatprep.subr.mxu0 0.0
    %1062 = vmatpush1.msra.mxu0 0.0
    %1063 = vmatprep.subr.mxu0 0.0
    %1064 = vmatpush1.msra.mxu0 0.0
    %1065 = vmatprep.subr.mxu0 0.0
    %1066 = vmatpush1.msra.mxu0 0.0
    %1067 = vmatprep.subr.mxu0 0.0
    %1068 = vmatpush1.msra.mxu0 0.0
    %1069 = vmatprep.subr.mxu0 0.0
    %1070 = vmatpush1.msra.mxu0 0.0
    %1071 = vmatprep.subr.mxu0 0.0
    %1072 = vmatpush1.msra.mxu0 0.0
    %1073 = vmatprep.subr.mxu0 0.0
    %1074 = vmatpush1.msra.mxu0 0.0
    %1075 = vmatprep.subr.mxu0 0.0
    %1076 = vmatpush1.msra.mxu0 0.0
    %1077 = vmatprep.subr.mxu0 0.0
    %1078 = vmatpush1.msra.mxu0 0.0
    %1079 = vmatprep.mubr.f32.mxu0 0.0
    %1080 = vmatmul.mubr.f32.gmra.mrb[0].mxu0 %v1010
    %v1081 = vpop.f32.mrb[0].mxu0
    %v1082 = vadd.f32 0.0, %v1081
    %v1083 = vpop.f32.mrb[0].mxu0
    %1084 = vmatprep.mubr.f32.mxu0 0.0
    %1085 = vmatmul.mubr.f32.gmra.mrb[0].mxu0 %v1013
    %v1086 = vpop.f32.mrb[0].mxu0
    %v1087 = vadd.f32 0.0, %v1086
    %v1088 = vpop.f32.mrb[0].mxu0
    %1089 = vdwg.mxu0
    %v1090 = vlaneseq
    %v1091 = vshrl.u32 %v1090, 7
    %v1092 = vsub.s32 1, %v1091
    %v1093 = vrot.slane %v106, %v1092
    %v1094 = vadd.f32 %v1093, %v1082
    %v1095 = vadd.f32 %v1093, %v1087
    %v1097 = vsel %vm211, %v827, 0
    %v1100 = vsel %vm211, %v832, 0
    %1102 = vmatprep.subr.mxu0 0.0
    %1103 = vmatpush1.msra.mxu0 %v91
    %1104 = vmatprep.subr.mxu0 0.0
    %1105 = vmatpush1.msra.mxu0 0.0
    %1106 = vmatprep.subr.mxu0 0.0
    %1107 = vmatpush1.msra.mxu0 0.0
    %1108 = vmatprep.subr.mxu0 0.0
    %1109 = vmatpush1.msra.mxu0 0.0
    %1110 = vmatprep.subr.mxu0 0.0
    %1111 = vmatpush1.msra.mxu0 0.0
    %1112 = vmatprep.subr.mxu0 0.0
    %1113 = vmatpush1.msra.mxu0 0.0
    %1114 = vmatprep.subr.mxu0 0.0
    %1115 = vmatpush1.msra.mxu0 0.0
    %1116 = vmatprep.subr.mxu0 0.0
    %1117 = vmatpush1.msra.mxu0 0.0
    %1118 = vmatprep.subr.mxu0 0.0
    %1119 = vmatpush1.msra.mxu0 0.0
    %1120 = vmatprep.subr.mxu0 0.0
    %1121 = vmatpush1.msra.mxu0 0.0
    %1122 = vmatprep.subr.mxu0 0.0
    %1123 = vmatpush1.msra.mxu0 0.0
    %1124 = vmatprep.subr.mxu0 0.0
    %1125 = vmatpush1.msra.mxu0 0.0
    %1126 = vmatprep.subr.mxu0 0.0
    %1127 = vmatpush1.msra.mxu0 0.0
    %1128 = vmatprep.subr.mxu0 0.0
    %1129 = vmatpush1.msra.mxu0 0.0
    %1130 = vmatprep.subr.mxu0 0.0
    %1131 = vmatpush1.msra.mxu0 0.0
    %1132 = vmatprep.subr.mxu0 0.0
    %1133 = vmatpush1.msra.mxu0 0.0
    %1134 = vmatprep.subr.mxu0 0.0
    %1135 = vmatpush1.msra.mxu0 0.0
    %1136 = vmatprep.subr.mxu0 0.0
    %1137 = vmatpush1.msra.mxu0 0.0
    %1138 = vmatprep.subr.mxu0 0.0
    %1139 = vmatpush1.msra.mxu0 0.0
    %1140 = vmatprep.subr.mxu0 0.0
    %1141 = vmatpush1.msra.mxu0 0.0
    %1142 = vmatprep.subr.mxu0 0.0
    %1143 = vmatpush1.msra.mxu0 0.0
    %1144 = vmatprep.subr.mxu0 0.0
    %1145 = vmatpush1.msra.mxu0 0.0
    %1146 = vmatprep.subr.mxu0 0.0
    %1147 = vmatpush1.msra.mxu0 0.0
    %1148 = vmatprep.subr.mxu0 0.0
    %1149 = vmatpush1.msra.mxu0 0.0
    %1150 = vmatprep.subr.mxu0 0.0
    %1151 = vmatpush1.msra.mxu0 0.0
    %1152 = vmatprep.subr.mxu0 0.0
    %1153 = vmatpush1.msra.mxu0 0.0
    %1154 = vmatprep.subr.mxu0 0.0
    %1155 = vmatpush1.msra.mxu0 0.0
    %1156 = vmatprep.subr.mxu0 0.0
    %1157 = vmatpush1.msra.mxu0 0.0
    %1158 = vmatprep.subr.mxu0 0.0
    %1159 = vmatpush1.msra.mxu0 0.0
    %1160 = vmatprep.subr.mxu0 0.0
    %1161 = vmatpush1.msra.mxu0 0.0
    %1162 = vmatprep.subr.mxu0 0.0
    %1163 = vmatpush1.msra.mxu0 0.0
    %1164 = vmatprep.subr.mxu0 0.0
    %1165 = vmatpush1.msra.mxu0 0.0
    %1166 = vmatprep.mubr.f32.mxu0 0.0
    %1167 = vmatmul.mubr.f32.gmra.mrb[0].mxu0 %v1097
    %v1168 = vpop.f32.mrb[0].mxu0
    %v1169 = vadd.f32 0.0, %v1168
    %v1170 = vpop.f32.mrb[0].mxu0
    %1171 = vmatprep.mubr.f32.mxu0 0.0
    %1172 = vmatmul.mubr.f32.gmra.mrb[0].mxu0 %v1100
    %v1173 = vpop.f32.mrb[0].mxu0
    %v1174 = vadd.f32 0.0, %v1173
    %v1175 = vpop.f32.mrb[0].mxu0
    %1176 = vdwg.mxu0
    %v1177 = vadd.f32 %v1094, %v1169
    %v1178 = vadd.f32 %v1095, %v1174
    %v1180 = vsel %vm211, %v914, 0
    %v1183 = vsel %vm211, %v919, 0
    %1185 = vmatprep.subr.mxu0 0.0
    %1186 = vmatpush1.msra.mxu0 %v92
    %1187 = vmatprep.subr.mxu0 0.0
    %1188 = vmatpush1.msra.mxu0 0.0
    %1189 = vmatprep.subr.mxu0 0.0
    %1190 = vmatpush1.msra.mxu0 0.0
    %1191 = vmatprep.subr.mxu0 0.0
    %1192 = vmatpush1.msra.mxu0 0.0
    %1193 = vmatprep.subr.mxu0 0.0
    %1194 = vmatpush1.msra.mxu0 0.0
    %1195 = vmatprep.subr.mxu0 0.0
    %1196 = vmatpush1.msra.mxu0 0.0
    %1197 = vmatprep.subr.mxu0 0.0
    %1198 = vmatpush1.msra.mxu0 0.0
    %1199 = vmatprep.subr.mxu0 0.0
    %1200 = vmatpush1.msra.mxu0 0.0
    %1201 = vmatprep.subr.mxu0 0.0
    %1202 = vmatpush1.msra.mxu0 0.0
    %1203 = vmatprep.subr.mxu0 0.0
    %1204 = vmatpush1.msra.mxu0 0.0
    %1205 = vmatprep.subr.mxu0 0.0
    %1206 = vmatpush1.msra.mxu0 0.0
    %1207 = vmatprep.subr.mxu0 0.0
    %1208 = vmatpush1.msra.mxu0 0.0
    %1209 = vmatprep.subr.mxu0 0.0
    %1210 = vmatpush1.msra.mxu0 0.0
    %1211 = vmatprep.subr.mxu0 0.0
    %1212 = vmatpush1.msra.mxu0 0.0
    %1213 = vmatprep.subr.mxu0 0.0
    %1214 = vmatpush1.msra.mxu0 0.0
    %1215 = vmatprep.subr.mxu0 0.0
    %1216 = vmatpush1.msra.mxu0 0.0
    %1217 = vmatprep.subr.mxu0 0.0
    %1218 = vmatpush1.msra.mxu0 0.0
    %1219 = vmatprep.subr.mxu0 0.0
    %1220 = vmatpush1.msra.mxu0 0.0
    %1221 = vmatprep.subr.mxu0 0.0
    %1222 = vmatpush1.msra.mxu0 0.0
    %1223 = vmatprep.subr.mxu0 0.0
    %1224 = vmatpush1.msra.mxu0 0.0
    %1225 = vmatprep.subr.mxu0 0.0
    %1226 = vmatpush1.msra.mxu0 0.0
    %1227 = vmatprep.subr.mxu0 0.0
    %1228 = vmatpush1.msra.mxu0 0.0
    %1229 = vmatprep.subr.mxu0 0.0
    %1230 = vmatpush1.msra.mxu0 0.0
    %1231 = vmatprep.subr.mxu0 0.0
    %1232 = vmatpush1.msra.mxu0 0.0
    %1233 = vmatprep.subr.mxu0 0.0
    %1234 = vmatpush1.msra.mxu0 0.0
    %1235 = vmatprep.subr.mxu0 0.0
    %1236 = vmatpush1.msra.mxu0 0.0
    %1237 = vmatprep.subr.mxu0 0.0
    %1238 = vmatpush1.msra.mxu0 0.0
    %1239 = vmatprep.subr.mxu0 0.0
    %1240 = vmatpush1.msra.mxu0 0.0
    %1241 = vmatprep.subr.mxu0 0.0
    %1242 = vmatpush1.msra.mxu0 0.0
    %1243 = vmatprep.subr.mxu0 0.0
    %1244 = vmatpush1.msra.mxu0 0.0
    %1245 = vmatprep.subr.mxu0 0.0
    %1246 = vmatpush1.msra.mxu0 0.0
    %1247 = vmatprep.subr.mxu0 0.0
    %1248 = vmatpush1.msra.mxu0 0.0
    %1249 = vmatprep.mubr.f32.mxu0 0.0
    %1250 = vmatmul.mubr.f32.gmra.mrb[0].mxu0 %v1180
    %v1251 = vpop.f32.mrb[0].mxu0
    %v1252 = vadd.f32 0.0, %v1251
    %v1253 = vpop.f32.mrb[0].mxu0
    %1254 = vmatprep.mubr.f32.mxu0 0.0
    %1255 = vmatmul.mubr.f32.gmra.mrb[0].mxu0 %v1183
    %v1256 = vpop.f32.mrb[0].mxu0
    %v1257 = vadd.f32 0.0, %v1256
    %v1258 = vpop.f32.mrb[0].mxu0
    %1259 = vdwg.mxu0
    %v1260 = vadd.f32 %v1177, %v1252
    %v1261 = vadd.f32 %v1178, %v1257
    %v1263 = vsel %vm211, %v1001, 0
    %v1266 = vsel %vm211, %v1006, 0
    %1268 = vmatprep.subr.mxu0 0.0
    %1269 = vmatpush1.msra.mxu0 %v93
    %1270 = vmatprep.subr.mxu0 0.0
    %1271 = vmatpush1.msra.mxu0 0.0
    %1272 = vmatprep.subr.mxu0 0.0
    %1273 = vmatpush1.msra.mxu0 0.0
    %1274 = vmatprep.subr.mxu0 0.0
    %1275 = vmatpush1.msra.mxu0 0.0
    %1276 = vmatprep.subr.mxu0 0.0
    %1277 = vmatpush1.msra.mxu0 0.0
    %1278 = vmatprep.subr.mxu0 0.0
    %1279 = vmatpush1.msra.mxu0 0.0
    %1280 = vmatprep.subr.mxu0 0.0
    %1281 = vmatpush1.msra.mxu0 0.0
    %1282 = vmatprep.subr.mxu0 0.0
    %1283 = vmatpush1.msra.mxu0 0.0
    %1284 = vmatprep.subr.mxu0 0.0
    %1285 = vmatpush1.msra.mxu0 0.0
    %1286 = vmatprep.subr.mxu0 0.0
    %1287 = vmatpush1.msra.mxu0 0.0
    %1288 = vmatprep.subr.mxu0 0.0
    %1289 = vmatpush1.msra.mxu0 0.0
    %1290 = vmatprep.subr.mxu0 0.0
    %1291 = vmatpush1.msra.mxu0 0.0
    %1292 = vmatprep.subr.mxu0 0.0
    %1293 = vmatpush1.msra.mxu0 0.0
    %1294 = vmatprep.subr.mxu0 0.0
    %1295 = vmatpush1.msra.mxu0 0.0
    %1296 = vmatprep.subr.mxu0 0.0
    %1297 = vmatpush1.msra.mxu0 0.0
    %1298 = vmatprep.subr.mxu0 0.0
    %1299 = vmatpush1.msra.mxu0 0.0
    %1300 = vmatprep.subr.mxu0 0.0
    %1301 = vmatpush1.msra.mxu0 0.0
    %1302 = vmatprep.subr.mxu0 0.0
    %1303 = vmatpush1.msra.mxu0 0.0
    %1304 = vmatprep.subr.mxu0 0.0
    %1305 = vmatpush1.msra.mxu0 0.0
    %1306 = vmatprep.subr.mxu0 0.0
    %1307 = vmatpush1.msra.mxu0 0.0
    %1308 = vmatprep.subr.mxu0 0.0
    %1309 = vmatpush1.msra.mxu0 0.0
    %1310 = vmatprep.subr.mxu0 0.0
    %1311 = vmatpush1.msra.mxu0 0.0
    %1312 = vmatprep.subr.mxu0 0.0
    %1313 = vmatpush1.msra.mxu0 0.0
    %1314 = vmatprep.subr.mxu0 0.0
    %1315 = vmatpush1.msra.mxu0 0.0
    %1316 = vmatprep.subr.mxu0 0.0
    %1317 = vmatpush1.msra.mxu0 0.0
    %1318 = vmatprep.subr.mxu0 0.0
    %1319 = vmatpush1.msra.mxu0 0.0
    %1320 = vmatprep.subr.mxu0 0.0
    %1321 = vmatpush1.msra.mxu0 0.0
    %1322 = vmatprep.subr.mxu0 0.0
    %1323 = vmatpush1.msra.mxu0 0.0
    %1324 = vmatprep.subr.mxu0 0.0
    %1325 = vmatpush1.msra.mxu0 0.0
    %1326 = vmatprep.subr.mxu0 0.0
    %1327 = vmatpush1.msra.mxu0 0.0
    %1328 = vmatprep.subr.mxu0 0.0
    %1329 = vmatpush1.msra.mxu0 0.0
    %1330 = vmatprep.subr.mxu0 0.0
    %1331 = vmatpush1.msra.mxu0 0.0
    %1332 = vmatprep.mubr.f32.mxu0 0.0
    %1333 = vmatmul.mubr.f32.gmra.mrb[0].mxu0 %v1263
    %v1334 = vpop.f32.mrb[0].mxu0
    %v1335 = vadd.f32 0.0, %v1334
    %v1336 = vpop.f32.mrb[0].mxu0
    %1337 = vmatprep.mubr.f32.mxu0 0.0
    %1338 = vmatmul.mubr.f32.gmra.mrb[0].mxu0 %v1266
    %v1339 = vpop.f32.mrb[0].mxu0
    %v1340 = vadd.f32 0.0, %v1339
    %v1341 = vpop.f32.mrb[0].mxu0
    %1342 = vdwg.mxu0
    %v1343 = vadd.f32 %v1260, %v1335
    %v1344 = vadd.f32 %v1261, %v1340
    %v1345 = vadd.f32 %v82, %v1343
    %v1346 = vadd.f32 %v83, %v1344
    %v1347 = vsel %vm111, %v1345, 0.0
    %1348 = vadd.xlane.f32.xlu0 %v1347
    %v1349 = vpop.xlane.xlu0 %1348
    %v1350 = vsel %vm111, %v1346, 0.0
    %1351 = vadd.xlane.f32.xlu0 %v1350
    %v1352 = vpop.xlane.xlu0 %1351
    %v1353 = vrcp.pop 32.0
    %v1354 = vmul.f32 %v1349, %v1353
    %v1355 = vmul.f32 %v1352, %v1353
    %v1356 = vsub.f32 %v1345, %v1354
    %v1357 = vsub.f32 %v1346, %v1355
    %v1358 = vmul.f32 %v1356, %v1356
    %v1359 = vmul.f32 %v1357, %v1357
    %v1360 = vsel %vm111, %v1358, 0.0
    %1361 = vadd.xlane.f32.xlu0 %v1360
    %v1362 = vpop.xlane.xlu0 %1361
    %v1363 = vsel %vm111, %v1359, 0.0
    %1364 = vadd.xlane.f32.xlu0 %v1363
    %v1365 = vpop.xlane.xlu0 %1364
    %v1366 = vmul.f32 %v1362, %v1353
    %v1367 = vmul.f32 %v1365, %v1353
    %v1368 = vadd.f32 %v1366, 1e-12
    %v1369 = vadd.f32 %v1367, 1e-12
    %v1370 = vrsqrt.pop %v1368
    %v1371 = vrsqrt.pop %v1369
    %v1372 = vmul.f32 %v1356, %v1370
    %v1373 = vmul.f32 %v1357, %v1371
    %1375 = vrot.lane.b32.xlu0 %v1093, 96
    %v1376 = vpop.permute.xlu0 %1375
    %v1378 = vmul.f32 %v1372, %v1376
    %v1379 = vmul.f32 %v1373, %v1376
    %1380 = vrot.lane.b32.xlu0 %v1093, 64
    %v1381 = vpop.permute.xlu0 %1380
    %v1383 = vadd.f32 %v1378, %v1381
    %v1384 = vadd.f32 %v1379, %v1381
    %v1385 = vlaneseq
    %v1386 = vshrl.u32 %v1385, 7
    %v1387 = vsub.s32 2, %v1386
    %v1388 = vrot.slane %v106, %v1387
    %v1390 = vsel %vm111, %v1383, 0
    %v1393 = vsel %vm111, %v1384, 0
    %1395 = vmatprep.subr.mxu0 0.0
    %1396 = vmatpush1.msra.mxu0 %v94
    %1397 = vmatprep.subr.mxu0 0.0
    %1398 = vmatpush1.msra.mxu0 %v95
    %1399 = vmatprep.subr.mxu0 0.0
    %1400 = vmatpush1.msra.mxu0 %v96
    %1401 = vmatprep.subr.mxu0 0.0
    %1402 = vmatpush1.msra.mxu0 %v97
    %1403 = vmatprep.subr.mxu0 0.0
    %1404 = vmatpush1.msra.mxu0 0.0
    %1405 = vmatprep.subr.mxu0 0.0
    %1406 = vmatpush1.msra.mxu0 0.0
    %1407 = vmatprep.subr.mxu0 0.0
    %1408 = vmatpush1.msra.mxu0 0.0
    %1409 = vmatprep.subr.mxu0 0.0
    %1410 = vmatpush1.msra.mxu0 0.0
    %1411 = vmatprep.subr.mxu0 0.0
    %1412 = vmatpush1.msra.mxu0 0.0
    %1413 = vmatprep.subr.mxu0 0.0
    %1414 = vmatpush1.msra.mxu0 0.0
    %1415 = vmatprep.subr.mxu0 0.0
    %1416 = vmatpush1.msra.mxu0 0.0
    %1417 = vmatprep.subr.mxu0 0.0
    %1418 = vmatpush1.msra.mxu0 0.0
    %1419 = vmatprep.subr.mxu0 0.0
    %1420 = vmatpush1.msra.mxu0 0.0
    %1421 = vmatprep.subr.mxu0 0.0
    %1422 = vmatpush1.msra.mxu0 0.0
    %1423 = vmatprep.subr.mxu0 0.0
    %1424 = vmatpush1.msra.mxu0 0.0
    %1425 = vmatprep.subr.mxu0 0.0
    %1426 = vmatpush1.msra.mxu0 0.0
    %1427 = vmatprep.subr.mxu0 0.0
    %1428 = vmatpush1.msra.mxu0 0.0
    %1429 = vmatprep.subr.mxu0 0.0
    %1430 = vmatpush1.msra.mxu0 0.0
    %1431 = vmatprep.subr.mxu0 0.0
    %1432 = vmatpush1.msra.mxu0 0.0
    %1433 = vmatprep.subr.mxu0 0.0
    %1434 = vmatpush1.msra.mxu0 0.0
    %1435 = vmatprep.subr.mxu0 0.0
    %1436 = vmatpush1.msra.mxu0 0.0
    %1437 = vmatprep.subr.mxu0 0.0
    %1438 = vmatpush1.msra.mxu0 0.0
    %1439 = vmatprep.subr.mxu0 0.0
    %1440 = vmatpush1.msra.mxu0 0.0
    %1441 = vmatprep.subr.mxu0 0.0
    %1442 = vmatpush1.msra.mxu0 0.0
    %1443 = vmatprep.subr.mxu0 0.0
    %1444 = vmatpush1.msra.mxu0 0.0
    %1445 = vmatprep.subr.mxu0 0.0
    %1446 = vmatpush1.msra.mxu0 0.0
    %1447 = vmatprep.subr.mxu0 0.0
    %1448 = vmatpush1.msra.mxu0 0.0
    %1449 = vmatprep.subr.mxu0 0.0
    %1450 = vmatpush1.msra.mxu0 0.0
    %1451 = vmatprep.subr.mxu0 0.0
    %1452 = vmatpush1.msra.mxu0 0.0
    %1453 = vmatprep.subr.mxu0 0.0
    %1454 = vmatpush1.msra.mxu0 0.0
    %1455 = vmatprep.subr.mxu0 0.0
    %1456 = vmatpush1.msra.mxu0 0.0
    %1457 = vmatprep.subr.mxu0 0.0
    %1458 = vmatpush1.msra.mxu0 0.0
    %1459 = vmatprep.mubr.f32.mxu0 0.0
    %1460 = vmatmul.mubr.f32.gmra.mrb[0].mxu0 %v1390
    %v1461 = vpop.f32.mrb[0].mxu0
    %v1462 = vadd.f32 %v1388, %v1461
    %v1463 = vpop.f32.mrb[0].mxu0
    %1464 = vmatprep.mubr.f32.mxu0 0.0
    %1465 = vmatmul.mubr.f32.gmra.mrb[0].mxu0 %v1393
    %v1466 = vpop.f32.mrb[0].mxu0
    %v1467 = vadd.f32 %v1388, %v1466
    %v1468 = vpop.f32.mrb[0].mxu0
    %1469 = vdwg.mxu0
    %v1470 = vmul.f32 %v1462, %v1462
    %v1471 = vmul.f32 %v1467, %v1467
    %v1472 = vmul.f32 %v1462, %v1470
    %v1473 = vmul.f32 %v1467, %v1471
    %v1474 = vmul.f32 %v1472, 0.044715
    %v1475 = vmul.f32 %v1473, 0.044715
    %v1476 = vadd.f32 %v1462, %v1474
    %v1477 = vadd.f32 %v1467, %v1475
    %v1478 = vmul.f32 %v1476, 0.7978846
    %v1479 = vmul.f32 %v1477, 0.7978846
    %v1480 = vtanh.pop %v1478
    %v1481 = vtanh.pop %v1479
    %v1482 = vadd.f32 %v1480, 1.0
    %v1483 = vadd.f32 %v1481, 1.0
    %v1484 = vmul.f32 %v1482, 0.5
    %v1485 = vmul.f32 %v1483, 0.5
    %v1486 = vmul.f32 %v1462, %v1484
    %v1487 = vmul.f32 %v1467, %v1485
    %v1488 = vlaneseq
    %v1489 = vshrl.u32 %v1488, 7
    %v1490 = vsub.s32 3, %v1489
    %v1491 = vrot.slane %v106, %v1490
    %vm1492 = vcmask 523264
    %v1494 = vsel %vm1492, %v1486, 0
    %v1497 = vsel %vm1492, %v1487, 0
    %1499 = vmatprep.subr.mxu0 0.0
    %1500 = vmatpush1.msra.mxu0 %v98
    %1501 = vmatprep.subr.mxu0 0.0
    %1502 = vmatpush1.msra.mxu0 %v99
    %1503 = vmatprep.subr.mxu0 0.0
    %1504 = vmatpush1.msra.mxu0 %v100
    %1505 = vmatprep.subr.mxu0 0.0
    %1506 = vmatpush1.msra.mxu0 %v101
    %1507 = vmatprep.subr.mxu0 0.0
    %1508 = vmatpush1.msra.mxu0 %v102
    %1509 = vmatprep.subr.mxu0 0.0
    %1510 = vmatpush1.msra.mxu0 %v103
    %1511 = vmatprep.subr.mxu0 0.0
    %1512 = vmatpush1.msra.mxu0 %v104
    %1513 = vmatprep.subr.mxu0 0.0
    %1514 = vmatpush1.msra.mxu0 %v105
    %1515 = vmatprep.subr.mxu0 0.0
    %1516 = vmatpush1.msra.mxu0 0.0
    %1517 = vmatprep.subr.mxu0 0.0
    %1518 = vmatpush1.msra.mxu0 0.0
    %1519 = vmatprep.subr.mxu0 0.0
    %1520 = vmatpush1.msra.mxu0 0.0
    %1521 = vmatprep.subr.mxu0 0.0
    %1522 = vmatpush1.msra.mxu0 0.0
    %1523 = vmatprep.subr.mxu0 0.0
    %1524 = vmatpush1.msra.mxu0 0.0
    %1525 = vmatprep.subr.mxu0 0.0
    %1526 = vmatpush1.msra.mxu0 0.0
    %1527 = vmatprep.subr.mxu0 0.0
    %1528 = vmatpush1.msra.mxu0 0.0
    %1529 = vmatprep.subr.mxu0 0.0
    %1530 = vmatpush1.msra.mxu0 0.0
    %1531 = vmatprep.subr.mxu0 0.0
    %1532 = vmatpush1.msra.mxu0 0.0
    %1533 = vmatprep.subr.mxu0 0.0
    %1534 = vmatpush1.msra.mxu0 0.0
    %1535 = vmatprep.subr.mxu0 0.0
    %1536 = vmatpush1.msra.mxu0 0.0
    %1537 = vmatprep.subr.mxu0 0.0
    %1538 = vmatpush1.msra.mxu0 0.0
    %1539 = vmatprep.subr.mxu0 0.0
    %1540 = vmatpush1.msra.mxu0 0.0
    %1541 = vmatprep.subr.mxu0 0.0
    %1542 = vmatpush1.msra.mxu0 0.0
    %1543 = vmatprep.subr.mxu0 0.0
    %1544 = vmatpush1.msra.mxu0 0.0
    %1545 = vmatprep.subr.mxu0 0.0
    %1546 = vmatpush1.msra.mxu0 0.0
    %1547 = vmatprep.subr.mxu0 0.0
    %1548 = vmatpush1.msra.mxu0 0.0
    %1549 = vmatprep.subr.mxu0 0.0
    %1550 = vmatpush1.msra.mxu0 0.0
    %1551 = vmatprep.subr.mxu0 0.0
    %1552 = vmatpush1.msra.mxu0 0.0
    %1553 = vmatprep.subr.mxu0 0.0
    %1554 = vmatpush1.msra.mxu0 0.0
    %1555 = vmatprep.subr.mxu0 0.0
    %1556 = vmatpush1.msra.mxu0 0.0
    %1557 = vmatprep.subr.mxu0 0.0
    %1558 = vmatpush1.msra.mxu0 0.0
    %1559 = vmatprep.subr.mxu0 0.0
    %1560 = vmatpush1.msra.mxu0 0.0
    %1561 = vmatprep.subr.mxu0 0.0
    %1562 = vmatpush1.msra.mxu0 0.0
    %1563 = vmatprep.mubr.f32.mxu0 0.0
    %1564 = vmatmul.mubr.f32.gmra.mrb[0].mxu0 %v1494
    %v1565 = vpop.f32.mrb[0].mxu0
    %v1566 = vadd.f32 %v1491, %v1565
    %v1567 = vpop.f32.mrb[0].mxu0
    %1568 = vmatprep.mubr.f32.mxu0 0.0
    %1569 = vmatmul.mubr.f32.gmra.mrb[0].mxu0 %v1497
    %v1570 = vpop.f32.mrb[0].mxu0
    %v1571 = vadd.f32 %v1491, %v1570
    %v1572 = vpop.f32.mrb[0].mxu0
    %1573 = vdwg.mxu0
    %v1574 = vadd.f32 %v1383, %v1566
    %v1575 = vadd.f32 %v1384, %v1571
    %v1576 = vsel %vm111, %v1574, 0.0
    %1577 = vadd.xlane.f32.xlu0 %v1576
    %v1578 = vpop.xlane.xlu0 %1577
    %v1579 = vsel %vm111, %v1575, 0.0
    %1580 = vadd.xlane.f32.xlu0 %v1579
    %v1581 = vpop.xlane.xlu0 %1580
    %v1582 = vmul.f32 %v1578, %v1353
    %v1583 = vmul.f32 %v1581, %v1353
    %v1584 = vsub.f32 %v1574, %v1582
    %v1585 = vsub.f32 %v1575, %v1583
    %v1586 = vmul.f32 %v1584, %v1584
    %v1587 = vmul.f32 %v1585, %v1585
    %v1588 = vsel %vm111, %v1586, 0.0
    %1589 = vadd.xlane.f32.xlu0 %v1588
    %v1590 = vpop.xlane.xlu0 %1589
    %v1591 = vsel %vm111, %v1587, 0.0
    %1592 = vadd.xlane.f32.xlu0 %v1591
    %v1593 = vpop.xlane.xlu0 %1592
    %v1594 = vmul.f32 %v1590, %v1353
    %v1595 = vmul.f32 %v1593, %v1353
    %v1596 = vadd.f32 %v1594, 1e-12
    %v1597 = vadd.f32 %v1595, 1e-12
    %v1598 = vrsqrt.pop %v1596
    %v1599 = vrsqrt.pop %v1597
    %v1600 = vmul.f32 %v1584, %v1598
    %v1601 = vmul.f32 %v1585, %v1599
    %1603 = vrot.lane.b32.xlu0 %v1491, 96
    %v1604 = vpop.permute.xlu0 %1603
    %v1606 = vmul.f32 %v1600, %v1604
    %v1607 = vmul.f32 %v1601, %v1604
    %1608 = vrot.lane.b32.xlu0 %v1491, 64
    %v1609 = vpop.permute.xlu0 %1608
    %v1611 = vadd.f32 %v1606, %v1609
    %v1612 = vadd.f32 %v1607, %v1609
    %s1613 = scalar_lea.vmem [#allocation7], 160
    %v1614 = vld [vmem:[%s1613] sm:$0xff]
    %v1615 = vld [vmem:[%s1613 + $0x8] sm:$0xff]
    %v1616 = vld [vmem:[%s1613 + $0x10] sm:$0xff]
    %v1617 = vld [vmem:[%s1613 + $0x18] sm:$0xff]
    %v1618 = vld [vmem:[%s1613 + $0x20] sm:$0xff]
    %v1619 = vld [vmem:[%s1613 + $0x28] sm:$0xff]
    %v1620 = vld [vmem:[%s1613 + $0x30] sm:$0xff]
    %v1621 = vld [vmem:[%s1613 + $0x38] sm:$0xff]
    %v1622 = vld [vmem:[%s1613 + $0x40] sm:$0xff]
    %v1623 = vld [vmem:[%s1613 + $0x48] sm:$0xff]
    %v1624 = vld [vmem:[%s1613 + $0x50] sm:$0xff]
    %v1625 = vld [vmem:[%s1613 + $0x58] sm:$0xff]
    %v1626 = vld [vmem:[%s1613 + $0x60] sm:$0xff]
    %v1627 = vld [vmem:[%s1613 + $0x68] sm:$0xff]
    %v1628 = vld [vmem:[%s1613 + $0x70] sm:$0xff]
    %v1629 = vld [vmem:[%s1613 + $0x78] sm:$0xff]
    %v1630 = vld [vmem:[%s1613 + $0x80] sm:$0xff]
    %v1631 = vld [vmem:[%s1613 + $0x88] sm:$0xff]
    %v1632 = vld [vmem:[%s1613 + $0x90] sm:$0xff]
    %v1633 = vld [vmem:[%s1613 + $0x98] sm:$0xff]
    %s1634 = scalar_lea.vmem [#allocation8], 4
    %v1635 = vld [vmem:[%s1634] sm:$0xf]
    %v1636 = vlaneseq
    %v1637 = vshrl.u32 %v1636, 7
    %v1638 = vsub.s32 0, %v1637
    %v1639 = vrot.slane %v1635, %v1638
    %v1641 = vsel %vm111, %v1611, 0
    %v1644 = vsel %vm111, %v1612, 0
    %1646 = vmatprep.subr.mxu0 0.0
    %1647 = vmatpush1.msra.mxu0 %v1614
    %1648 = vmatprep.subr.mxu0 0.0
    %1649 = vmatpush1.msra.mxu0 %v1615
    %1650 = vmatprep.subr.mxu0 0.0
    %1651 = vmatpush1.msra.mxu0 %v1616
    %1652 = vmatprep.subr.mxu0 0.0
    %1653 = vmatpush1.msra.mxu0 %v1617
    %1654 = vmatprep.subr.mxu0 0.0
    %1655 = vmatpush1.msra.mxu0 0.0
    %1656 = vmatprep.subr.mxu0 0.0
    %1657 = vmatpush1.msra.mxu0 0.0
    %1658 = vmatprep.subr.mxu0 0.0
    %1659 = vmatpush1.msra.mxu0 0.0
    %1660 = vmatprep.subr.mxu0 0.0
    %1661 = vmatpush1.msra.mxu0 0.0
    %1662 = vmatprep.subr.mxu0 0.0
    %1663 = vmatpush1.msra.mxu0 0.0
    %1664 = vmatprep.subr.mxu0 0.0
    %1665 = vmatpush1.msra.mxu0 0.0
    %1666 = vmatprep.subr.mxu0 0.0
    %1667 = vmatpush1.msra.mxu0 0.0
    %1668 = vmatprep.subr.mxu0 0.0
    %1669 = vmatpush1.msra.mxu0 0.0
    %1670 = vmatprep.subr.mxu0 0.0
    %1671 = vmatpush1.msra.mxu0 0.0
    %1672 = vmatprep.subr.mxu0 0.0
    %1673 = vmatpush1.msra.mxu0 0.0
    %1674 = vmatprep.subr.mxu0 0.0
    %1675 = vmatpush1.msra.mxu0 0.0
    %1676 = vmatprep.subr.mxu0 0.0
    %1677 = vmatpush1.msra.mxu0 0.0
    %1678 = vmatprep.subr.mxu0 0.0
    %1679 = vmatpush1.msra.mxu0 0.0
    %1680 = vmatprep.subr.mxu0 0.0
    %1681 = vmatpush1.msra.mxu0 0.0
    %1682 = vmatprep.subr.mxu0 0.0
    %1683 = vmatpush1.msra.mxu0 0.0
    %1684 = vmatprep.subr.mxu0 0.0
    %1685 = vmatpush1.msra.mxu0 0.0
    %1686 = vmatprep.subr.mxu0 0.0
    %1687 = vmatpush1.msra.mxu0 0.0
    %1688 = vmatprep.subr.mxu0 0.0
    %1689 = vmatpush1.msra.mxu0 0.0
    %1690 = vmatprep.subr.mxu0 0.0
    %1691 = vmatpush1.msra.mxu0 0.0
    %1692 = vmatprep.subr.mxu0 0.0
    %1693 = vmatpush1.msra.mxu0 0.0
    %1694 = vmatprep.subr.mxu0 0.0
    %1695 = vmatpush1.msra.mxu0 0.0
    %1696 = vmatprep.subr.mxu0 0.0
    %1697 = vmatpush1.msra.mxu0 0.0
    %1698 = vmatprep.subr.mxu0 0.0
    %1699 = vmatpush1.msra.mxu0 0.0
    %1700 = vmatprep.subr.mxu0 0.0
    %1701 = vmatpush1.msra.mxu0 0.0
    %1702 = vmatprep.subr.mxu0 0.0
    %1703 = vmatpush1.msra.mxu0 0.0
    %1704 = vmatprep.subr.mxu0 0.0
    %1705 = vmatpush1.msra.mxu0 0.0
    %1706 = vmatprep.subr.mxu0 0.0
    %1707 = vmatpush1.msra.mxu0 0.0
    %1708 = vmatprep.subr.mxu0 0.0
    %1709 = vmatpush1.msra.mxu0 0.0
    %1710 = vmatprep.mubr.f32.mxu0 0.0
    %1711 = vmatmul.mubr.f32.gmra.mrb[0].mxu0 %v1641
    %v1712 = vpop.f32.mrb[0].mxu0
    %v1713 = vadd.f32 %v1639, %v1712
    %v1714 = vpop.f32.mrb[0].mxu0
    %1715 = vmatprep.mubr.f32.mxu0 0.0
    %1716 = vmatmul.mubr.f32.gmra.mrb[0].mxu0 %v1644
    %v1717 = vpop.f32.mrb[0].mxu0
    %v1718 = vadd.f32 %v1639, %v1717
    %v1719 = vpop.f32.mrb[0].mxu0
    %1720 = vdwg.mxu0
    %1723 = vrot.lane.b32.xlu0 %v1713, 120
    %v1724 = vpop.permute.xlu0 %1723
    %1725 = vrot.lane.b32.xlu0 %v1718, 120
    %v1726 = vpop.permute.xlu0 %1725
    %1727 = vrot.lane.b32.xlu0 %v1713, 112
    %v1728 = vpop.permute.xlu0 %1727
    %1729 = vrot.lane.b32.xlu0 %v1718, 112
    %v1730 = vpop.permute.xlu0 %1729
    %1731 = vrot.lane.b32.xlu0 %v1713, 104
    %v1732 = vpop.permute.xlu0 %1731
    %1733 = vrot.lane.b32.xlu0 %v1718, 104
    %v1734 = vpop.permute.xlu0 %1733
    %1735 = vrot.lane.b32.xlu0 %v1713, 96
    %v1736 = vpop.permute.xlu0 %1735
    %1737 = vrot.lane.b32.xlu0 %v1718, 96
    %v1738 = vpop.permute.xlu0 %1737
    %v1739 = vsel %vm211, %v1713, 0
    %v1741 = vsel %vm211, %v1718, 0
    %v1743 = vsel %vm211, %v1736, 0
    %v1745 = vsel %vm211, %v1738, 0
    %1747 = vmatprep.subr.mxu0 0.0
    %1748 = vmatpush1.xpose.msra.mxu0 %v1743
    %1749 = vmatprep.subr.mxu0 0.0
    %1750 = vmatpush1.xpose.msra.mxu0 %v1745
    %1751 = vmatprep.subr.mxu0 0.0
    %1752 = vmatpush1.xpose.msra.mxu0 0.0
    %1753 = vmatprep.subr.mxu0 0.0
    %1754 = vmatpush1.xpose.msra.mxu0 0.0
    %1755 = vmatprep.subr.mxu0 0.0
    %1756 = vmatpush1.xpose.msra.mxu0 0.0
    %1757 = vmatprep.subr.mxu0 0.0
    %1758 = vmatpush1.xpose.msra.mxu0 0.0
    %1759 = vmatprep.subr.mxu0 0.0
    %1760 = vmatpush1.xpose.msra.mxu0 0.0
    %1761 = vmatprep.subr.mxu0 0.0
    %1762 = vmatpush1.xpose.msra.mxu0 0.0
    %1763 = vmatprep.subr.mxu0 0.0
    %1764 = vmatpush1.xpose.msra.mxu0 0.0
    %1765 = vmatprep.subr.mxu0 0.0
    %1766 = vmatpush1.xpose.msra.mxu0 0.0
    %1767 = vmatprep.subr.mxu0 0.0
    %1768 = vmatpush1.xpose.msra.mxu0 0.0
    %1769 = vmatprep.subr.mxu0 0.0
    %1770 = vmatpush1.xpose.msra.mxu0 0.0
    %1771 = vmatprep.subr.mxu0 0.0
    %1772 = vmatpush1.xpose.msra.mxu0 0.0
    %1773 = vmatprep.subr.mxu0 0.0
    %1774 = vmatpush1.xpose.msra.mxu0 0.0
    %1775 = vmatprep.subr.mxu0 0.0
    %1776 = vmatpush1.xpose.msra.mxu0 0.0
    %1777 = vmatprep.subr.mxu0 0.0
    %1778 = vmatpush1.xpose.msra.mxu0 0.0
    %1779 = vmatprep.subr.mxu0 0.0
    %1780 = vmatpush1.xpose.msra.mxu0 0.0
    %1781 = vmatprep.subr.mxu0 0.0
    %1782 = vmatpush1.xpose.msra.mxu0 0.0
    %1783 = vmatprep.subr.mxu0 0.0
    %1784 = vmatpush1.xpose.msra.mxu0 0.0
    %1785 = vmatprep.subr.mxu0 0.0
    %1786 = vmatpush1.xpose.msra.mxu0 0.0
    %1787 = vmatprep.subr.mxu0 0.0
    %1788 = vmatpush1.xpose.msra.mxu0 0.0
    %1789 = vmatprep.subr.mxu0 0.0
    %1790 = vmatpush1.xpose.msra.mxu0 0.0
    %1791 = vmatprep.subr.mxu0 0.0
    %1792 = vmatpush1.xpose.msra.mxu0 0.0
    %1793 = vmatprep.subr.mxu0 0.0
    %1794 = vmatpush1.xpose.msra.mxu0 0.0
    %1795 = vmatprep.subr.mxu0 0.0
    %1796 = vmatpush1.xpose.msra.mxu0 0.0
    %1797 = vmatprep.subr.mxu0 0.0
    %1798 = vmatpush1.xpose.msra.mxu0 0.0
    %1799 = vmatprep.subr.mxu0 0.0
    %1800 = vmatpush1.xpose.msra.mxu0 0.0
    %1801 = vmatprep.subr.mxu0 0.0
    %1802 = vmatpush1.xpose.msra.mxu0 0.0
    %1803 = vmatprep.subr.mxu0 0.0
    %1804 = vmatpush1.xpose.msra.mxu0 0.0
    %1805 = vmatprep.subr.mxu0 0.0
    %1806 = vmatpush1.xpose.msra.mxu0 0.0
    %1807 = vmatprep.subr.mxu0 0.0
    %1808 = vmatpush1.xpose.msra.mxu0 0.0
    %1809 = vmatprep.subr.mxu0 0.0
    %1810 = vmatpush1.xpose.msra.mxu0 0.0
    %1811 = vmatprep.mubr.f32.mxu0 0.0
    %1812 = vmatmul.mubr.f32.gmra.mrb[0].mxu0 %v1739
    %v1813 = vpop.f32.mrb[0].mxu0
    %v1814 = vadd.f32 0.0, %v1813
    %v1815 = vpop.f32.mrb[0].mxu0
    %1816 = vmatprep.mubr.f32.mxu0 0.0
    %1817 = vmatmul.mubr.f32.gmra.mrb[0].mxu0 %v1741
    %v1818 = vpop.f32.mrb[0].mxu0
    %v1819 = vadd.f32 0.0, %v1818
    %v1820 = vpop.f32.mrb[0].mxu0
    %1821 = vdwg.mxu0
    %1822 = vrot.lane.b32.xlu0 %v1724, 96
    %v1823 = vpop.permute.xlu0 %1822
    %1824 = vrot.lane.b32.xlu0 %v1726, 96
    %v1825 = vpop.permute.xlu0 %1824
    %v1826 = vsel %vm211, %v1724, 0
    %v1828 = vsel %vm211, %v1726, 0
    %v1830 = vsel %vm211, %v1823, 0
    %v1832 = vsel %vm211, %v1825, 0
    %1834 = vmatprep.subr.mxu0 0.0
    %1835 = vmatpush1.xpose.msra.mxu0 %v1830
    %1836 = vmatprep.subr.mxu0 0.0
    %1837 = vmatpush1.xpose.msra.mxu0 %v1832
    %1838 = vmatprep.subr.mxu0 0.0
    %1839 = vmatpush1.xpose.msra.mxu0 0.0
    %1840 = vmatprep.subr.mxu0 0.0
    %1841 = vmatpush1.xpose.msra.mxu0 0.0
    %1842 = vmatprep.subr.mxu0 0.0
    %1843 = vmatpush1.xpose.msra.mxu0 0.0
    %1844 = vmatprep.subr.mxu0 0.0
    %1845 = vmatpush1.xpose.msra.mxu0 0.0
    %1846 = vmatprep.subr.mxu0 0.0
    %1847 = vmatpush1.xpose.msra.mxu0 0.0
    %1848 = vmatprep.subr.mxu0 0.0
    %1849 = vmatpush1.xpose.msra.mxu0 0.0
    %1850 = vmatprep.subr.mxu0 0.0
    %1851 = vmatpush1.xpose.msra.mxu0 0.0
    %1852 = vmatprep.subr.mxu0 0.0
    %1853 = vmatpush1.xpose.msra.mxu0 0.0
    %1854 = vmatprep.subr.mxu0 0.0
    %1855 = vmatpush1.xpose.msra.mxu0 0.0
    %1856 = vmatprep.subr.mxu0 0.0
    %1857 = vmatpush1.xpose.msra.mxu0 0.0
    %1858 = vmatprep.subr.mxu0 0.0
    %1859 = vmatpush1.xpose.msra.mxu0 0.0
    %1860 = vmatprep.subr.mxu0 0.0
    %1861 = vmatpush1.xpose.msra.mxu0 0.0
    %1862 = vmatprep.subr.mxu0 0.0
    %1863 = vmatpush1.xpose.msra.mxu0 0.0
    %1864 = vmatprep.subr.mxu0 0.0
    %1865 = vmatpush1.xpose.msra.mxu0 0.0
    %1866 = vmatprep.subr.mxu0 0.0
    %1867 = vmatpush1.xpose.msra.mxu0 0.0
    %1868 = vmatprep.subr.mxu0 0.0
    %1869 = vmatpush1.xpose.msra.mxu0 0.0
    %1870 = vmatprep.subr.mxu0 0.0
    %1871 = vmatpush1.xpose.msra.mxu0 0.0
    %1872 = vmatprep.subr.mxu0 0.0
    %1873 = vmatpush1.xpose.msra.mxu0 0.0
    %1874 = vmatprep.subr.mxu0 0.0
    %1875 = vmatpush1.xpose.msra.mxu0 0.0
    %1876 = vmatprep.subr.mxu0 0.0
    %1877 = vmatpush1.xpose.msra.mxu0 0.0
    %1878 = vmatprep.subr.mxu0 0.0
    %1879 = vmatpush1.xpose.msra.mxu0 0.0
    %1880 = vmatprep.subr.mxu0 0.0
    %1881 = vmatpush1.xpose.msra.mxu0 0.0
    %1882 = vmatprep.subr.mxu0 0.0
    %1883 = vmatpush1.xpose.msra.mxu0 0.0
    %1884 = vmatprep.subr.mxu0 0.0
    %1885 = vmatpush1.xpose.msra.mxu0 0.0
    %1886 = vmatprep.subr.mxu0 0.0
    %1887 = vmatpush1.xpose.msra.mxu0 0.0
    %1888 = vmatprep.subr.mxu0 0.0
    %1889 = vmatpush1.xpose.msra.mxu0 0.0
    %1890 = vmatprep.subr.mxu0 0.0
    %1891 = vmatpush1.xpose.msra.mxu0 0.0
    %1892 = vmatprep.subr.mxu0 0.0
    %1893 = vmatpush1.xpose.msra.mxu0 0.0
    %1894 = vmatprep.subr.mxu0 0.0
    %1895 = vmatpush1.xpose.msra.mxu0 0.0
    %1896 = vmatprep.subr.mxu0 0.0
    %1897 = vmatpush1.xpose.msra.mxu0 0.0
    %1898 = vmatprep.mubr.f32.mxu0 0.0
    %1899 = vmatmul.mubr.f32.gmra.mrb[0].mxu0 %v1826
    %v1900 = vpop.f32.mrb[0].mxu0
    %v1901 = vadd.f32 0.0, %v1900
    %v1902 = vpop.f32.mrb[0].mxu0
    %1903 = vmatprep.mubr.f32.mxu0 0.0
    %1904 = vmatmul.mubr.f32.gmra.mrb[0].mxu0 %v1828
    %v1905 = vpop.f32.mrb[0].mxu0
    %v1906 = vadd.f32 0.0, %v1905
    %v1907 = vpop.f32.mrb[0].mxu0
    %1908 = vdwg.mxu0
    %1909 = vrot.lane.b32.xlu0 %v1728, 96
    %v1910 = vpop.permute.xlu0 %1909
    %1911 = vrot.lane.b32.xlu0 %v1730, 96
    %v1912 = vpop.permute.xlu0 %1911
    %v1913 = vsel %vm211, %v1728, 0
    %v1915 = vsel %vm211, %v1730, 0
    %v1917 = vsel %vm211, %v1910, 0
    %v1919 = vsel %vm211, %v1912, 0
    %1921 = vmatprep.subr.mxu0 0.0
    %1922 = vmatpush1.xpose.msra.mxu0 %v1917
    %1923 = vmatprep.subr.mxu0 0.0
    %1924 = vmatpush1.xpose.msra.mxu0 %v1919
    %1925 = vmatprep.subr.mxu0 0.0
    %1926 = vmatpush1.xpose.msra.mxu0 0.0
    %1927 = vmatprep.subr.mxu0 0.0
    %1928 = vmatpush1.xpose.msra.mxu0 0.0
    %1929 = vmatprep.subr.mxu0 0.0
    %1930 = vmatpush1.xpose.msra.mxu0 0.0
    %1931 = vmatprep.subr.mxu0 0.0
    %1932 = vmatpush1.xpose.msra.mxu0 0.0
    %1933 = vmatprep.subr.mxu0 0.0
    %1934 = vmatpush1.xpose.msra.mxu0 0.0
    %1935 = vmatprep.subr.mxu0 0.0
    %1936 = vmatpush1.xpose.msra.mxu0 0.0
    %1937 = vmatprep.subr.mxu0 0.0
    %1938 = vmatpush1.xpose.msra.mxu0 0.0
    %1939 = vmatprep.subr.mxu0 0.0
    %1940 = vmatpush1.xpose.msra.mxu0 0.0
    %1941 = vmatprep.subr.mxu0 0.0
    %1942 = vmatpush1.xpose.msra.mxu0 0.0
    %1943 = vmatprep.subr.mxu0 0.0
    %1944 = vmatpush1.xpose.msra.mxu0 0.0
    %1945 = vmatprep.subr.mxu0 0.0
    %1946 = vmatpush1.xpose.msra.mxu0 0.0
    %1947 = vmatprep.subr.mxu0 0.0
    %1948 = vmatpush1.xpose.msra.mxu0 0.0
    %1949 = vmatprep.subr.mxu0 0.0
    %1950 = vmatpush1.xpose.msra.mxu0 0.0
    %1951 = vmatprep.subr.mxu0 0.0
    %1952 = vmatpush1.xpose.msra.mxu0 0.0
    %1953 = vmatprep.subr.mxu0 0.0
    %1954 = vmatpush1.xpose.msra.mxu0 0.0
    %1955 = vmatprep.subr.mxu0 0.0
    %1956 = vmatpush1.xpose.msra.mxu0 0.0
    %1957 = vmatprep.subr.mxu0 0.0
    %1958 = vmatpush1.xpose.msra.mxu0 0.0
    %1959 = vmatprep.subr.mxu0 0.0
    %1960 = vmatpush1.xpose.msra.mxu0 0.0
    %1961 = vmatprep.subr.mxu0 0.0
    %1962 = vmatpush1.xpose.msra.mxu0 0.0
    %1963 = vmatprep.subr.mxu0 0.0
    %1964 = vmatpush1.xpose.msra.mxu0 0.0
    %1965 = vmatprep.subr.mxu0 0.0
    %1966 = vmatpush1.xpose.msra.mxu0 0.0
    %1967 = vmatprep.subr.mxu0 0.0
    %1968 = vmatpush1.xpose.msra.mxu0 0.0
    %1969 = vmatprep.subr.mxu0 0.0
    %1970 = vmatpush1.xpose.msra.mxu0 0.0
    %1971 = vmatprep.subr.mxu0 0.0
    %1972 = vmatpush1.xpose.msra.mxu0 0.0
    %1973 = vmatprep.subr.mxu0 0.0
    %1974 = vmatpush1.xpose.msra.mxu0 0.0
    %1975 = vmatprep.subr.mxu0 0.0
    %1976 = vmatpush1.xpose.msra.mxu0 0.0
    %1977 = vmatprep.subr.mxu0 0.0
    %1978 = vmatpush1.xpose.msra.mxu0 0.0
    %1979 = vmatprep.subr.mxu0 0.0
    %1980 = vmatpush1.xpose.msra.mxu0 0.0
    %1981 = vmatprep.subr.mxu0 0.0
    %1982 = vmatpush1.xpose.msra.mxu0 0.0
    %1983 = vmatprep.subr.mxu0 0.0
    %1984 = vmatpush1.xpose.msra.mxu0 0.0
    %1985 = vmatprep.mubr.f32.mxu0 0.0
    %1986 = vmatmul.mubr.f32.gmra.mrb[0].mxu0 %v1913
    %v1987 = vpop.f32.mrb[0].mxu0
    %v1988 = vadd.f32 0.0, %v1987
    %v1989 = vpop.f32.mrb[0].mxu0
    %1990 = vmatprep.mubr.f32.mxu0 0.0
    %1991 = vmatmul.mubr.f32.gmra.mrb[0].mxu0 %v1915
    %v1992 = vpop.f32.mrb[0].mxu0
    %v1993 = vadd.f32 0.0, %v1992
    %v1994 = vpop.f32.mrb[0].mxu0
    %1995 = vdwg.mxu0
    %1996 = vrot.lane.b32.xlu0 %v1732, 96
    %v1997 = vpop.permute.xlu0 %1996
    %1998 = vrot.lane.b32.xlu0 %v1734, 96
    %v1999 = vpop.permute.xlu0 %1998
    %v2000 = vsel %vm211, %v1732, 0
    %v2002 = vsel %vm211, %v1734, 0
    %v2004 = vsel %vm211, %v1997, 0
    %v2006 = vsel %vm211, %v1999, 0
    %2008 = vmatprep.subr.mxu0 0.0
    %2009 = vmatpush1.xpose.msra.mxu0 %v2004
    %2010 = vmatprep.subr.mxu0 0.0
    %2011 = vmatpush1.xpose.msra.mxu0 %v2006
    %2012 = vmatprep.subr.mxu0 0.0
    %2013 = vmatpush1.xpose.msra.mxu0 0.0
    %2014 = vmatprep.subr.mxu0 0.0
    %2015 = vmatpush1.xpose.msra.mxu0 0.0
    %2016 = vmatprep.subr.mxu0 0.0
    %2017 = vmatpush1.xpose.msra.mxu0 0.0
    %2018 = vmatprep.subr.mxu0 0.0
    %2019 = vmatpush1.xpose.msra.mxu0 0.0
    %2020 = vmatprep.subr.mxu0 0.0
    %2021 = vmatpush1.xpose.msra.mxu0 0.0
    %2022 = vmatprep.subr.mxu0 0.0
    %2023 = vmatpush1.xpose.msra.mxu0 0.0
    %2024 = vmatprep.subr.mxu0 0.0
    %2025 = vmatpush1.xpose.msra.mxu0 0.0
    %2026 = vmatprep.subr.mxu0 0.0
    %2027 = vmatpush1.xpose.msra.mxu0 0.0
    %2028 = vmatprep.subr.mxu0 0.0
    %2029 = vmatpush1.xpose.msra.mxu0 0.0
    %2030 = vmatprep.subr.mxu0 0.0
    %2031 = vmatpush1.xpose.msra.mxu0 0.0
    %2032 = vmatprep.subr.mxu0 0.0
    %2033 = vmatpush1.xpose.msra.mxu0 0.0
    %2034 = vmatprep.subr.mxu0 0.0
    %2035 = vmatpush1.xpose.msra.mxu0 0.0
    %2036 = vmatprep.subr.mxu0 0.0
    %2037 = vmatpush1.xpose.msra.mxu0 0.0
    %2038 = vmatprep.subr.mxu0 0.0
    %2039 = vmatpush1.xpose.msra.mxu0 0.0
    %2040 = vmatprep.subr.mxu0 0.0
    %2041 = vmatpush1.xpose.msra.mxu0 0.0
    %2042 = vmatprep.subr.mxu0 0.0
    %2043 = vmatpush1.xpose.msra.mxu0 0.0
    %2044 = vmatprep.subr.mxu0 0.0
    %2045 = vmatpush1.xpose.msra.mxu0 0.0
    %2046 = vmatprep.subr.mxu0 0.0
    %2047 = vmatpush1.xpose.msra.mxu0 0.0
    %2048 = vmatprep.subr.mxu0 0.0
    %2049 = vmatpush1.xpose.msra.mxu0 0.0
    %2050 = vmatprep.subr.mxu0 0.0
    %2051 = vmatpush1.xpose.msra.mxu0 0.0
    %2052 = vmatprep.subr.mxu0 0.0
    %2053 = vmatpush1.xpose.msra.mxu0 0.0
    %2054 = vmatprep.subr.mxu0 0.0
    %2055 = vmatpush1.xpose.msra.mxu0 0.0
    %2056 = vmatprep.subr.mxu0 0.0
    %2057 = vmatpush1.xpose.msra.mxu0 0.0
    %2058 = vmatprep.subr.mxu0 0.0
    %2059 = vmatpush1.xpose.msra.mxu0 0.0
    %2060 = vmatprep.subr.mxu0 0.0
    %2061 = vmatpush1.xpose.msra.mxu0 0.0
    %2062 = vmatprep.subr.mxu0 0.0
    %2063 = vmatpush1.xpose.msra.mxu0 0.0
    %2064 = vmatprep.subr.mxu0 0.0
    %2065 = vmatpush1.xpose.msra.mxu0 0.0
    %2066 = vmatprep.subr.mxu0 0.0
    %2067 = vmatpush1.xpose.msra.mxu0 0.0
    %2068 = vmatprep.subr.mxu0 0.0
    %2069 = vmatpush1.xpose.msra.mxu0 0.0
    %2070 = vmatprep.subr.mxu0 0.0
    %2071 = vmatpush1.xpose.msra.mxu0 0.0
    %2072 = vmatprep.mubr.f32.mxu0 0.0
    %2073 = vmatmul.mubr.f32.gmra.mrb[0].mxu0 %v2000
    %v2074 = vpop.f32.mrb[0].mxu0
    %v2075 = vadd.f32 0.0, %v2074
    %v2076 = vpop.f32.mrb[0].mxu0
    %2077 = vmatprep.mubr.f32.mxu0 0.0
    %2078 = vmatmul.mubr.f32.gmra.mrb[0].mxu0 %v2002
    %v2079 = vpop.f32.mrb[0].mxu0
    %v2080 = vadd.f32 0.0, %v2079
    %v2081 = vpop.f32.mrb[0].mxu0
    %2082 = vdwg.mxu0
    %v2083 = vmul.f32 %v1814, 0.35355338
    %v2084 = vmul.f32 %v1819, 0.35355338
    %v2085 = vmul.f32 %v1901, 0.35355338
    %v2086 = vmul.f32 %v1906, 0.35355338
    %v2087 = vmul.f32 %v1988, 0.35355338
    %v2088 = vmul.f32 %v1993, 0.35355338
    %v2089 = vmul.f32 %v2075, 0.35355338
    %v2090 = vmul.f32 %v2080, 0.35355338
    %v2091 = vadd.f32 %v2083, %v84
    %v2092 = vadd.f32 %v2084, %v85
    %v2093 = vadd.f32 %v2085, %v84
    %v2094 = vadd.f32 %v2086, %v85
    %v2095 = vadd.f32 %v2087, %v84
    %v2096 = vadd.f32 %v2088, %v85
    %v2097 = vadd.f32 %v2089, %v84
    %v2098 = vadd.f32 %v2090, %v85
    %v2099 = vsel %vm572, %v2091, -inf
    %2100 = vmax.xlane.f32.xlu0 %v2099
    %v2101 = vpop.xlane.xlu0 %2100
    %v2102 = vsel %vm572, %v2092, -inf
    %2103 = vmax.xlane.f32.xlu0 %v2102
    %v2104 = vpop.xlane.xlu0 %2103
    %v2105 = vsel %vm572, %v2093, -inf
    %2106 = vmax.xlane.f32.xlu0 %v2105
    %v2107 = vpop.xlane.xlu0 %2106
    %v2108 = vsel %vm572, %v2094, -inf
    %2109 = vmax.xlane.f32.xlu0 %v2108
    %v2110 = vpop.xlane.xlu0 %2109
    %v2111 = vsel %vm572, %v2095, -inf
    %2112 = vmax.xlane.f32.xlu0 %v2111
    %v2113 = vpop.xlane.xlu0 %2112
    %v2114 = vsel %vm572, %v2096, -inf
    %2115 = vmax.xlane.f32.xlu0 %v2114
    %v2116 = vpop.xlane.xlu0 %2115
    %v2117 = vsel %vm572, %v2097, -inf
    %2118 = vmax.xlane.f32.xlu0 %v2117
    %v2119 = vpop.xlane.xlu0 %2118
    %v2120 = vsel %vm572, %v2098, -inf
    %2121 = vmax.xlane.f32.xlu0 %v2120
    %v2122 = vpop.xlane.xlu0 %2121
    %v2123 = vsub.f32 %v2091, %v2101
    %v2124 = vsub.f32 %v2092, %v2104
    %v2125 = vsub.f32 %v2093, %v2107
    %v2126 = vsub.f32 %v2094, %v2110
    %v2127 = vsub.f32 %v2095, %v2113
    %v2128 = vsub.f32 %v2096, %v2116
    %v2129 = vsub.f32 %v2097, %v2119
    %v2130 = vsub.f32 %v2098, %v2122
    %v2131 = vmul.f32 %v2123, 1.442695
    %v2132 = vpow.pop %v2131
    %v2133 = vmul.f32 %v2124, 1.442695
    %v2134 = vpow.pop %v2133
    %v2135 = vmul.f32 %v2125, 1.442695
    %v2136 = vpow.pop %v2135
    %v2137 = vmul.f32 %v2126, 1.442695
    %v2138 = vpow.pop %v2137
    %v2139 = vmul.f32 %v2127, 1.442695
    %v2140 = vpow.pop %v2139
    %v2141 = vmul.f32 %v2128, 1.442695
    %v2142 = vpow.pop %v2141
    %v2143 = vmul.f32 %v2129, 1.442695
    %v2144 = vpow.pop %v2143
    %v2145 = vmul.f32 %v2130, 1.442695
    %v2146 = vpow.pop %v2145
    %v2147 = vsel %vm572, %v2132, 0.0
    %2148 = vadd.xlane.f32.xlu0 %v2147
    %v2149 = vpop.xlane.xlu0 %2148
    %v2150 = vsel %vm572, %v2134, 0.0
    %2151 = vadd.xlane.f32.xlu0 %v2150
    %v2152 = vpop.xlane.xlu0 %2151
    %v2153 = vsel %vm572, %v2136, 0.0
    %2154 = vadd.xlane.f32.xlu0 %v2153
    %v2155 = vpop.xlane.xlu0 %2154
    %v2156 = vsel %vm572, %v2138, 0.0
    %2157 = vadd.xlane.f32.xlu0 %v2156
    %v2158 = vpop.xlane.xlu0 %2157
    %v2159 = vsel %vm572, %v2140, 0.0
    %2160 = vadd.xlane.f32.xlu0 %v2159
    %v2161 = vpop.xlane.xlu0 %2160
    %v2162 = vsel %vm572, %v2142, 0.0
    %2163 = vadd.xlane.f32.xlu0 %v2162
    %v2164 = vpop.xlane.xlu0 %2163
    %v2165 = vsel %vm572, %v2144, 0.0
    %2166 = vadd.xlane.f32.xlu0 %v2165
    %v2167 = vpop.xlane.xlu0 %2166
    %v2168 = vsel %vm572, %v2146, 0.0
    %2169 = vadd.xlane.f32.xlu0 %v2168
    %v2170 = vpop.xlane.xlu0 %2169
    %v2171 = vrcp.pop %v2149
    %v2172 = vmul.f32 %v2132, %v2171
    %v2173 = vrcp.pop %v2152
    %v2174 = vmul.f32 %v2134, %v2173
    %v2175 = vrcp.pop %v2155
    %v2176 = vmul.f32 %v2136, %v2175
    %v2177 = vrcp.pop %v2158
    %v2178 = vmul.f32 %v2138, %v2177
    %v2179 = vrcp.pop %v2161
    %v2180 = vmul.f32 %v2140, %v2179
    %v2181 = vrcp.pop %v2164
    %v2182 = vmul.f32 %v2142, %v2181
    %v2183 = vrcp.pop %v2167
    %v2184 = vmul.f32 %v2144, %v2183
    %v2185 = vrcp.pop %v2170
    %v2186 = vmul.f32 %v2146, %v2185
    %2187 = vrot.lane.b32.xlu0 %v1713, 64
    %v2188 = vpop.permute.xlu0 %2187
    %2189 = vrot.lane.b32.xlu0 %v1718, 64
    %v2190 = vpop.permute.xlu0 %2189
    %v2194 = vsel %vm572, %v2172, 0
    %v2197 = vsel %vm572, %v2174, 0
    %2199 = vmatprep.subr.mxu0 0.0
    %2200 = vmatpush1.msra.mxu0 %v2188
    %2201 = vmatprep.subr.mxu0 0.0
    %2202 = vmatpush1.msra.mxu0 %v2190
    %2203 = vmatprep.subr.mxu0 0.0
    %2204 = vmatpush1.msra.mxu0 0.0
    %2205 = vmatprep.subr.mxu0 0.0
    %2206 = vmatpush1.msra.mxu0 0.0
    %2207 = vmatprep.subr.mxu0 0.0
    %2208 = vmatpush1.msra.mxu0 0.0
    %2209 = vmatprep.subr.mxu0 0.0
    %2210 = vmatpush1.msra.mxu0 0.0
    %2211 = vmatprep.subr.mxu0 0.0
    %2212 = vmatpush1.msra.mxu0 0.0
    %2213 = vmatprep.subr.mxu0 0.0
    %2214 = vmatpush1.msra.mxu0 0.0
    %2215 = vmatprep.subr.mxu0 0.0
    %2216 = vmatpush1.msra.mxu0 0.0
    %2217 = vmatprep.subr.mxu0 0.0
    %2218 = vmatpush1.msra.mxu0 0.0
    %2219 = vmatprep.subr.mxu0 0.0
    %2220 = vmatpush1.msra.mxu0 0.0
    %2221 = vmatprep.subr.mxu0 0.0
    %2222 = vmatpush1.msra.mxu0 0.0
    %2223 = vmatprep.subr.mxu0 0.0
    %2224 = vmatpush1.msra.mxu0 0.0
    %2225 = vmatprep.subr.mxu0 0.0
    %2226 = vmatpush1.msra.mxu0 0.0
    %2227 = vmatprep.subr.mxu0 0.0
    %2228 = vmatpush1.msra.mxu0 0.0
    %2229 = vmatprep.subr.mxu0 0.0
    %2230 = vmatpush1.msra.mxu0 0.0
    %2231 = vmatprep.subr.mxu0 0.0
    %2232 = vmatpush1.msra.mxu0 0.0
    %2233 = vmatprep.subr.mxu0 0.0
    %2234 = vmatpush1.msra.mxu0 0.0
    %2235 = vmatprep.subr.mxu0 0.0
    %2236 = vmatpush1.msra.mxu0 0.0
    %2237 = vmatprep.subr.mxu0 0.0
    %2238 = vmatpush1.msra.mxu0 0.0
    %2239 = vmatprep.subr.mxu0 0.0
    %2240 = vmatpush1.msra.mxu0 0.0
    %2241 = vmatprep.subr.mxu0 0.0
    %2242 = vmatpush1.msra.mxu0 0.0
    %2243 = vmatprep.subr.mxu0 0.0
    %2244 = vmatpush1.msra.mxu0 0.0
    %2245 = vmatprep.subr.mxu0 0.0
    %2246 = vmatpush1.msra.mxu0 0.0
    %2247 = vmatprep.subr.mxu0 0.0
    %2248 = vmatpush1.msra.mxu0 0.0
    %2249 = vmatprep.subr.mxu0 0.0
    %2250 = vmatpush1.msra.mxu0 0.0
    %2251 = vmatprep.subr.mxu0 0.0
    %2252 = vmatpush1.msra.mxu0 0.0
    %2253 = vmatprep.subr.mxu0 0.0
    %2254 = vmatpush1.msra.mxu0 0.0
    %2255 = vmatprep.subr.mxu0 0.0
    %2256 = vmatpush1.msra.mxu0 0.0
    %2257 = vmatprep.subr.mxu0 0.0
    %2258 = vmatpush1.msra.mxu0 0.0
    %2259 = vmatprep.subr.mxu0 0.0
    %2260 = vmatpush1.msra.mxu0 0.0
    %2261 = vmatprep.subr.mxu0 0.0
    %2262 = vmatpush1.msra.mxu0 0.0
    %2263 = vmatprep.mubr.f32.mxu0 0.0
    %2264 = vmatmul.mubr.f32.gmra.mrb[0].mxu0 %v2194
    %v2265 = vpop.f32.mrb[0].mxu0
    %v2266 = vadd.f32 0.0, %v2265
    %v2267 = vpop.f32.mrb[0].mxu0
    %2268 = vmatprep.mubr.f32.mxu0 0.0
    %2269 = vmatmul.mubr.f32.gmra.mrb[0].mxu0 %v2197
    %v2270 = vpop.f32.mrb[0].mxu0
    %v2271 = vadd.f32 0.0, %v2270
    %v2272 = vpop.f32.mrb[0].mxu0
    %2273 = vdwg.mxu0
    %2274 = vrot.lane.b32.xlu0 %v1724, 64
    %v2275 = vpop.permute.xlu0 %2274
    %2276 = vrot.lane.b32.xlu0 %v1726, 64
    %v2277 = vpop.permute.xlu0 %2276
    %v2281 = vsel %vm572, %v2176, 0
    %v2284 = vsel %vm572, %v2178, 0
    %2286 = vmatprep.subr.mxu0 0.0
    %2287 = vmatpush1.msra.mxu0 %v2275
    %2288 = vmatprep.subr.mxu0 0.0
    %2289 = vmatpush1.msra.mxu0 %v2277
    %2290 = vmatprep.subr.mxu0 0.0
    %2291 = vmatpush1.msra.mxu0 0.0
    %2292 = vmatprep.subr.mxu0 0.0
    %2293 = vmatpush1.msra.mxu0 0.0
    %2294 = vmatprep.subr.mxu0 0.0
    %2295 = vmatpush1.msra.mxu0 0.0
    %2296 = vmatprep.subr.mxu0 0.0
    %2297 = vmatpush1.msra.mxu0 0.0
    %2298 = vmatprep.subr.mxu0 0.0
    %2299 = vmatpush1.msra.mxu0 0.0
    %2300 = vmatprep.subr.mxu0 0.0
    %2301 = vmatpush1.msra.mxu0 0.0
    %2302 = vmatprep.subr.mxu0 0.0
    %2303 = vmatpush1.msra.mxu0 0.0
    %2304 = vmatprep.subr.mxu0 0.0
    %2305 = vmatpush1.msra.mxu0 0.0
    %2306 = vmatprep.subr.mxu0 0.0
    %2307 = vmatpush1.msra.mxu0 0.0
    %2308 = vmatprep.subr.mxu0 0.0
    %2309 = vmatpush1.msra.mxu0 0.0
    %2310 = vmatprep.subr.mxu0 0.0
    %2311 = vmatpush1.msra.mxu0 0.0
    %2312 = vmatprep.subr.mxu0 0.0
    %2313 = vmatpush1.msra.mxu0 0.0
    %2314 = vmatprep.subr.mxu0 0.0
    %2315 = vmatpush1.msra.mxu0 0.0
    %2316 = vmatprep.subr.mxu0 0.0
    %2317 = vmatpush1.msra.mxu0 0.0
    %2318 = vmatprep.subr.mxu0 0.0
    %2319 = vmatpush1.msra.mxu0 0.0
    %2320 = vmatprep.subr.mxu0 0.0
    %2321 = vmatpush1.msra.mxu0 0.0
    %2322 = vmatprep.subr.mxu0 0.0
    %2323 = vmatpush1.msra.mxu0 0.0
    %2324 = vmatprep.subr.mxu0 0.0
    %2325 = vmatpush1.msra.mxu0 0.0
    %2326 = vmatprep.subr.mxu0 0.0
    %2327 = vmatpush1.msra.mxu0 0.0
    %2328 = vmatprep.subr.mxu0 0.0
    %2329 = vmatpush1.msra.mxu0 0.0
    %2330 = vmatprep.subr.mxu0 0.0
    %2331 = vmatpush1.msra.mxu0 0.0
    %2332 = vmatprep.subr.mxu0 0.0
    %2333 = vmatpush1.msra.mxu0 0.0
    %2334 = vmatprep.subr.mxu0 0.0
    %2335 = vmatpush1.msra.mxu0 0.0
    %2336 = vmatprep.subr.mxu0 0.0
    %2337 = vmatpush1.msra.mxu0 0.0
    %2338 = vmatprep.subr.mxu0 0.0
    %2339 = vmatpush1.msra.mxu0 0.0
    %2340 = vmatprep.subr.mxu0 0.0
    %2341 = vmatpush1.msra.mxu0 0.0
    %2342 = vmatprep.subr.mxu0 0.0
    %2343 = vmatpush1.msra.mxu0 0.0
    %2344 = vmatprep.subr.mxu0 0.0
    %2345 = vmatpush1.msra.mxu0 0.0
    %2346 = vmatprep.subr.mxu0 0.0
    %2347 = vmatpush1.msra.mxu0 0.0
    %2348 = vmatprep.subr.mxu0 0.0
    %2349 = vmatpush1.msra.mxu0 0.0
    %2350 = vmatprep.mubr.f32.mxu0 0.0
    %2351 = vmatmul.mubr.f32.gmra.mrb[0].mxu0 %v2281
    %v2352 = vpop.f32.mrb[0].mxu0
    %v2353 = vadd.f32 0.0, %v2352
    %v2354 = vpop.f32.mrb[0].mxu0
    %2355 = vmatprep.mubr.f32.mxu0 0.0
    %2356 = vmatmul.mubr.f32.gmra.mrb[0].mxu0 %v2284
    %v2357 = vpop.f32.mrb[0].mxu0
    %v2358 = vadd.f32 0.0, %v2357
    %v2359 = vpop.f32.mrb[0].mxu0
    %2360 = vdwg.mxu0
    %2361 = vrot.lane.b32.xlu0 %v1728, 64
    %v2362 = vpop.permute.xlu0 %2361
    %2363 = vrot.lane.b32.xlu0 %v1730, 64
    %v2364 = vpop.permute.xlu0 %2363
    %v2368 = vsel %vm572, %v2180, 0
    %v2371 = vsel %vm572, %v2182, 0
    %2373 = vmatprep.subr.mxu0 0.0
    %2374 = vmatpush1.msra.mxu0 %v2362
    %2375 = vmatprep.subr.mxu0 0.0
    %2376 = vmatpush1.msra.mxu0 %v2364
    %2377 = vmatprep.subr.mxu0 0.0
    %2378 = vmatpush1.msra.mxu0 0.0
    %2379 = vmatprep.subr.mxu0 0.0
    %2380 = vmatpush1.msra.mxu0 0.0
    %2381 = vmatprep.subr.mxu0 0.0
    %2382 = vmatpush1.msra.mxu0 0.0
    %2383 = vmatprep.subr.mxu0 0.0
    %2384 = vmatpush1.msra.mxu0 0.0
    %2385 = vmatprep.subr.mxu0 0.0
    %2386 = vmatpush1.msra.mxu0 0.0
    %2387 = vmatprep.subr.mxu0 0.0
    %2388 = vmatpush1.msra.mxu0 0.0
    %2389 = vmatprep.subr.mxu0 0.0
    %2390 = vmatpush1.msra.mxu0 0.0
    %2391 = vmatprep.subr.mxu0 0.0
    %2392 = vmatpush1.msra.mxu0 0.0
    %2393 = vmatprep.subr.mxu0 0.0
    %2394 = vmatpush1.msra.mxu0 0.0
    %2395 = vmatprep.subr.mxu0 0.0
    %2396 = vmatpush1.msra.mxu0 0.0
    %2397 = vmatprep.subr.mxu0 0.0
    %2398 = vmatpush1.msra.mxu0 0.0
    %2399 = vmatprep.subr.mxu0 0.0
    %2400 = vmatpush1.msra.mxu0 0.0
    %2401 = vmatprep.subr.mxu0 0.0
    %2402 = vmatpush1.msra.mxu0 0.0
    %2403 = vmatprep.subr.mxu0 0.0
    %2404 = vmatpush1.msra.mxu0 0.0
    %2405 = vmatprep.subr.mxu0 0.0
    %2406 = vmatpush1.msra.mxu0 0.0
    %2407 = vmatprep.subr.mxu0 0.0
    %2408 = vmatpush1.msra.mxu0 0.0
    %2409 = vmatprep.subr.mxu0 0.0
    %2410 = vmatpush1.msra.mxu0 0.0
    %2411 = vmatprep.subr.mxu0 0.0
    %2412 = vmatpush1.msra.mxu0 0.0
    %2413 = vmatprep.subr.mxu0 0.0
    %2414 = vmatpush1.msra.mxu0 0.0
    %2415 = vmatprep.subr.mxu0 0.0
    %2416 = vmatpush1.msra.mxu0 0.0
    %2417 = vmatprep.subr.mxu0 0.0
    %2418 = vmatpush1.msra.mxu0 0.0
    %2419 = vmatprep.subr.mxu0 0.0
    %2420 = vmatpush1.msra.mxu0 0.0
    %2421 = vmatprep.subr.mxu0 0.0
    %2422 = vmatpush1.msra.mxu0 0.0
    %2423 = vmatprep.subr.mxu0 0.0
    %2424 = vmatpush1.msra.mxu0 0.0
    %2425 = vmatprep.subr.mxu0 0.0
    %2426 = vmatpush1.msra.mxu0 0.0
    %2427 = vmatprep.subr.mxu0 0.0
    %2428 = vmatpush1.msra.mxu0 0.0
    %2429 = vmatprep.subr.mxu0 0.0
    %2430 = vmatpush1.msra.mxu0 0.0
    %2431 = vmatprep.subr.mxu0 0.0
    %2432 = vmatpush1.msra.mxu0 0.0
    %2433 = vmatprep.subr.mxu0 0.0
    %2434 = vmatpush1.msra.mxu0 0.0
    %2435 = vmatprep.subr.mxu0 0.0
    %2436 = vmatpush1.msra.mxu0 0.0
    %2437 = vmatprep.mubr.f32.mxu0 0.0
    %2438 = vmatmul.mubr.f32.gmra.mrb[0].mxu0 %v2368
    %v2439 = vpop.f32.mrb[0].mxu0
    %v2440 = vadd.f32 0.0, %v2439
    %v2441 = vpop.f32.mrb[0].mxu0
    %2442 = vmatprep.mubr.f32.mxu0 0.0
    %2443 = vmatmul.mubr.f32.gmra.mrb[0].mxu0 %v2371
    %v2444 = vpop.f32.mrb[0].mxu0
    %v2445 = vadd.f32 0.0, %v2444
    %v2446 = vpop.f32.mrb[0].mxu0
    %2447 = vdwg.mxu0
    %2448 = vrot.lane.b32.xlu0 %v1732, 64
    %v2449 = vpop.permute.xlu0 %2448
    %2450 = vrot.lane.b32.xlu0 %v1734, 64
    %v2451 = vpop.permute.xlu0 %2450
    %v2455 = vsel %vm572, %v2184, 0
    %v2458 = vsel %vm572, %v2186, 0
    %2460 = vmatprep.subr.mxu0 0.0
    %2461 = vmatpush1.msra.mxu0 %v2449
    %2462 = vmatprep.subr.mxu0 0.0
    %2463 = vmatpush1.msra.mxu0 %v2451
    %2464 = vmatprep.subr.mxu0 0.0
    %2465 = vmatpush1.msra.mxu0 0.0
    %2466 = vmatprep.subr.mxu0 0.0
    %2467 = vmatpush1.msra.mxu0 0.0
    %2468 = vmatprep.subr.mxu0 0.0
    %2469 = vmatpush1.msra.mxu0 0.0
    %2470 = vmatprep.subr.mxu0 0.0
    %2471 = vmatpush1.msra.mxu0 0.0
    %2472 = vmatprep.subr.mxu0 0.0
    %2473 = vmatpush1.msra.mxu0 0.0
    %2474 = vmatprep.subr.mxu0 0.0
    %2475 = vmatpush1.msra.mxu0 0.0
    %2476 = vmatprep.subr.mxu0 0.0
    %2477 = vmatpush1.msra.mxu0 0.0
    %2478 = vmatprep.subr.mxu0 0.0
    %2479 = vmatpush1.msra.mxu0 0.0
    %2480 = vmatprep.subr.mxu0 0.0
    %2481 = vmatpush1.msra.mxu0 0.0
    %2482 = vmatprep.subr.mxu0 0.0
    %2483 = vmatpush1.msra.mxu0 0.0
    %2484 = vmatprep.subr.mxu0 0.0
    %2485 = vmatpush1.msra.mxu0 0.0
    %2486 = vmatprep.subr.mxu0 0.0
    %2487 = vmatpush1.msra.mxu0 0.0
    %2488 = vmatprep.subr.mxu0 0.0
    %2489 = vmatpush1.msra.mxu0 0.0
    %2490 = vmatprep.subr.mxu0 0.0
    %2491 = vmatpush1.msra.mxu0 0.0
    %2492 = vmatprep.subr.mxu0 0.0
    %2493 = vmatpush1.msra.mxu0 0.0
    %2494 = vmatprep.subr.mxu0 0.0
    %2495 = vmatpush1.msra.mxu0 0.0
    %2496 = vmatprep.subr.mxu0 0.0
    %2497 = vmatpush1.msra.mxu0 0.0
    %2498 = vmatprep.subr.mxu0 0.0
    %2499 = vmatpush1.msra.mxu0 0.0
    %2500 = vmatprep.subr.mxu0 0.0
    %2501 = vmatpush1.msra.mxu0 0.0
    %2502 = vmatprep.subr.mxu0 0.0
    %2503 = vmatpush1.msra.mxu0 0.0
    %2504 = vmatprep.subr.mxu0 0.0
    %2505 = vmatpush1.msra.mxu0 0.0
    %2506 = vmatprep.subr.mxu0 0.0
    %2507 = vmatpush1.msra.mxu0 0.0
    %2508 = vmatprep.subr.mxu0 0.0
    %2509 = vmatpush1.msra.mxu0 0.0
    %2510 = vmatprep.subr.mxu0 0.0
    %2511 = vmatpush1.msra.mxu0 0.0
    %2512 = vmatprep.subr.mxu0 0.0
    %2513 = vmatpush1.msra.mxu0 0.0
    %2514 = vmatprep.subr.mxu0 0.0
    %2515 = vmatpush1.msra.mxu0 0.0
    %2516 = vmatprep.subr.mxu0 0.0
    %2517 = vmatpush1.msra.mxu0 0.0
    %2518 = vmatprep.subr.mxu0 0.0
    %2519 = vmatpush1.msra.mxu0 0.0
    %2520 = vmatprep.subr.mxu0 0.0
    %2521 = vmatpush1.msra.mxu0 0.0
    %2522 = vmatprep.subr.mxu0 0.0
    %2523 = vmatpush1.msra.mxu0 0.0
    %2524 = vmatprep.mubr.f32.mxu0 0.0
    %2525 = vmatmul.mubr.f32.gmra.mrb[0].mxu0 %v2455
    %v2526 = vpop.f32.mrb[0].mxu0
    %v2527 = vadd.f32 0.0, %v2526
    %v2528 = vpop.f32.mrb[0].mxu0
    %2529 = vmatprep.mubr.f32.mxu0 0.0
    %2530 = vmatmul.mubr.f32.gmra.mrb[0].mxu0 %v2458
    %v2531 = vpop.f32.mrb[0].mxu0
    %v2532 = vadd.f32 0.0, %v2531
    %v2533 = vpop.f32.mrb[0].mxu0
    %2534 = vdwg.mxu0
    %v2536 = vsel %vm211, %v2266, 0
    %v2539 = vsel %vm211, %v2271, 0
    %2541 = vmatprep.subr.mxu0 0.0
    %2542 = vmatpush1.msra.mxu0 %v1618
    %2543 = vmatprep.subr.mxu0 0.0
    %2544 = vmatpush1.msra.mxu0 0.0
    %2545 = vmatprep.subr.mxu0 0.0
    %2546 = vmatpush1.msra.mxu0 0.0
    %2547 = vmatprep.subr.mxu0 0.0
    %2548 = vmatpush1.msra.mxu0 0.0
    %2549 = vmatprep.subr.mxu0 0.0
    %2550 = vmatpush1.msra.mxu0 0.0
    %2551 = vmatprep.subr.mxu0 0.0
    %2552 = vmatpush1.msra.mxu0 0.0
    %2553 = vmatprep.subr.mxu0 0.0
    %2554 = vmatpush1.msra.mxu0 0.0
    %2555 = vmatprep.subr.mxu0 0.0
    %2556 = vmatpush1.msra.mxu0 0.0
    %2557 = vmatprep.subr.mxu0 0.0
    %2558 = vmatpush1.msra.mxu0 0.0
    %2559 = vmatprep.subr.mxu0 0.0
    %2560 = vmatpush1.msra.mxu0 0.0
    %2561 = vmatprep.subr.mxu0 0.0
    %2562 = vmatpush1.msra.mxu0 0.0
    %2563 = vmatprep.subr.mxu0 0.0
    %2564 = vmatpush1.msra.mxu0 0.0
    %2565 = vmatprep.subr.mxu0 0.0
    %2566 = vmatpush1.msra.mxu0 0.0
    %2567 = vmatprep.subr.mxu0 0.0
    %2568 = vmatpush1.msra.mxu0 0.0
    %2569 = vmatprep.subr.mxu0 0.0
    %2570 = vmatpush1.msra.mxu0 0.0
    %2571 = vmatprep.subr.mxu0 0.0
    %2572 = vmatpush1.msra.mxu0 0.0
    %2573 = vmatprep.subr.mxu0 0.0
    %2574 = vmatpush1.msra.mxu0 0.0
    %2575 = vmatprep.subr.mxu0 0.0
    %2576 = vmatpush1.msra.mxu0 0.0
    %2577 = vmatprep.subr.mxu0 0.0
    %2578 = vmatpush1.msra.mxu0 0.0
    %2579 = vmatprep.subr.mxu0 0.0
    %2580 = vmatpush1.msra.mxu0 0.0
    %2581 = vmatprep.subr.mxu0 0.0
    %2582 = vmatpush1.msra.mxu0 0.0
    %2583 = vmatprep.subr.mxu0 0.0
    %2584 = vmatpush1.msra.mxu0 0.0
    %2585 = vmatprep.subr.mxu0 0.0
    %2586 = vmatpush1.msra.mxu0 0.0
    %2587 = vmatprep.subr.mxu0 0.0
    %2588 = vmatpush1.msra.mxu0 0.0
    %2589 = vmatprep.subr.mxu0 0.0
    %2590 = vmatpush1.msra.mxu0 0.0
    %2591 = vmatprep.subr.mxu0 0.0
    %2592 = vmatpush1.msra.mxu0 0.0
    %2593 = vmatprep.subr.mxu0 0.0
    %2594 = vmatpush1.msra.mxu0 0.0
    %2595 = vmatprep.subr.mxu0 0.0
    %2596 = vmatpush1.msra.mxu0 0.0
    %2597 = vmatprep.subr.mxu0 0.0
    %2598 = vmatpush1.msra.mxu0 0.0
    %2599 = vmatprep.subr.mxu0 0.0
    %2600 = vmatpush1.msra.mxu0 0.0
    %2601 = vmatprep.subr.mxu0 0.0
    %2602 = vmatpush1.msra.mxu0 0.0
    %2603 = vmatprep.subr.mxu0 0.0
    %2604 = vmatpush1.msra.mxu0 0.0
    %2605 = vmatprep.mubr.f32.mxu0 0.0
    %2606 = vmatmul.mubr.f32.gmra.mrb[0].mxu0 %v2536
    %v2607 = vpop.f32.mrb[0].mxu0
    %v2608 = vadd.f32 0.0, %v2607
    %v2609 = vpop.f32.mrb[0].mxu0
    %2610 = vmatprep.mubr.f32.mxu0 0.0
    %2611 = vmatmul.mubr.f32.gmra.mrb[0].mxu0 %v2539
    %v2612 = vpop.f32.mrb[0].mxu0
    %v2613 = vadd.f32 0.0, %v2612
    %v2614 = vpop.f32.mrb[0].mxu0
    %2615 = vdwg.mxu0
    %v2616 = vlaneseq
    %v2617 = vshrl.u32 %v2616, 7
    %v2618 = vsub.s32 1, %v2617
    %v2619 = vrot.slane %v1635, %v2618
    %v2620 = vadd.f32 %v2619, %v2608
    %v2621 = vadd.f32 %v2619, %v2613
    %v2623 = vsel %vm211, %v2353, 0
    %v2626 = vsel %vm211, %v2358, 0
    %2628 = vmatprep.subr.mxu0 0.0
    %2629 = vmatpush1.msra.mxu0 %v1619
    %2630 = vmatprep.subr.mxu0 0.0
    %2631 = vmatpush1.msra.mxu0 0.0
    %2632 = vmatprep.subr.mxu0 0.0
    %2633 = vmatpush1.msra.mxu0 0.0
    %2634 = vmatprep.subr.mxu0 0.0
    %2635 = vmatpush1.msra.mxu0 0.0
    %2636 = vmatprep.subr.mxu0 0.0
    %2637 = vmatpush1.msra.mxu0 0.0
    %2638 = vmatprep.subr.mxu0 0.0
    %2639 = vmatpush1.msra.mxu0 0.0
    %2640 = vmatprep.subr.mxu0 0.0
    %2641 = vmatpush1.msra.mxu0 0.0
    %2642 = vmatprep.subr.mxu0 0.0
    %2643 = vmatpush1.msra.mxu0 0.0
    %2644 = vmatprep.subr.mxu0 0.0
    %2645 = vmatpush1.msra.mxu0 0.0
    %2646 = vmatprep.subr.mxu0 0.0
    %2647 = vmatpush1.msra.mxu0 0.0
    %2648 = vmatprep.subr.mxu0 0.0
    %2649 = vmatpush1.msra.mxu0 0.0
    %2650 = vmatprep.subr.mxu0 0.0
    %2651 = vmatpush1.msra.mxu0 0.0
    %2652 = vmatprep.subr.mxu0 0.0
    %2653 = vmatpush1.msra.mxu0 0.0
    %2654 = vmatprep.subr.mxu0 0.0
    %2655 = vmatpush1.msra.mxu0 0.0
    %2656 = vmatprep.subr.mxu0 0.0
    %2657 = vmatpush1.msra.mxu0 0.0
    %2658 = vmatprep.subr.mxu0 0.0
    %2659 = vmatpush1.msra.mxu0 0.0
    %2660 = vmatprep.subr.mxu0 0.0
    %2661 = vmatpush1.msra.mxu0 0.0
    %2662 = vmatprep.subr.mxu0 0.0
    %2663 = vmatpush1.msra.mxu0 0.0
    %2664 = vmatprep.subr.mxu0 0.0
    %2665 = vmatpush1.msra.mxu0 0.0
    %2666 = vmatprep.subr.mxu0 0.0
    %2667 = vmatpush1.msra.mxu0 0.0
    %2668 = vmatprep.subr.mxu0 0.0
    %2669 = vmatpush1.msra.mxu0 0.0
    %2670 = vmatprep.subr.mxu0 0.0
    %2671 = vmatpush1.msra.mxu0 0.0
    %2672 = vmatprep.subr.mxu0 0.0
    %2673 = vmatpush1.msra.mxu0 0.0
    %2674 = vmatprep.subr.mxu0 0.0
    %2675 = vmatpush1.msra.mxu0 0.0
    %2676 = vmatprep.subr.mxu0 0.0
    %2677 = vmatpush1.msra.mxu0 0.0
    %2678 = vmatprep.subr.mxu0 0.0
    %2679 = vmatpush1.msra.mxu0 0.0
    %2680 = vmatprep.subr.mxu0 0.0
    %2681 = vmatpush1.msra.mxu0 0.0
    %2682 = vmatprep.subr.mxu0 0.0
    %2683 = vmatpush1.msra.mxu0 0.0
    %2684 = vmatprep.subr.mxu0 0.0
    %2685 = vmatpush1.msra.mxu0 0.0
    %2686 = vmatprep.subr.mxu0 0.0
    %2687 = vmatpush1.msra.mxu0 0.0
    %2688 = vmatprep.subr.mxu0 0.0
    %2689 = vmatpush1.msra.mxu0 0.0
    %2690 = vmatprep.subr.mxu0 0.0
    %2691 = vmatpush1.msra.mxu0 0.0
    %2692 = vmatprep.mubr.f32.mxu0 0.0
    %2693 = vmatmul.mubr.f32.gmra.mrb[0].mxu0 %v2623
    %v2694 = vpop.f32.mrb[0].mxu0
    %v2695 = vadd.f32 0.0, %v2694
    %v2696 = vpop.f32.mrb[0].mxu0
    %2697 = vmatprep.mubr.f32.mxu0 0.0
    %2698 = vmatmul.mubr.f32.gmra.mrb[0].mxu0 %v2626
    %v2699 = vpop.f32.mrb[0].mxu0
    %v2700 = vadd.f32 0.0, %v2699
    %v2701 = vpop.f32.mrb[0].mxu0
    %2702 = vdwg.mxu0
    %v2703 = vadd.f32 %v2620, %v2695
    %v2704 = vadd.f32 %v2621, %v2700
    %v2706 = vsel %vm211, %v2440, 0
    %v2709 = vsel %vm211, %v2445, 0
    %2711 = vmatprep.subr.mxu0 0.0
    %2712 = vmatpush1.msra.mxu0 %v1620
    %2713 = vmatprep.subr.mxu0 0.0
    %2714 = vmatpush1.msra.mxu0 0.0
    %2715 = vmatprep.subr.mxu0 0.0
    %2716 = vmatpush1.msra.mxu0 0.0
    %2717 = vmatprep.subr.mxu0 0.0
    %2718 = vmatpush1.msra.mxu0 0.0
    %2719 = vmatprep.subr.mxu0 0.0
    %2720 = vmatpush1.msra.mxu0 0.0
    %2721 = vmatprep.subr.mxu0 0.0
    %2722 = vmatpush1.msra.mxu0 0.0
    %2723 = vmatprep.subr.mxu0 0.0
    %2724 = vmatpush1.msra.mxu0 0.0
    %2725 = vmatprep.subr.mxu0 0.0
    %2726 = vmatpush1.msra.mxu0 0.0
    %2727 = vmatprep.subr.mxu0 0.0
    %2728 = vmatpush1.msra.mxu0 0.0
    %2729 = vmatprep.subr.mxu0 0.0
    %2730 = vmatpush1.msra.mxu0 0.0
    %2731 = vmatprep.subr.mxu0 0.0
    %2732 = vmatpush1.msra.mxu0 0.0
    %2733 = vmatprep.subr.mxu0 0.0
    %2734 = vmatpush1.msra.mxu0 0.0
    %2735 = vmatprep.subr.mxu0 0.0
    %2736 = vmatpush1.msra.mxu0 0.0
    %2737 = vmatprep.subr.mxu0 0.0
    %2738 = vmatpush1.msra.mxu0 0.0
    %2739 = vmatprep.subr.mxu0 0.0
    %2740 = vmatpush1.msra.mxu0 0.0
    %2741 = vmatprep.subr.mxu0 0.0
    %2742 = vmatpush1.msra.mxu0 0.0
    %2743 = vmatprep.subr.mxu0 0.0
    %2744 = vmatpush1.msra.mxu0 0.0
    %2745 = vmatprep.subr.mxu0 0.0
    %2746 = vmatpush1.msra.mxu0 0.0
    %2747 = vmatprep.subr.mxu0 0.0
    %2748 = vmatpush1.msra.mxu0 0.0
    %2749 = vmatprep.subr.mxu0 0.0
    %2750 = vmatpush1.msra.mxu0 0.0
    %2751 = vmatprep.subr.mxu0 0.0
    %2752 = vmatpush1.msra.mxu0 0.0
    %2753 = vmatprep.subr.mxu0 0.0
    %2754 = vmatpush1.msra.mxu0 0.0
    %2755 = vmatprep.subr.mxu0 0.0
    %2756 = vmatpush1.msra.mxu0 0.0
    %2757 = vmatprep.subr.mxu0 0.0
    %2758 = vmatpush1.msra.mxu0 0.0
    %2759 = vmatprep.subr.mxu0 0.0
    %2760 = vmatpush1.msra.mxu0 0.0
    %2761 = vmatprep.subr.mxu0 0.0
    %2762 = vmatpush1.msra.mxu0 0.0
    %2763 = vmatprep.subr.mxu0 0.0
    %2764 = vmatpush1.msra.mxu0 0.0
    %2765 = vmatprep.subr.mxu0 0.0
    %2766 = vmatpush1.msra.mxu0 0.0
    %2767 = vmatprep.subr.mxu0 0.0
    %2768 = vmatpush1.msra.mxu0 0.0
    %2769 = vmatprep.subr.mxu0 0.0
    %2770 = vmatpush1.msra.mxu0 0.0
    %2771 = vmatprep.subr.mxu0 0.0
    %2772 = vmatpush1.msra.mxu0 0.0
    %2773 = vmatprep.subr.mxu0 0.0
    %2774 = vmatpush1.msra.mxu0 0.0
    %2775 = vmatprep.mubr.f32.mxu0 0.0
    %2776 = vmatmul.mubr.f32.gmra.mrb[0].mxu0 %v2706
    %v2777 = vpop.f32.mrb[0].mxu0
    %v2778 = vadd.f32 0.0, %v2777
    %v2779 = vpop.f32.mrb[0].mxu0
    %2780 = vmatprep.mubr.f32.mxu0 0.0
    %2781 = vmatmul.mubr.f32.gmra.mrb[0].mxu0 %v2709
    %v2782 = vpop.f32.mrb[0].mxu0
    %v2783 = vadd.f32 0.0, %v2782
    %v2784 = vpop.f32.mrb[0].mxu0
    %2785 = vdwg.mxu0
    %v2786 = vadd.f32 %v2703, %v2778
    %v2787 = vadd.f32 %v2704, %v2783
    %v2789 = vsel %vm211, %v2527, 0
    %v2792 = vsel %vm211, %v2532, 0
    %2794 = vmatprep.subr.mxu0 0.0
    %2795 = vmatpush1.msra.mxu0 %v1621
    %2796 = vmatprep.subr.mxu0 0.0
    %2797 = vmatpush1.msra.mxu0 0.0
    %2798 = vmatprep.subr.mxu0 0.0
    %2799 = vmatpush1.msra.mxu0 0.0
    %2800 = vmatprep.subr.mxu0 0.0
    %2801 = vmatpush1.msra.mxu0 0.0
    %2802 = vmatprep.subr.mxu0 0.0
    %2803 = vmatpush1.msra.mxu0 0.0
    %2804 = vmatprep.subr.mxu0 0.0
    %2805 = vmatpush1.msra.mxu0 0.0
    %2806 = vmatprep.subr.mxu0 0.0
    %2807 = vmatpush1.msra.mxu0 0.0
    %2808 = vmatprep.subr.mxu0 0.0
    %2809 = vmatpush1.msra.mxu0 0.0
    %2810 = vmatprep.subr.mxu0 0.0
    %2811 = vmatpush1.msra.mxu0 0.0
    %2812 = vmatprep.subr.mxu0 0.0
    %2813 = vmatpush1.msra.mxu0 0.0
    %2814 = vmatprep.subr.mxu0 0.0
    %2815 = vmatpush1.msra.mxu0 0.0
    %2816 = vmatprep.subr.mxu0 0.0
    %2817 = vmatpush1.msra.mxu0 0.0
    %2818 = vmatprep.subr.mxu0 0.0
    %2819 = vmatpush1.msra.mxu0 0.0
    %2820 = vmatprep.subr.mxu0 0.0
    %2821 = vmatpush1.msra.mxu0 0.0
    %2822 = vmatprep.subr.mxu0 0.0
    %2823 = vmatpush1.msra.mxu0 0.0
    %2824 = vmatprep.subr.mxu0 0.0
    %2825 = vmatpush1.msra.mxu0 0.0
    %2826 = vmatprep.subr.mxu0 0.0
    %2827 = vmatpush1.msra.mxu0 0.0
    %2828 = vmatprep.subr.mxu0 0.0
    %2829 = vmatpush1.msra.mxu0 0.0
    %2830 = vmatprep.subr.mxu0 0.0
    %2831 = vmatpush1.msra.mxu0 0.0
    %2832 = vmatprep.subr.mxu0 0.0
    %2833 = vmatpush1.msra.mxu0 0.0
    %2834 = vmatprep.subr.mxu0 0.0
    %2835 = vmatpush1.msra.mxu0 0.0
    %2836 = vmatprep.subr.mxu0 0.0
    %2837 = vmatpush1.msra.mxu0 0.0
    %2838 = vmatprep.subr.mxu0 0.0
    %2839 = vmatpush1.msra.mxu0 0.0
    %2840 = vmatprep.subr.mxu0 0.0
    %2841 = vmatpush1.msra.mxu0 0.0
    %2842 = vmatprep.subr.mxu0 0.0
    %2843 = vmatpush1.msra.mxu0 0.0
    %2844 = vmatprep.subr.mxu0 0.0
    %2845 = vmatpush1.msra.mxu0 0.0
    %2846 = vmatprep.subr.mxu0 0.0
    %2847 = vmatpush1.msra.mxu0 0.0
    %2848 = vmatprep.subr.mxu0 0.0
    %2849 = vmatpush1.msra.mxu0 0.0
    %2850 = vmatprep.subr.mxu0 0.0
    %2851 = vmatpush1.msra.mxu0 0.0
    %2852 = vmatprep.subr.mxu0 0.0
    %2853 = vmatpush1.msra.mxu0 0.0
    %2854 = vmatprep.subr.mxu0 0.0
    %2855 = vmatpush1.msra.mxu0 0.0
    %2856 = vmatprep.subr.mxu0 0.0
    %2857 = vmatpush1.msra.mxu0 0.0
    %2858 = vmatprep.mubr.f32.mxu0 0.0
    %2859 = vmatmul.mubr.f32.gmra.mrb[0].mxu0 %v2789
    %v2860 = vpop.f32.mrb[0].mxu0
    %v2861 = vadd.f32 0.0, %v2860
    %v2862 = vpop.f32.mrb[0].mxu0
    %2863 = vmatprep.mubr.f32.mxu0 0.0
    %2864 = vmatmul.mubr.f32.gmra.mrb[0].mxu0 %v2792
    %v2865 = vpop.f32.mrb[0].mxu0
    %v2866 = vadd.f32 0.0, %v2865
    %v2867 = vpop.f32.mrb[0].mxu0
    %2868 = vdwg.mxu0
    %v2869 = vadd.f32 %v2786, %v2861
    %v2870 = vadd.f32 %v2787, %v2866
    %v2871 = vadd.f32 %v1611, %v2869
    %v2872 = vadd.f32 %v1612, %v2870
    %v2873 = vsel %vm111, %v2871, 0.0
    %2874 = vadd.xlane.f32.xlu0 %v2873
    %v2875 = vpop.xlane.xlu0 %2874
    %v2876 = vsel %vm111, %v2872, 0.0
    %2877 = vadd.xlane.f32.xlu0 %v2876
    %v2878 = vpop.xlane.xlu0 %2877
    %v2879 = vmul.f32 %v2875, %v1353
    %v2880 = vmul.f32 %v2878, %v1353
    %v2881 = vsub.f32 %v2871, %v2879
    %v2882 = vsub.f32 %v2872, %v2880
    %v2883 = vmul.f32 %v2881, %v2881
    %v2884 = vmul.f32 %v2882, %v2882
    %v2885 = vsel %vm111, %v2883, 0.0
    %2886 = vadd.xlane.f32.xlu0 %v2885
    %v2887 = vpop.xlane.xlu0 %2886
    %v2888 = vsel %vm111, %v2884, 0.0
    %2889 = vadd.xlane.f32.xlu0 %v2888
    %v2890 = vpop.xlane.xlu0 %2889
    %v2891 = vmul.f32 %v2887, %v1353
    %v2892 = vmul.f32 %v2890, %v1353
    %v2893 = vadd.f32 %v2891, 1e-12
    %v2894 = vadd.f32 %v2892, 1e-12
    %v2895 = vrsqrt.pop %v2893
    %v2896 = vrsqrt.pop %v2894
    %v2897 = vmul.f32 %v2881, %v2895
    %v2898 = vmul.f32 %v2882, %v2896
    %2900 = vrot.lane.b32.xlu0 %v2619, 96
    %v2901 = vpop.permute.xlu0 %2900
    %v2903 = vmul.f32 %v2897, %v2901
    %v2904 = vmul.f32 %v2898, %v2901
    %2905 = vrot.lane.b32.xlu0 %v2619, 64
    %v2906 = vpop.permute.xlu0 %2905
    %v2908 = vadd.f32 %v2903, %v2906
    %v2909 = vadd.f32 %v2904, %v2906
    %v2910 = vlaneseq
    %v2911 = vshrl.u32 %v2910, 7
    %v2912 = vsub.s32 2, %v2911
    %v2913 = vrot.slane %v1635, %v2912
    %v2915 = vsel %vm111, %v2908, 0
    %v2918 = vsel %vm111, %v2909, 0
    %2920 = vmatprep.subr.mxu0 0.0
    %2921 = vmatpush1.msra.mxu0 %v1622
    %2922 = vmatprep.subr.mxu0 0.0
    %2923 = vmatpush1.msra.mxu0 %v1623
    %2924 = vmatprep.subr.mxu0 0.0
    %2925 = vmatpush1.msra.mxu0 %v1624
    %2926 = vmatprep.subr.mxu0 0.0
    %2927 = vmatpush1.msra.mxu0 %v1625
    %2928 = vmatprep.subr.mxu0 0.0
    %2929 = vmatpush1.msra.mxu0 0.0
    %2930 = vmatprep.subr.mxu0 0.0
    %2931 = vmatpush1.msra.mxu0 0.0
    %2932 = vmatprep.subr.mxu0 0.0
    %2933 = vmatpush1.msra.mxu0 0.0
    %2934 = vmatprep.subr.mxu0 0.0
    %2935 = vmatpush1.msra.mxu0 0.0
    %2936 = vmatprep.subr.mxu0 0.0
    %2937 = vmatpush1.msra.mxu0 0.0
    %2938 = vmatprep.subr.mxu0 0.0
    %2939 = vmatpush1.msra.mxu0 0.0
    %2940 = vmatprep.subr.mxu0 0.0
    %2941 = vmatpush1.msra.mxu0 0.0
    %2942 = vmatprep.subr.mxu0 0.0
    %2943 = vmatpush1.msra.mxu0 0.0
    %2944 = vmatprep.subr.mxu0 0.0
    %2945 = vmatpush1.msra.mxu0 0.0
    %2946 = vmatprep.subr.mxu0 0.0
    %2947 = vmatpush1.msra.mxu0 0.0
    %2948 = vmatprep.subr.mxu0 0.0
    %2949 = vmatpush1.msra.mxu0 0.0
    %2950 = vmatprep.subr.mxu0 0.0
    %2951 = vmatpush1.msra.mxu0 0.0
    %2952 = vmatprep.subr.mxu0 0.0
    %2953 = vmatpush1.msra.mxu0 0.0
    %2954 = vmatprep.subr.mxu0 0.0
    %2955 = vmatpush1.msra.mxu0 0.0
    %2956 = vmatprep.subr.mxu0 0.0
    %2957 = vmatpush1.msra.mxu0 0.0
    %2958 = vmatprep.subr.mxu0 0.0
    %2959 = vmatpush1.msra.mxu0 0.0
    %2960 = vmatprep.subr.mxu0 0.0
    %2961 = vmatpush1.msra.mxu0 0.0
    %2962 = vmatprep.subr.mxu0 0.0
    %2963 = vmatpush1.msra.mxu0 0.0
    %2964 = vmatprep.subr.mxu0 0.0
    %2965 = vmatpush1.msra.mxu0 0.0
    %2966 = vmatprep.subr.mxu0 0.0
    %2967 = vmatpush1.msra.mxu0 0.0
    %2968 = vmatprep.subr.mxu0 0.0
    %2969 = vmatpush1.msra.mxu0 0.0
    %2970 = vmatprep.subr.mxu0 0.0
    %2971 = vmatpush1.msra.mxu0 0.0
    %2972 = vmatprep.subr.mxu0 0.0
    %2973 = vmatpush1.msra.mxu0 0.0
    %2974 = vmatprep.subr.mxu0 0.0
    %2975 = vmatpush1.msra.mxu0 0.0
    %2976 = vmatprep.subr.mxu0 0.0
    %2977 = vmatpush1.msra.mxu0 0.0
    %2978 = vmatprep.subr.mxu0 0.0
    %2979 = vmatpush1.msra.mxu0 0.0
    %2980 = vmatprep.subr.mxu0 0.0
    %2981 = vmatpush1.msra.mxu0 0.0
    %2982 = vmatprep.subr.mxu0 0.0
    %2983 = vmatpush1.msra.mxu0 0.0
    %2984 = vmatprep.mubr.f32.mxu0 0.0
    %2985 = vmatmul.mubr.f32.gmra.mrb[0].mxu0 %v2915
    %v2986 = vpop.f32.mrb[0].mxu0
    %v2987 = vadd.f32 %v2913, %v2986
    %v2988 = vpop.f32.mrb[0].mxu0
    %2989 = vmatprep.mubr.f32.mxu0 0.0
    %2990 = vmatmul.mubr.f32.gmra.mrb[0].mxu0 %v2918
    %v2991 = vpop.f32.mrb[0].mxu0
    %v2992 = vadd.f32 %v2913, %v2991
    %v2993 = vpop.f32.mrb[0].mxu0
    %2994 = vdwg.mxu0
    %v2995 = vmul.f32 %v2987, %v2987
    %v2996 = vmul.f32 %v2992, %v2992
    %v2997 = vmul.f32 %v2987, %v2995
    %v2998 = vmul.f32 %v2992, %v2996
    %v2999 = vmul.f32 %v2997, 0.044715
    %v3000 = vmul.f32 %v2998, 0.044715
    %v3001 = vadd.f32 %v2987, %v2999
    %v3002 = vadd.f32 %v2992, %v3000
    %v3003 = vmul.f32 %v3001, 0.7978846
    %v3004 = vmul.f32 %v3002, 0.7978846
    %v3005 = vtanh.pop %v3003
    %v3006 = vtanh.pop %v3004
    %v3007 = vadd.f32 %v3005, 1.0
    %v3008 = vadd.f32 %v3006, 1.0
    %v3009 = vmul.f32 %v3007, 0.5
    %v3010 = vmul.f32 %v3008, 0.5
    %v3011 = vmul.f32 %v2987, %v3009
    %v3012 = vmul.f32 %v2992, %v3010
    %v3013 = vlaneseq
    %v3014 = vshrl.u32 %v3013, 7
    %v3015 = vsub.s32 3, %v3014
    %v3016 = vrot.slane %v1635, %v3015
    %v3018 = vsel %vm1492, %v3011, 0
    %v3021 = vsel %vm1492, %v3012, 0
    %3023 = vmatprep.subr.mxu0 0.0
    %3024 = vmatpush1.msra.mxu0 %v1626
    %3025 = vmatprep.subr.mxu0 0.0
    %3026 = vmatpush1.msra.mxu0 %v1627
    %3027 = vmatprep.subr.mxu0 0.0
    %3028 = vmatpush1.msra.mxu0 %v1628
    %3029 = vmatprep.subr.mxu0 0.0
    %3030 = vmatpush1.msra.mxu0 %v1629
    %3031 = vmatprep.subr.mxu0 0.0
    %3032 = vmatpush1.msra.mxu0 %v1630
    %3033 = vmatprep.subr.mxu0 0.0
    %3034 = vmatpush1.msra.mxu0 %v1631
    %3035 = vmatprep.subr.mxu0 0.0
    %3036 = vmatpush1.msra.mxu0 %v1632
    %3037 = vmatprep.subr.mxu0 0.0
    %3038 = vmatpush1.msra.mxu0 %v1633
    %3039 = vmatprep.subr.mxu0 0.0
    %3040 = vmatpush1.msra.mxu0 0.0
    %3041 = vmatprep.subr.mxu0 0.0
    %3042 = vmatpush1.msra.mxu0 0.0
    %3043 = vmatprep.subr.mxu0 0.0
    %3044 = vmatpush1.msra.mxu0 0.0
    %3045 = vmatprep.subr.mxu0 0.0
    %3046 = vmatpush1.msra.mxu0 0.0
    %3047 = vmatprep.subr.mxu0 0.0
    %3048 = vmatpush1.msra.mxu0 0.0
    %3049 = vmatprep.subr.mxu0 0.0
    %3050 = vmatpush1.msra.mxu0 0.0
    %3051 = vmatprep.subr.mxu0 0.0
    %3052 = vmatpush1.msra.mxu0 0.0
    %3053 = vmatprep.subr.mxu0 0.0
    %3054 = vmatpush1.msra.mxu0 0.0
    %3055 = vmatprep.subr.mxu0 0.0
    %3056 = vmatpush1.msra.mxu0 0.0
    %3057 = vmatprep.subr.mxu0 0.0
    %3058 = vmatpush1.msra.mxu0 0.0
    %3059 = vmatprep.subr.mxu0 0.0
    %3060 = vmatpush1.msra.mxu0 0.0
    %3061 = vmatprep.subr.mxu0 0.0
    %3062 = vmatpush1.msra.mxu0 0.0
    %3063 = vmatprep.subr.mxu0 0.0
    %3064 = vmatpush1.msra.mxu0 0.0
    %3065 = vmatprep.subr.mxu0 0.0
    %3066 = vmatpush1.msra.mxu0 0.0
    %3067 = vmatprep.subr.mxu0 0.0
    %3068 = vmatpush1.msra.mxu0 0.0
    %3069 = vmatprep.subr.mxu0 0.0
    %3070 = vmatpush1.msra.mxu0 0.0
    %3071 = vmatprep.subr.mxu0 0.0
    %3072 = vmatpush1.msra.mxu0 0.0
    %3073 = vmatprep.subr.mxu0 0.0
    %3074 = vmatpush1.msra.mxu0 0.0
    %3075 = vmatprep.subr.mxu0 0.0
    %3076 = vmatpush1.msra.mxu0 0.0
    %3077 = vmatprep.subr.mxu0 0.0
    %3078 = vmatpush1.msra.mxu0 0.0
    %3079 = vmatprep.subr.mxu0 0.0
    %3080 = vmatpush1.msra.mxu0 0.0
    %3081 = vmatprep.subr.mxu0 0.0
    %3082 = vmatpush1.msra.mxu0 0.0
    %3083 = vmatprep.subr.mxu0 0.0
    %3084 = vmatpush1.msra.mxu0 0.0
    %3085 = vmatprep.subr.mxu0 0.0
    %3086 = vmatpush1.msra.mxu0 0.0
    %3087 = vmatprep.mubr.f32.mxu0 0.0
    %3088 = vmatmul.mubr.f32.gmra.mrb[0].mxu0 %v3018
    %v3089 = vpop.f32.mrb[0].mxu0
    %v3090 = vadd.f32 %v3016, %v3089
    %v3091 = vpop.f32.mrb[0].mxu0
    %3092 = vmatprep.mubr.f32.mxu0 0.0
    %3093 = vmatmul.mubr.f32.gmra.mrb[0].mxu0 %v3021
    %v3094 = vpop.f32.mrb[0].mxu0
    %v3095 = vadd.f32 %v3016, %v3094
    %v3096 = vpop.f32.mrb[0].mxu0
    %3097 = vdwg.mxu0
    %v3098 = vadd.f32 %v2908, %v3090
    %v3099 = vadd.f32 %v2909, %v3095
    %v3100 = vsel %vm111, %v3098, 0.0
    %3101 = vadd.xlane.f32.xlu0 %v3100
    %v3102 = vpop.xlane.xlu0 %3101
    %v3103 = vsel %vm111, %v3099, 0.0
    %3104 = vadd.xlane.f32.xlu0 %v3103
    %v3105 = vpop.xlane.xlu0 %3104
    %v3106 = vmul.f32 %v3102, %v1353
    %v3107 = vmul.f32 %v3105, %v1353
    %v3108 = vsub.f32 %v3098, %v3106
    %v3109 = vsub.f32 %v3099, %v3107
    %v3110 = vmul.f32 %v3108, %v3108
    %v3111 = vmul.f32 %v3109, %v3109
    %v3112 = vsel %vm111, %v3110, 0.0
    %3113 = vadd.xlane.f32.xlu0 %v3112
    %v3114 = vpop.xlane.xlu0 %3113
    %v3115 = vsel %vm111, %v3111, 0.0
    %3116 = vadd.xlane.f32.xlu0 %v3115
    %v3117 = vpop.xlane.xlu0 %3116
    %v3118 = vmul.f32 %v3114, %v1353
    %v3119 = vmul.f32 %v3117, %v1353
    %v3120 = vadd.f32 %v3118, 1e-12
    %v3121 = vadd.f32 %v3119, 1e-12
    %v3122 = vrsqrt.pop %v3120
    %v3123 = vrsqrt.pop %v3121
    %v3124 = vmul.f32 %v3108, %v3122
    %v3125 = vmul.f32 %v3109, %v3123
    %3127 = vrot.lane.b32.xlu0 %v3016, 96
    %v3128 = vpop.permute.xlu0 %3127
    %v3130 = vmul.f32 %v3124, %v3128
    %v3131 = vmul.f32 %v3125, %v3128
    %3132 = vrot.lane.b32.xlu0 %v3016, 64
    %v3133 = vpop.permute.xlu0 %3132
    %v3135 = vadd.f32 %v3130, %v3133
    %v3136 = vadd.f32 %v3131, %v3133
    %v3137 = vld [vmem:[%s2] sm:$0xff]
    %v3138 = vld [vmem:[%s2 + $0x8] sm:$0xff]
    %3140 = vset.pattern.permute.xlu0 0
    %3141 = vperm.xlu0 %3140, %v3137
    %v3142 = vpop.permute.xlu0 %3141
    %3145 = vset.pattern.permute.xlu0 0
    %3146 = vperm.xlu0 %3145, %v3138
    %v3147 = vpop.permute.xlu0 %3146
    %v3149 = vmul.f32 %v3135, %v3142
    %v3150 = vmul.f32 %v3136, %v3147
    %v3151 = vsel %vm111, %v3149, 0.0
    %v3152 = vrot.slane %v3151, 4
    %v3153 = vadd.f32 %v3151, %v3152
    %v3154 = vrot.slane %v3153, 2
    %v3155 = vadd.f32 %v3153, %v3154
    %v3156 = vrot.slane %v3155, 1
    %v3157 = vadd.f32 %v3155, %v3156
    %v3158 = vsel %vm111, %v3150, 0.0
    %v3159 = vrot.slane %v3158, 4
    %v3160 = vadd.f32 %v3158, %v3159
    %v3161 = vrot.slane %v3160, 2
    %v3162 = vadd.f32 %v3160, %v3161
    %v3163 = vrot.slane %v3162, 1
    %v3164 = vadd.f32 %v3162, %v3163
    %vm3165 = vcmask 7168
    %v3166 = vsel %vm3165, %v3137, 0.0
    %v3167 = vrot.slane %v3166, 4
    %v3168 = vadd.f32 %v3166, %v3167
    %v3169 = vrot.slane %v3168, 2
    %v3170 = vadd.f32 %v3168, %v3169
    %v3171 = vrot.slane %v3170, 1
    %v3172 = vadd.f32 %v3170, %v3171
    %v3173 = vsel %vm3165, %v3138, 0.0
    %v3174 = vrot.slane %v3173, 4
    %v3175 = vadd.f32 %v3173, %v3174
    %v3176 = vrot.slane %v3175, 2
    %v3177 = vadd.f32 %v3175, %v3176
    %v3178 = vrot.slane %v3177, 1
    %v3179 = vadd.f32 %v3177, %v3178
    %v3180 = vmax.f32 %v3172, 1e-09
    %v3181 = vmax.f32 %v3179, 1e-09
    %3183 = vset.pattern.permute.xlu0 0
    %3184 = vperm.xlu0 %3183, %v3180
    %v3185 = vpop.permute.xlu0 %3184
    %3188 = vset.pattern.permute.xlu0 0
    %3189 = vperm.xlu0 %3188, %v3181
    %v3190 = vpop.permute.xlu0 %3189
    %v3192 = vrcp.pop %v3185
    %v3193 = vmul.f32 %v3157, %v3192
    %v3194 = vrcp.pop %v3190
    %v3195 = vmul.f32 %v3164, %v3194
    %v3196 = vld [vmem:[%s5] sm:$0xff]
    %v3197 = vld [vmem:[%s5 + $0x8] sm:$0xff]
    %v3198 = vld [vmem:[%s5 + $0x10] sm:$0xff]
    %v3199 = vld [vmem:[%s5 + $0x18] sm:$0xff]
    %v3200 = vld [vmem:[%s6] sm:$0x1]
    %v3202 = vlaneseq
    %v3203 = vshrl.u32 %v3202, 7
    %v3204 = vsub.s32 0, %v3203
    %v3205 = vrot.slane %v3200, %v3204
    %vm3209 = vcmask 1041409
    %v3210 = vsel %vm3209, %v3195, %v3193
    %v3211 = vsel %vm111, %v3210, 0
    %3213 = vmatprep.subr.mxu0 0.0
    %3214 = vmatpush1.msra.mxu0 %v3196
    %3215 = vmatprep.subr.mxu0 0.0
    %3216 = vmatpush1.msra.mxu0 %v3197
    %3217 = vmatprep.subr.mxu0 0.0
    %3218 = vmatpush1.msra.mxu0 %v3198
    %3219 = vmatprep.subr.mxu0 0.0
    %3220 = vmatpush1.msra.mxu0 %v3199
    %3221 = vmatprep.subr.mxu0 0.0
    %3222 = vmatpush1.msra.mxu0 0.0
    %3223 = vmatprep.subr.mxu0 0.0
    %3224 = vmatpush1.msra.mxu0 0.0
    %3225 = vmatprep.subr.mxu0 0.0
    %3226 = vmatpush1.msra.mxu0 0.0
    %3227 = vmatprep.subr.mxu0 0.0
    %3228 = vmatpush1.msra.mxu0 0.0
    %3229 = vmatprep.subr.mxu0 0.0
    %3230 = vmatpush1.msra.mxu0 0.0
    %3231 = vmatprep.subr.mxu0 0.0
    %3232 = vmatpush1.msra.mxu0 0.0
    %3233 = vmatprep.subr.mxu0 0.0
    %3234 = vmatpush1.msra.mxu0 0.0
    %3235 = vmatprep.subr.mxu0 0.0
    %3236 = vmatpush1.msra.mxu0 0.0
    %3237 = vmatprep.subr.mxu0 0.0
    %3238 = vmatpush1.msra.mxu0 0.0
    %3239 = vmatprep.subr.mxu0 0.0
    %3240 = vmatpush1.msra.mxu0 0.0
    %3241 = vmatprep.subr.mxu0 0.0
    %3242 = vmatpush1.msra.mxu0 0.0
    %3243 = vmatprep.subr.mxu0 0.0
    %3244 = vmatpush1.msra.mxu0 0.0
    %3245 = vmatprep.subr.mxu0 0.0
    %3246 = vmatpush1.msra.mxu0 0.0
    %3247 = vmatprep.subr.mxu0 0.0
    %3248 = vmatpush1.msra.mxu0 0.0
    %3249 = vmatprep.subr.mxu0 0.0
    %3250 = vmatpush1.msra.mxu0 0.0
    %3251 = vmatprep.subr.mxu0 0.0
    %3252 = vmatpush1.msra.mxu0 0.0
    %3253 = vmatprep.subr.mxu0 0.0
    %3254 = vmatpush1.msra.mxu0 0.0
    %3255 = vmatprep.subr.mxu0 0.0
    %3256 = vmatpush1.msra.mxu0 0.0
    %3257 = vmatprep.subr.mxu0 0.0
    %3258 = vmatpush1.msra.mxu0 0.0
    %3259 = vmatprep.subr.mxu0 0.0
    %3260 = vmatpush1.msra.mxu0 0.0
    %3261 = vmatprep.subr.mxu0 0.0
    %3262 = vmatpush1.msra.mxu0 0.0
    %3263 = vmatprep.subr.mxu0 0.0
    %3264 = vmatpush1.msra.mxu0 0.0
    %3265 = vmatprep.subr.mxu0 0.0
    %3266 = vmatpush1.msra.mxu0 0.0
    %3267 = vmatprep.subr.mxu0 0.0
    %3268 = vmatpush1.msra.mxu0 0.0
    %3269 = vmatprep.subr.mxu0 0.0
    %3270 = vmatpush1.msra.mxu0 0.0
    %3271 = vmatprep.subr.mxu0 0.0
    %3272 = vmatpush1.msra.mxu0 0.0
    %3273 = vmatprep.subr.mxu0 0.0
    %3274 = vmatpush1.msra.mxu0 0.0
    %3275 = vmatprep.subr.mxu0 0.0
    %3276 = vmatpush1.msra.mxu0 0.0
    %3277 = vmatprep.mubr.f32.mxu0 0.0
    %3278 = vmatmul.mubr.f32.gmra.mrb[0].mxu0 %v3211
    %v3279 = vpop.f32.mrb[0].mxu0
    %v3280 = vadd.f32 %v3205, %v3279
    %v3281 = vpop.f32.mrb[0].mxu0
    %3282 = vdwg.mxu0
    %3283 = vst [vmem:[#allocation10] sm:$0x3] %v3280
    // Predicated region
    $region46: #{tpu_custom_call.1} parent=1 // pred_check
      _
    $region47: #{tpu_custom_call.1} parent=1 // pred_check_branch
      %3285 = sbr.rel (0) target = $region49
    $region48: #{tpu_custom_call.1} parent=1 // pred_region
      %s3287 = ssub.s32 32, 32
      %3288 = vsyncadd [#allocation4], %s3287
      %s3290 = sshll.u32 [#allocation10], 4
      %s3291 = int_to_ptr.vmem [resolvable:$true] %s3290
      %3293 = dma.vmem_to_hbm [thread:$0]  %s3291, 32, %s7, [#allocation4]
    $region49: #{tpu_custom_call.1} parent=1 // pred_fallthru
      _
    // Predicated region
    $region50: #{tpu_custom_call.1} parent=1 // pred_check
      _
    $region51: #{tpu_custom_call.1} parent=1 // pred_check_branch
      %3295 = sbr.rel (0) target = $region53
    $region52: #{tpu_custom_call.1} parent=1 // pred_region
      %3296 = dma.done [#allocation4], 32
    $region53: #{tpu_custom_call.1} parent=1 // pred_fallthru
      _
    %3297 = vsyncpa [#allocation3], 1
    %3298 = vsyncpa [#allocation6], 1
    %3299 = vsyncpa [#allocation9], 1
    %3300 = vsyncpa [#allocation4], 1

</llo_original>
